<compile_context>
chip_gen: v5e
topology: v5e:2x2
jax: 0.10.0
libtpu: 0.0.40
codegen_flags: <defaults>
</compile_context>

<pallas_src>
import functools
import numpy as np
import jax
import jax.numpy as jnp
from jax import lax
from jax.experimental import pallas as pl
from jax.experimental.pallas import tpu as pltpu

LEAKY_ALPHA = 0.1
BN_EPS = 1e-5


def _leaky(h):
    return jnp.where(h >= 0, h, LEAKY_ALPHA * h)


def _basic_block_kernel(stride,
                        x_ref,                       # (nb, T, P)        bf16 original input
                        wpre_ref, bpre_ref,          # (P, V*C) bf16 / (1, V*C) f32 : gcn+res1 fused
                        wbig_ref, bbig_ref,          # (V*C, 4*VS) bf16 / (1, 4*VS) f32 : tcn pointwise
                        ga_ref, w3a_ref, b3a_ref,    # DeTGC branch a (dil=1)
                        gb_ref, w3b_ref, b3b_ref,    # DeTGC branch b (dil=2)
                        ms_ref, mb_ref,              # maxpool-branch folded BN
                        wr2_ref, br2_ref,            # (P, 4*VS) bf16 / (1, 4*VS) f32 : residual2 fused
                        o_ref):                      # (nb, Tout, 4*VS) f32
    nb, T, P = x_ref.shape
    Tout = o_ref.shape[1]
    VS = w3a_ref.shape[1]
    eta = ga_ref.shape[0]
    lim = (Tout - 1) * stride + 1

    xall = x_ref[...]                                              # (nb, T, P) bf16
    xf = xall.reshape(nb * T, P)

    # --- gcn(ST_GC+BN) + residual1(1x1 conv+BN) + add + LeakyReLU : ONE fused matmul ---
    Hmid = _leaky(jnp.dot(xf, wpre_ref[...], preferred_element_type=jnp.float32)
                  + bpre_ref[...])                                 # (nb*T, V*C) f32

    # --- tcn fused pointwise conv (+folded BN) for all 4 branches: one lane-dense matmul ---
    H = jnp.dot(Hmid.astype(jnp.bfloat16), wbig_ref[...],
                preferred_element_type=jnp.float32) + bbig_ref[...]
    Habc = _leaky(H[:, :3 * VS])       # branches a, b, m take LeakyReLU
    Hc = H[:, 3 * VS:]                 # branch c (PointWiseTCN only): no activation

    # --- residual2 (strided 1x1 conv + BN on the ORIGINAL input), one batched matmul ---
    if stride == 1:
        xr = xall
    else:
        xr = lax.slice_in_dim(xall, 0, lim, stride, axis=1)
    R2 = jnp.dot(xr.reshape(nb * Tout, P), wr2_ref[...],
                 preferred_element_type=jnp.float32) + br2_ref[...]

    def detgc(h, g_ref, w3_ref, b3_ref):
        # h: (T, VS) f32.  eta is small & static -> fully unrolled, all ops lane-dense.
        hb = h.astype(jnp.bfloat16)
        acc = None
        for e in range(eta):
            # temporal interpolation gather expressed as (Tout, T) @ (T, VS)
            xe = jnp.dot(g_ref[e], hb, preferred_element_type=jnp.float32)
            # Conv3d((eta,1,1)) + BN3d folded into a per-joint block-diagonal (VS, VS)
            term = jnp.dot(xe.astype(jnp.bfloat16), w3_ref[e],
                           preferred_element_type=jnp.float32)
            acc = term if acc is None else acc + term
        return acc + b3_ref[...]

    def maxpool(h):
        # 3-tap temporal max, pad=1, via edge-clamped shifted slices (no -inf pad buffer)
        prev = jnp.concatenate([h[:1], h[:T - 1]], axis=0)     # h[max(t-1, 0)]
        nxt = jnp.concatenate([h[1:], h[T - 1:]], axis=0)      # h[min(t+1, T-1)]
        m = jnp.maximum(h, jnp.maximum(prev, nxt))
        if stride > 1:
            m = lax.slice_in_dim(m, 0, lim, stride, axis=0)
        return m * ms_ref[...] + mb_ref[...]                   # folded post-pool BN

    for n in range(nb):                # static, small
        r0 = n * T
        ha = Habc[r0:r0 + T, 0:VS]
        hb_ = Habc[r0:r0 + T, VS:2 * VS]
        hm = Habc[r0:r0 + T, 2 * VS:3 * VS]
        hc = Hc[r0:r0 + T]

        ya = detgc(ha, ga_ref, w3a_ref, b3a_ref)               # (Tout, VS)
        yb = detgc(hb_, gb_ref, w3b_ref, b3b_ref)              # (Tout, VS)
        ym = maxpool(hm)                                       # (Tout, VS)
        yc = hc if stride == 1 else lax.slice_in_dim(hc, 0, lim, stride, axis=0)

        ytcn = jnp.concatenate([ya, yb, ym, yc], axis=-1)      # (Tout, 4*VS)
        r2 = R2[n * Tout:(n + 1) * Tout]                       # residual2 slab
        # single lane-dense (Tout, 4*VS = 512) store per batch element
        o_ref[n] = _leaky(ytcn + r2).astype(o_ref.dtype)


def basic_block_forward(x_ncthw, params, *, stride, batch_block=None):
    """Full Basic_Block forward (ST_GC gcn path, eval-mode BN folded).

    x_ncthw: (N, Cin, T, V) float32 (PyTorch layout). Returns (N, out_channels, Tout, V).
    """
    N, Cin, T, V = x_ncthw.shape
    Tout = T // stride
    S = params['wa'].shape[1]          # scale_channels
    C = 4 * S                          # out_channels
    VS = V * S
    VC = V * C
    VCin = V * Cin
    P = ((VCin + 127) // 128) * 128    # pad contraction lanes to a 128 multiple

    eyeV = jnp.eye(V, dtype=jnp.float32)

    # channels-last + joints*channels fused into a lane-dense minor dim, padded, bf16
    x2 = jnp.transpose(x_ncthw, (0, 2, 3, 1)).reshape(N, T, VCin)
    if P != VCin:
        x2 = jnp.pad(x2, ((0, 0), (0, 0), (0, P - VCin)))
    x2 = x2.astype(jnp.bfloat16)

    # ---- ST_GC(+BN) and residual1(1x1 conv+BN) fused into ONE (V*Cin, V*C) affine map ----
    A = params['A']                                            # (Nh, V, V)
    Wg = jnp.einsum('hvu,hcj->ujvc', A, params['w_gcn']) * params['gcn_sc'][None, None, None, :]
    bgv = (jnp.einsum('hvu,hc->vc', A, params['b_gcn']) * params['gcn_sc'][None, :]
           + params['gcn_sh'][None, :])
    Wr1 = jnp.einsum('uv,jc->ujvc', eyeV, params['wr1'])       # block-diag per joint
    br1 = jnp.broadcast_to(params['br1'], (V, C))
    wpre = (Wg + Wr1).reshape(VCin, VC)
    bpre = (bgv + br1).reshape(1, VC)

    # ---- tcn fused pointwise conv weight, block-structured per joint, 4 branches ----
    wstk = jnp.stack([params['wa'], params['wb'], params['wm'], params['wc']], 0)  # (4, C, S)
    bstk = jnp.stack([params['ba'][0], params['bb'][0], params['bm'][0], params['bc'][0]], 0)
    wbig = jnp.einsum('vw,bcs->vcbws', eyeV, wstk).reshape(VC, 4 * VS)
    bbig = jnp.broadcast_to(bstk[:, None, :], (4, V, S)).reshape(1, 4 * VS)

    def blockdiag(w3):    # (eta, S, S) -> per-joint block diagonal (eta, VS, VS)
        return jnp.einsum('vw,eio->eviwo', eyeV, w3).reshape(w3.shape[0], VS, VS)

    def tile_v(v1s):      # (1, S) -> (1, VS), layout [joint][channel]
        return jnp.broadcast_to(v1s.reshape(1, 1, S), (1, V, S)).reshape(1, VS)

    w3a = blockdiag(params['w3a']).astype(jnp.bfloat16)
    w3b = blockdiag(params['w3b']).astype(jnp.bfloat16)
    ga = params['ga'].astype(jnp.bfloat16)
    gb = params['gb'].astype(jnp.bfloat16)
    b3a = tile_v(params['b3a'])
    b3b = tile_v(params['b3b'])
    ms = tile_v(params['ms'])
    mb = tile_v(params['mb'])

    # ---- residual2 (strided 1x1 conv + BN), columns permuted to [branch][joint][channel] ----
    wr2f = params['wr2'].reshape(Cin, 4, S)
    wr2 = jnp.einsum('uv,jbs->ujbvs', eyeV, wr2f).reshape(VCin, 4 * VS)
    br2 = jnp.broadcast_to(params['br2'][0].reshape(4, 1, S), (4, V, S)).reshape(1, 4 * VS)

    def pad_rows(w):
        return w if P == VCin else jnp.pad(w, ((0, P - VCin), (0, 0)))

    wpre = pad_rows(wpre).astype(jnp.bfloat16)
    wr2 = pad_rows(wr2).astype(jnp.bfloat16)
    wbig = wbig.astype(jnp.bfloat16)

    # batch split: keep >=2 parallel grid blocks so v7x's dual TensorCores both work;
    # on single-TC v5e/v6e pass batch_block=N to fuse the whole batch into one step.
    if batch_block is None:
        batch_block = N // 2 if (N >= 2 and N % 2 == 0) else 1
    nb = batch_block
    assert N % nb == 0
    grid = (N // nb,)

    w_ins = [wpre, bpre, wbig, bbig, ga, w3a, b3a, gb, w3b, b3b, ms, mb, wr2, br2]

    def full_spec(a):
        nd = a.ndim
        return pl.BlockSpec(a.shape, lambda n, _nd=nd: (0,) * _nd)

    in_specs = ([pl.BlockSpec((nb, T, P), lambda n: (n, 0, 0))]
                + [full_spec(a) for a in w_ins])
    out_spec = pl.BlockSpec((nb, Tout, 4 * VS), lambda n: (n, 0, 0))

    y = pl.pallas_call(
        functools.partial(_basic_block_kernel, stride),
        out_shape=jax.ShapeDtypeStruct((N, Tout, 4 * VS), jnp.float32),
        grid=grid,
        in_specs=in_specs,
        out_specs=out_spec,
        compiler_params=pltpu.CompilerParams(dimension_semantics=("parallel",)),
    )(x2, *w_ins)

    # fused lane layout [branch][v][s] -> (N, 4*S, Tout, V) to match the torch module
    y = y.reshape(N, Tout, 4, V, S)
    y = jnp.transpose(y, (0, 2, 4, 1, 3)).reshape(N, C, Tout, V)
    return y


def make_params(key, Cin, C, S, Nh, V, eta, ks, stride, T, num_frame):
    """Deterministic synthetic Basic_Block parameters, with eval-mode BatchNorm folded."""
    keys = jax.random.split(key, 96)
    it = iter(keys)

    def nrm(shape, scale=0.1):
        return jax.random.normal(next(it), shape, jnp.float32) * scale

    def bn(c):
        gamma = jax.random.uniform(next(it), (c,), jnp.float32, 0.5, 1.5)
        beta = nrm((c,))
        mean = nrm((c,))
        var = jax.random.uniform(next(it), (c,), jnp.float32, 0.5, 1.5)
        return gamma, beta, mean, var

    def fold_pw(cin, cout):
        w = nrm((cout, cin))                       # torch Conv2d weight (cout, cin, 1, 1)
        b = nrm((cout,))
        g, bt, mu, var = bn(cout)
        sc = g / jnp.sqrt(var + BN_EPS)
        wf = (w * sc[:, None]).T                   # (cin, cout)
        bf = (b - mu) * sc + bt
        return wf, bf[None, :]

    def g_matrix(dilation):
        # DeTGC index/alpha computation (matches torch forward, incl. clamp to num_frame-1)
        ref = (ks + (ks - 1) * (dilation - 1) - 1) // 2
        tr = np.linspace(-ref, ref, eta).astype(np.float32)   # init value of the tr parameter
        Tout = T // stride
        t0 = (np.arange(Tout) * stride).astype(np.float32)
        t = t0[None, :] + tr[:, None]                         # (eta, Tout)
        tdn = np.floor(t)
        tup = tdn + 1.0
        i1 = np.clip(tdn, 0, num_frame - 1).astype(np.int64)
        i2 = np.clip(tup, 0, num_frame - 1).astype(np.int64)
        alpha = (tup - t).astype(np.float32)
        G = np.zeros((eta, Tout, T), np.float32)
        for e in range(eta):
            for to in range(Tout):
                G[e, to, i1[e, to]] += alpha[e, to]
                G[e, to, i2[e, to]] += 1.0 - alpha[e, to]
        return jnp.asarray(G)

    def fold_detgc(dilation):
        w3 = nrm((S, S, eta))                      # torch Conv3d weight (S, S, eta, 1, 1)
        b3 = nrm((S,))
        g, bt, mu, var = bn(S)
        sc = g / jnp.sqrt(var + BN_EPS)
        w3f = jnp.transpose(w3 * sc[:, None, None], (2, 1, 0))   # (eta, Cin, Cout)
        b3f = (b3 - mu) * sc + bt
        return g_matrix(dilation), w3f, b3f[None, :]

    p = {}
    # ST_GC: adjacency + 1x1 conv to C*Nh channels + BN (folded with A in the wrapper)
    p['A'] = nrm((Nh, V, V), 0.3)
    p['w_gcn'] = nrm((Nh, C, Cin))
    p['b_gcn'] = nrm((Nh, C))
    g, bt, mu, var = bn(C)
    sc = g / jnp.sqrt(var + BN_EPS)
    p['gcn_sc'] = sc
    p['gcn_sh'] = bt - mu * sc
    # residual1: PointWiseTCN(Cin, C)
    p['wr1'], p['br1'] = fold_pw(Cin, C)
    # tcn branch a / b / maxpool / conv1x1 (pointwise convs take C input channels)
    p['wa'], p['ba'] = fold_pw(C, S)
    p['ga'], p['w3a'], p['b3a'] = fold_detgc(1)
    p['wb'], p['bb'] = fold_pw(C, S)
    p['gb'], p['w3b'], p['b3b'] = fold_detgc(2)
    p['wm'], p['bm'] = fold_pw(C, S)
    g, bt, mu, var = bn(S)
    sc = g / jnp.sqrt(var + BN_EPS)
    p['ms'] = sc[None, :]
    p['mb'] = ((-mu) * sc + bt)[None, :]
    p['wc'], p['bc'] = fold_pw(C, S)
    # residual2: PointWiseTCN(Cin, C, stride=stride)
    p['wr2'], p['br2'] = fold_pw(Cin, C)
    return p


if __name__ == "__main__":
    # TODO(synk): the CTR_GC attention branch (in_channels not in {3, 9}) and training-mode
    #             BatchNorm statistics are not covered; this kernel implements Basic_Block
    #             with in_channels=3 (ST_GC gcn path) and eval-mode BN folded.
    key = jax.random.PRNGKey(0)
    N, Cin, T, V = 2, 3, 16, 16
    out_channels, num_scale = 32, 4
    S = out_channels // num_scale                  # scale_channels = 8
    C = out_channels
    Nh = 3                                         # adjacency subsets
    eta, ks, stride = 4, 5, 1
    num_frame = T

    kx, kp = jax.random.split(key)
    x = jax.random.normal(kx, (N, Cin, T, V), jnp.float32)
    params = make_params(kp, Cin, C, S, Nh, V, eta, ks, stride, T, num_frame)

    y = basic_block_forward(x, params, stride=stride)
    y = jax.block_until_ready(y)

    assert y.shape == (N, C, T // stride, V), y.shape
    assert bool(jnp.all(jnp.isfinite(y)))
    print("KERNEL_OK")
</pallas_src>

<mosaic_0001>
module attributes {stable_mosaic.version = 11 : i64} {
  func.func @_basic_block_kernel(%arg0: i32, %arg1: memref<1x16x128xbf16, #tpu.memory_space<vmem>>, %arg2: memref<128x512xbf16, #tpu.memory_space<vmem>>, %arg3: memref<1x512xf32, #tpu.memory_space<vmem>>, %arg4: memref<512x512xbf16, #tpu.memory_space<vmem>>, %arg5: memref<1x512xf32, #tpu.memory_space<vmem>>, %arg6: memref<4x16x16xbf16, #tpu.memory_space<vmem>>, %arg7: memref<4x128x128xbf16, #tpu.memory_space<vmem>>, %arg8: memref<1x128xf32, #tpu.memory_space<vmem>>, %arg9: memref<4x16x16xbf16, #tpu.memory_space<vmem>>, %arg10: memref<4x128x128xbf16, #tpu.memory_space<vmem>>, %arg11: memref<1x128xf32, #tpu.memory_space<vmem>>, %arg12: memref<1x128xf32, #tpu.memory_space<vmem>>, %arg13: memref<1x128xf32, #tpu.memory_space<vmem>>, %arg14: memref<128x512xbf16, #tpu.memory_space<vmem>>, %arg15: memref<1x512xf32, #tpu.memory_space<vmem>>, %arg16: memref<1x16x512xf32, #tpu.memory_space<vmem>>) attributes {dimension_semantics = [#tpu.dimension_semantics<parallel>], iteration_bounds = array<i64: 2>, scalar_prefetch = 0 : i64, scratch_operands = 0 : i64, tpu.core_type = #tpu.core_type<tc>, window_params = [{transform_indices = @transform_0, window_bounds = array<i64: 1, 16, 128>}, {pipeline_mode = #tpu.pipeline_mode<synchronous>, transform_indices = @transform_1, window_bounds = array<i64: 128, 512>}, {pipeline_mode = #tpu.pipeline_mode<synchronous>, transform_indices = @transform_2, window_bounds = array<i64: 1, 512>}, {pipeline_mode = #tpu.pipeline_mode<synchronous>, transform_indices = @transform_3, window_bounds = array<i64: 512, 512>}, {pipeline_mode = #tpu.pipeline_mode<synchronous>, transform_indices = @transform_4, window_bounds = array<i64: 1, 512>}, {pipeline_mode = #tpu.pipeline_mode<synchronous>, transform_indices = @transform_5, window_bounds = array<i64: 4, 16, 16>}, {pipeline_mode = #tpu.pipeline_mode<synchronous>, transform_indices = @transform_6, window_bounds = array<i64: 4, 128, 128>}, {pipeline_mode = #tpu.pipeline_mode<synchronous>, transform_indices = @transform_7, window_bounds = array<i64: 1, 128>}, {pipeline_mode = #tpu.pipeline_mode<synchronous>, transform_indices = @transform_8, window_bounds = array<i64: 4, 16, 16>}, {pipeline_mode = #tpu.pipeline_mode<synchronous>, transform_indices = @transform_9, window_bounds = array<i64: 4, 128, 128>}, {pipeline_mode = #tpu.pipeline_mode<synchronous>, transform_indices = @transform_10, window_bounds = array<i64: 1, 128>}, {pipeline_mode = #tpu.pipeline_mode<synchronous>, transform_indices = @transform_11, window_bounds = array<i64: 1, 128>}, {pipeline_mode = #tpu.pipeline_mode<synchronous>, transform_indices = @transform_12, window_bounds = array<i64: 1, 128>}, {pipeline_mode = #tpu.pipeline_mode<synchronous>, transform_indices = @transform_13, window_bounds = array<i64: 128, 512>}, {pipeline_mode = #tpu.pipeline_mode<synchronous>, transform_indices = @transform_14, window_bounds = array<i64: 1, 512>}, {transform_indices = @transform_15, window_bounds = array<i64: 1, 16, 512>}]} {
    %c0 = arith.constant 0 : index
    %c0_0 = arith.constant 0 : index
    %c0_1 = arith.constant 0 : index
    %0 = vector.load %arg1[%c0, %c0_0, %c0_1] : memref<1x16x128xbf16, #tpu.memory_space<vmem>>, vector<1x16x128xbf16>
    %1 = vector.shape_cast %0 : vector<1x16x128xbf16> to vector<16x128xbf16>
    %c0_2 = arith.constant 0 : index
    %c0_3 = arith.constant 0 : index
    %2 = vector.load %arg2[%c0_2, %c0_3] : memref<128x512xbf16, #tpu.memory_space<vmem>>, vector<128x512xbf16>
    %cst = arith.constant dense<0.000000e+00> : vector<16x512xf32>
    %3 = tpu.matmul %1, %2, %cst {dimension_numbers = #tpu.dot_dimension_numbers<[1], [0], [0], [1], [0, 0, 1, 1], [], []>} : vector<16x128xbf16>, vector<128x512xbf16>, vector<16x512xf32> -> vector<16x512xf32>
    %c0_4 = arith.constant 0 : index
    %c0_5 = arith.constant 0 : index
    %4 = vector.load %arg3[%c0_4, %c0_5] : memref<1x512xf32, #tpu.memory_space<vmem>>, vector<1x512xf32>
    %5 = vector.broadcast %4 : vector<1x512xf32> to vector<16x512xf32>
    %6 = arith.addf %3, %5 : vector<16x512xf32>
    %cst_6 = arith.constant 0.000000e+00 : f32
    %7 = vector.broadcast %cst_6 : f32 to vector<16x512xf32>
    %8 = arith.cmpf oge, %6, %7 : vector<16x512xf32>
    %cst_7 = arith.constant 1.000000e-01 : f32
    %9 = vector.broadcast %cst_7 : f32 to vector<16x512xf32>
    %10 = arith.mulf %9, %6 : vector<16x512xf32>
    %11 = arith.select %8, %6, %10 : vector<16x512xi1>, vector<16x512xf32>
    %12 = arith.truncf %11 : vector<16x512xf32> to vector<16x512xbf16>
    %c0_8 = arith.constant 0 : index
    %c0_9 = arith.constant 0 : index
    %13 = vector.load %arg4[%c0_8, %c0_9] : memref<512x512xbf16, #tpu.memory_space<vmem>>, vector<512x512xbf16>
    %cst_10 = arith.constant dense<0.000000e+00> : vector<16x512xf32>
    %14 = tpu.matmul %12, %13, %cst_10 {dimension_numbers = #tpu.dot_dimension_numbers<[1], [0], [0], [1], [0, 0, 1, 1], [], []>} : vector<16x512xbf16>, vector<512x512xbf16>, vector<16x512xf32> -> vector<16x512xf32>
    %c0_11 = arith.constant 0 : index
    %c0_12 = arith.constant 0 : index
    %15 = vector.load %arg5[%c0_11, %c0_12] : memref<1x512xf32, #tpu.memory_space<vmem>>, vector<1x512xf32>
    %16 = vector.broadcast %15 : vector<1x512xf32> to vector<16x512xf32>
    %17 = arith.addf %14, %16 : vector<16x512xf32>
    %18 = vector.extract_strided_slice %17 {offsets = [0, 0], sizes = [16, 384], strides = [1, 1]} : vector<16x512xf32> to vector<16x384xf32>
    %cst_13 = arith.constant 0.000000e+00 : f32
    %19 = vector.broadcast %cst_13 : f32 to vector<16x384xf32>
    %20 = arith.cmpf oge, %18, %19 : vector<16x384xf32>
    %cst_14 = arith.constant 1.000000e-01 : f32
    %21 = vector.broadcast %cst_14 : f32 to vector<16x384xf32>
    %22 = arith.mulf %21, %18 : vector<16x384xf32>
    %23 = arith.select %20, %18, %22 : vector<16x384xi1>, vector<16x384xf32>
    %24 = vector.extract_strided_slice %17 {offsets = [0, 384], sizes = [16, 128], strides = [1, 1]} : vector<16x512xf32> to vector<16x128xf32>
    %25 = vector.shape_cast %0 : vector<1x16x128xbf16> to vector<16x128xbf16>
    %c0_15 = arith.constant 0 : index
    %c0_16 = arith.constant 0 : index
    %26 = vector.load %arg14[%c0_15, %c0_16] : memref<128x512xbf16, #tpu.memory_space<vmem>>, vector<128x512xbf16>
    %cst_17 = arith.constant dense<0.000000e+00> : vector<16x512xf32>
    %27 = tpu.matmul %25, %26, %cst_17 {dimension_numbers = #tpu.dot_dimension_numbers<[1], [0], [0], [1], [0, 0, 1, 1], [], []>} : vector<16x128xbf16>, vector<128x512xbf16>, vector<16x512xf32> -> vector<16x512xf32>
    %c0_18 = arith.constant 0 : index
    %c0_19 = arith.constant 0 : index
    %28 = vector.load %arg15[%c0_18, %c0_19] : memref<1x512xf32, #tpu.memory_space<vmem>>, vector<1x512xf32>
    %29 = vector.broadcast %28 : vector<1x512xf32> to vector<16x512xf32>
    %30 = arith.addf %27, %29 : vector<16x512xf32>
    %31 = vector.extract_strided_slice %23 {offsets = [0, 0], sizes = [16, 128], strides = [1, 1]} : vector<16x384xf32> to vector<16x128xf32>
    %32 = vector.extract_strided_slice %23 {offsets = [0, 128], sizes = [16, 128], strides = [1, 1]} : vector<16x384xf32> to vector<16x128xf32>
    %33 = vector.extract_strided_slice %23 {offsets = [0, 256], sizes = [16, 128], strides = [1, 1]} : vector<16x384xf32> to vector<16x128xf32>
    %34 = arith.truncf %31 : vector<16x128xf32> to vector<16x128xbf16>
    %c0_20 = arith.constant 0 : index
    %c0_21 = arith.constant 0 : index
    %c0_22 = arith.constant 0 : index
    %35 = vector.load %arg6[%c0_20, %c0_21, %c0_22] : memref<4x16x16xbf16, #tpu.memory_space<vmem>>, vector<1x16x16xbf16>
    %36 = vector.shape_cast %35 : vector<1x16x16xbf16> to vector<16x16xbf16>
    %cst_23 = arith.constant dense<0.000000e+00> : vector<16x128xf32>
    %37 = tpu.matmul %36, %34, %cst_23 {dimension_numbers = #tpu.dot_dimension_numbers<[1], [0], [0], [1], [0, 0, 1, 1], [], []>} : vector<16x16xbf16>, vector<16x128xbf16>, vector<16x128xf32> -> vector<16x128xf32>
    %38 = arith.truncf %37 : vector<16x128xf32> to vector<16x128xbf16>
    %c0_24 = arith.constant 0 : index
    %c0_25 = arith.constant 0 : index
    %c0_26 = arith.constant 0 : index
    %39 = vector.load %arg7[%c0_24, %c0_25, %c0_26] : memref<4x128x128xbf16, #tpu.memory_space<vmem>>, vector<1x128x128xbf16>
    %40 = vector.shape_cast %39 : vector<1x128x128xbf16> to vector<128x128xbf16>
    %cst_27 = arith.constant dense<0.000000e+00> : vector<16x128xf32>
    %41 = tpu.matmul %38, %40, %cst_27 {dimension_numbers = #tpu.dot_dimension_numbers<[1], [0], [0], [1], [0, 0, 1, 1], [], []>} : vector<16x128xbf16>, vector<128x128xbf16>, vector<16x128xf32> -> vector<16x128xf32>
    %c1 = arith.constant 1 : index
    %c0_28 = arith.constant 0 : index
    %c0_29 = arith.constant 0 : index
    %42 = vector.load %arg6[%c1, %c0_28, %c0_29] : memref<4x16x16xbf16, #tpu.memory_space<vmem>>, vector<1x16x16xbf16>
    %43 = vector.shape_cast %42 : vector<1x16x16xbf16> to vector<16x16xbf16>
    %cst_30 = arith.constant dense<0.000000e+00> : vector<16x128xf32>
    %44 = tpu.matmul %43, %34, %cst_30 {dimension_numbers = #tpu.dot_dimension_numbers<[1], [0], [0], [1], [0, 0, 1, 1], [], []>} : vector<16x16xbf16>, vector<16x128xbf16>, vector<16x128xf32> -> vector<16x128xf32>
    %45 = arith.truncf %44 : vector<16x128xf32> to vector<16x128xbf16>
    %c1_31 = arith.constant 1 : index
    %c0_32 = arith.constant 0 : index
    %c0_33 = arith.constant 0 : index
    %46 = vector.load %arg7[%c1_31, %c0_32, %c0_33] : memref<4x128x128xbf16, #tpu.memory_space<vmem>>, vector<1x128x128xbf16>
    %47 = vector.shape_cast %46 : vector<1x128x128xbf16> to vector<128x128xbf16>
    %cst_34 = arith.constant dense<0.000000e+00> : vector<16x128xf32>
    %48 = tpu.matmul %45, %47, %cst_34 {dimension_numbers = #tpu.dot_dimension_numbers<[1], [0], [0], [1], [0, 0, 1, 1], [], []>} : vector<16x128xbf16>, vector<128x128xbf16>, vector<16x128xf32> -> vector<16x128xf32>
    %49 = arith.addf %41, %48 : vector<16x128xf32>
    %c2 = arith.constant 2 : index
    %c0_35 = arith.constant 0 : index
    %c0_36 = arith.constant 0 : index
    %50 = vector.load %arg6[%c2, %c0_35, %c0_36] : memref<4x16x16xbf16, #tpu.memory_space<vmem>>, vector<1x16x16xbf16>
    %51 = vector.shape_cast %50 : vector<1x16x16xbf16> to vector<16x16xbf16>
    %cst_37 = arith.constant dense<0.000000e+00> : vector<16x128xf32>
    %52 = tpu.matmul %51, %34, %cst_37 {dimension_numbers = #tpu.dot_dimension_numbers<[1], [0], [0], [1], [0, 0, 1, 1], [], []>} : vector<16x16xbf16>, vector<16x128xbf16>, vector<16x128xf32> -> vector<16x128xf32>
    %53 = arith.truncf %52 : vector<16x128xf32> to vector<16x128xbf16>
    %c2_38 = arith.constant 2 : index
    %c0_39 = arith.constant 0 : index
    %c0_40 = arith.constant 0 : index
    %54 = vector.load %arg7[%c2_38, %c0_39, %c0_40] : memref<4x128x128xbf16, #tpu.memory_space<vmem>>, vector<1x128x128xbf16>
    %55 = vector.shape_cast %54 : vector<1x128x128xbf16> to vector<128x128xbf16>
    %cst_41 = arith.constant dense<0.000000e+00> : vector<16x128xf32>
    %56 = tpu.matmul %53, %55, %cst_41 {dimension_numbers = #tpu.dot_dimension_numbers<[1], [0], [0], [1], [0, 0, 1, 1], [], []>} : vector<16x128xbf16>, vector<128x128xbf16>, vector<16x128xf32> -> vector<16x128xf32>
    %57 = arith.addf %49, %56 : vector<16x128xf32>
    %c3 = arith.constant 3 : index
    %c0_42 = arith.constant 0 : index
    %c0_43 = arith.constant 0 : index
    %58 = vector.load %arg6[%c3, %c0_42, %c0_43] : memref<4x16x16xbf16, #tpu.memory_space<vmem>>, vector<1x16x16xbf16>
    %59 = vector.shape_cast %58 : vector<1x16x16xbf16> to vector<16x16xbf16>
    %cst_44 = arith.constant dense<0.000000e+00> : vector<16x128xf32>
    %60 = tpu.matmul %59, %34, %cst_44 {dimension_numbers = #tpu.dot_dimension_numbers<[1], [0], [0], [1], [0, 0, 1, 1], [], []>} : vector<16x16xbf16>, vector<16x128xbf16>, vector<16x128xf32> -> vector<16x128xf32>
    %61 = arith.truncf %60 : vector<16x128xf32> to vector<16x128xbf16>
    %c3_45 = arith.constant 3 : index
    %c0_46 = arith.constant 0 : index
    %c0_47 = arith.constant 0 : index
    %62 = vector.load %arg7[%c3_45, %c0_46, %c0_47] : memref<4x128x128xbf16, #tpu.memory_space<vmem>>, vector<1x128x128xbf16>
    %63 = vector.shape_cast %62 : vector<1x128x128xbf16> to vector<128x128xbf16>
    %cst_48 = arith.constant dense<0.000000e+00> : vector<16x128xf32>
    %64 = tpu.matmul %61, %63, %cst_48 {dimension_numbers = #tpu.dot_dimension_numbers<[1], [0], [0], [1], [0, 0, 1, 1], [], []>} : vector<16x128xbf16>, vector<128x128xbf16>, vector<16x128xf32> -> vector<16x128xf32>
    %65 = arith.addf %57, %64 : vector<16x128xf32>
    %c0_49 = arith.constant 0 : index
    %c0_50 = arith.constant 0 : index
    %66 = vector.load %arg8[%c0_49, %c0_50] : memref<1x128xf32, #tpu.memory_space<vmem>>, vector<1x128xf32>
    %67 = vector.broadcast %66 : vector<1x128xf32> to vector<16x128xf32>
    %68 = arith.addf %65, %67 : vector<16x128xf32>
    %69 = arith.truncf %32 : vector<16x128xf32> to vector<16x128xbf16>
    %c0_51 = arith.constant 0 : index
    %c0_52 = arith.constant 0 : index
    %c0_53 = arith.constant 0 : index
    %70 = vector.load %arg9[%c0_51, %c0_52, %c0_53] : memref<4x16x16xbf16, #tpu.memory_space<vmem>>, vector<1x16x16xbf16>
    %71 = vector.shape_cast %70 : vector<1x16x16xbf16> to vector<16x16xbf16>
    %cst_54 = arith.constant dense<0.000000e+00> : vector<16x128xf32>
    %72 = tpu.matmul %71, %69, %cst_54 {dimension_numbers = #tpu.dot_dimension_numbers<[1], [0], [0], [1], [0, 0, 1, 1], [], []>} : vector<16x16xbf16>, vector<16x128xbf16>, vector<16x128xf32> -> vector<16x128xf32>
    %73 = arith.truncf %72 : vector<16x128xf32> to vector<16x128xbf16>
    %c0_55 = arith.constant 0 : index
    %c0_56 = arith.constant 0 : index
    %c0_57 = arith.constant 0 : index
    %74 = vector.load %arg10[%c0_55, %c0_56, %c0_57] : memref<4x128x128xbf16, #tpu.memory_space<vmem>>, vector<1x128x128xbf16>
    %75 = vector.shape_cast %74 : vector<1x128x128xbf16> to vector<128x128xbf16>
    %cst_58 = arith.constant dense<0.000000e+00> : vector<16x128xf32>
    %76 = tpu.matmul %73, %75, %cst_58 {dimension_numbers = #tpu.dot_dimension_numbers<[1], [0], [0], [1], [0, 0, 1, 1], [], []>} : vector<16x128xbf16>, vector<128x128xbf16>, vector<16x128xf32> -> vector<16x128xf32>
    %c1_59 = arith.constant 1 : index
    %c0_60 = arith.constant 0 : index
    %c0_61 = arith.constant 0 : index
    %77 = vector.load %arg9[%c1_59, %c0_60, %c0_61] : memref<4x16x16xbf16, #tpu.memory_space<vmem>>, vector<1x16x16xbf16>
    %78 = vector.shape_cast %77 : vector<1x16x16xbf16> to vector<16x16xbf16>
    %cst_62 = arith.constant dense<0.000000e+00> : vector<16x128xf32>
    %79 = tpu.matmul %78, %69, %cst_62 {dimension_numbers = #tpu.dot_dimension_numbers<[1], [0], [0], [1], [0, 0, 1, 1], [], []>} : vector<16x16xbf16>, vector<16x128xbf16>, vector<16x128xf32> -> vector<16x128xf32>
    %80 = arith.truncf %79 : vector<16x128xf32> to vector<16x128xbf16>
    %c1_63 = arith.constant 1 : index
    %c0_64 = arith.constant 0 : index
    %c0_65 = arith.constant 0 : index
    %81 = vector.load %arg10[%c1_63, %c0_64, %c0_65] : memref<4x128x128xbf16, #tpu.memory_space<vmem>>, vector<1x128x128xbf16>
    %82 = vector.shape_cast %81 : vector<1x128x128xbf16> to vector<128x128xbf16>
    %cst_66 = arith.constant dense<0.000000e+00> : vector<16x128xf32>
    %83 = tpu.matmul %80, %82, %cst_66 {dimension_numbers = #tpu.dot_dimension_numbers<[1], [0], [0], [1], [0, 0, 1, 1], [], []>} : vector<16x128xbf16>, vector<128x128xbf16>, vector<16x128xf32> -> vector<16x128xf32>
    %84 = arith.addf %76, %83 : vector<16x128xf32>
    %c2_67 = arith.constant 2 : index
    %c0_68 = arith.constant 0 : index
    %c0_69 = arith.constant 0 : index
    %85 = vector.load %arg9[%c2_67, %c0_68, %c0_69] : memref<4x16x16xbf16, #tpu.memory_space<vmem>>, vector<1x16x16xbf16>
    %86 = vector.shape_cast %85 : vector<1x16x16xbf16> to vector<16x16xbf16>
    %cst_70 = arith.constant dense<0.000000e+00> : vector<16x128xf32>
    %87 = tpu.matmul %86, %69, %cst_70 {dimension_numbers = #tpu.dot_dimension_numbers<[1], [0], [0], [1], [0, 0, 1, 1], [], []>} : vector<16x16xbf16>, vector<16x128xbf16>, vector<16x128xf32> -> vector<16x128xf32>
    %88 = arith.truncf %87 : vector<16x128xf32> to vector<16x128xbf16>
    %c2_71 = arith.constant 2 : index
    %c0_72 = arith.constant 0 : index
    %c0_73 = arith.constant 0 : index
    %89 = vector.load %arg10[%c2_71, %c0_72, %c0_73] : memref<4x128x128xbf16, #tpu.memory_space<vmem>>, vector<1x128x128xbf16>
    %90 = vector.shape_cast %89 : vector<1x128x128xbf16> to vector<128x128xbf16>
    %cst_74 = arith.constant dense<0.000000e+00> : vector<16x128xf32>
    %91 = tpu.matmul %88, %90, %cst_74 {dimension_numbers = #tpu.dot_dimension_numbers<[1], [0], [0], [1], [0, 0, 1, 1], [], []>} : vector<16x128xbf16>, vector<128x128xbf16>, vector<16x128xf32> -> vector<16x128xf32>
    %92 = arith.addf %84, %91 : vector<16x128xf32>
    %c3_75 = arith.constant 3 : index
    %c0_76 = arith.constant 0 : index
    %c0_77 = arith.constant 0 : index
    %93 = vector.load %arg9[%c3_75, %c0_76, %c0_77] : memref<4x16x16xbf16, #tpu.memory_space<vmem>>, vector<1x16x16xbf16>
    %94 = vector.shape_cast %93 : vector<1x16x16xbf16> to vector<16x16xbf16>
    %cst_78 = arith.constant dense<0.000000e+00> : vector<16x128xf32>
    %95 = tpu.matmul %94, %69, %cst_78 {dimension_numbers = #tpu.dot_dimension_numbers<[1], [0], [0], [1], [0, 0, 1, 1], [], []>} : vector<16x16xbf16>, vector<16x128xbf16>, vector<16x128xf32> -> vector<16x128xf32>
    %96 = arith.truncf %95 : vector<16x128xf32> to vector<16x128xbf16>
    %c3_79 = arith.constant 3 : index
    %c0_80 = arith.constant 0 : index
    %c0_81 = arith.constant 0 : index
    %97 = vector.load %arg10[%c3_79, %c0_80, %c0_81] : memref<4x128x128xbf16, #tpu.memory_space<vmem>>, vector<1x128x128xbf16>
    %98 = vector.shape_cast %97 : vector<1x128x128xbf16> to vector<128x128xbf16>
    %cst_82 = arith.constant dense<0.000000e+00> : vector<16x128xf32>
    %99 = tpu.matmul %96, %98, %cst_82 {dimension_numbers = #tpu.dot_dimension_numbers<[1], [0], [0], [1], [0, 0, 1, 1], [], []>} : vector<16x128xbf16>, vector<128x128xbf16>, vector<16x128xf32> -> vector<16x128xf32>
    %100 = arith.addf %92, %99 : vector<16x128xf32>
    %c0_83 = arith.constant 0 : index
    %c0_84 = arith.constant 0 : index
    %101 = vector.load %arg11[%c0_83, %c0_84] : memref<1x128xf32, #tpu.memory_space<vmem>>, vector<1x128xf32>
    %102 = vector.broadcast %101 : vector<1x128xf32> to vector<16x128xf32>
    %103 = arith.addf %100, %102 : vector<16x128xf32>
    %104 = vector.extract_strided_slice %33 {offsets = [0, 0], sizes = [1, 128], strides = [1, 1]} : vector<16x128xf32> to vector<1x128xf32>
    %105 = vector.extract_strided_slice %33 {offsets = [0, 0], sizes = [15, 128], strides = [1, 1]} : vector<16x128xf32> to vector<15x128xf32>
    %106 = tpu.concatenate %104, %105 in 0 : vector<1x128xf32>, vector<15x128xf32> -> vector<16x128xf32>
    %107 = vector.extract_strided_slice %33 {offsets = [1, 0], sizes = [15, 128], strides = [1, 1]} : vector<16x128xf32> to vector<15x128xf32>
    %108 = vector.extract_strided_slice %33 {offsets = [15, 0], sizes = [1, 128], strides = [1, 1]} : vector<16x128xf32> to vector<1x128xf32>
    %109 = tpu.concatenate %107, %108 in 0 : vector<15x128xf32>, vector<1x128xf32> -> vector<16x128xf32>
    %110 = arith.maximumf %106, %109 : vector<16x128xf32>
    %111 = arith.maximumf %33, %110 : vector<16x128xf32>
    %c0_85 = arith.constant 0 : index
    %c0_86 = arith.constant 0 : index
    %112 = vector.load %arg12[%c0_85, %c0_86] : memref<1x128xf32, #tpu.memory_space<vmem>>, vector<1x128xf32>
    %113 = vector.broadcast %112 : vector<1x128xf32> to vector<16x128xf32>
    %114 = arith.mulf %111, %113 : vector<16x128xf32>
    %c0_87 = arith.constant 0 : index
    %c0_88 = arith.constant 0 : index
    %115 = vector.load %arg13[%c0_87, %c0_88] : memref<1x128xf32, #tpu.memory_space<vmem>>, vector<1x128xf32>
    %116 = vector.broadcast %115 : vector<1x128xf32> to vector<16x128xf32>
    %117 = arith.addf %114, %116 : vector<16x128xf32>
    %118 = tpu.concatenate %68, %103, %117, %24 in 1 : vector<16x128xf32>, vector<16x128xf32>, vector<16x128xf32>, vector<16x128xf32> -> vector<16x512xf32>
    %119 = arith.addf %118, %30 : vector<16x512xf32>
    %cst_89 = arith.constant 0.000000e+00 : f32
    %120 = vector.broadcast %cst_89 : f32 to vector<16x512xf32>
    %121 = arith.cmpf oge, %119, %120 : vector<16x512xf32>
    %cst_90 = arith.constant 1.000000e-01 : f32
    %122 = vector.broadcast %cst_90 : f32 to vector<16x512xf32>
    %123 = arith.mulf %122, %119 : vector<16x512xf32>
    %124 = arith.select %121, %119, %123 : vector<16x512xi1>, vector<16x512xf32>
    %c0_91 = arith.constant 0 : index
    %c0_92 = arith.constant 0 : index
    %c0_93 = arith.constant 0 : index
    %125 = vector.load %arg16[%c0_91, %c0_92, %c0_93] : memref<1x16x512xf32, #tpu.memory_space<vmem>>, vector<1x16x512xf32>
    %126 = vector.shape_cast %125 : vector<1x16x512xf32> to vector<16x512xf32>
    %127 = vector.shape_cast %124 : vector<16x512xf32> to vector<1x16x512xf32>
    tpu.vector_store %arg16[%c0_91, %c0_92, %c0_93], %127 {strides = array<i32>} : memref<1x16x512xf32, #tpu.memory_space<vmem>>, vector<1x16x512xf32>,
    return
  }
  func.func @transform_0(%arg0: i32) -> (i32, i32, i32) {
    %c0_i32 = arith.constant 0 : i32
    %c0_i32_0 = arith.constant 0 : i32
    %c0_i32_1 = arith.constant 0 : i32
    return %arg0, %c0_i32, %c0_i32_0 : i32, i32, i32
  }
  func.func @transform_1(%arg0: i32) -> (i32, i32) {
    %c0_i32 = arith.constant 0 : i32
    %c0_i32_0 = arith.constant 0 : i32
    %c0_i32_1 = arith.constant 0 : i32
    return %c0_i32, %c0_i32_0 : i32, i32
  }
  func.func @transform_2(%arg0: i32) -> (i32, i32) {
    %c0_i32 = arith.constant 0 : i32
    %c0_i32_0 = arith.constant 0 : i32
    %c0_i32_1 = arith.constant 0 : i32
    return %c0_i32, %c0_i32_0 : i32, i32
  }
  func.func @transform_3(%arg0: i32) -> (i32, i32) {
    %c0_i32 = arith.constant 0 : i32
    %c0_i32_0 = arith.constant 0 : i32
    %c0_i32_1 = arith.constant 0 : i32
    return %c0_i32, %c0_i32_0 : i32, i32
  }
  func.func @transform_4(%arg0: i32) -> (i32, i32) {
    %c0_i32 = arith.constant 0 : i32
    %c0_i32_0 = arith.constant 0 : i32
    %c0_i32_1 = arith.constant 0 : i32
    return %c0_i32, %c0_i32_0 : i32, i32
  }
  func.func @transform_5(%arg0: i32) -> (i32, i32, i32) {
    %c0_i32 = arith.constant 0 : i32
    %c0_i32_0 = arith.constant 0 : i32
    %c0_i32_1 = arith.constant 0 : i32
    %c0_i32_2 = arith.constant 0 : i32
    return %c0_i32, %c0_i32_0, %c0_i32_1 : i32, i32, i32
  }
  func.func @transform_6(%arg0: i32) -> (i32, i32, i32) {
    %c0_i32 = arith.constant 0 : i32
    %c0_i32_0 = arith.constant 0 : i32
    %c0_i32_1 = arith.constant 0 : i32
    %c0_i32_2 = arith.constant 0 : i32
    return %c0_i32, %c0_i32_0, %c0_i32_1 : i32, i32, i32
  }
  func.func @transform_7(%arg0: i32) -> (i32, i32) {
    %c0_i32 = arith.constant 0 : i32
    %c0_i32_0 = arith.constant 0 : i32
    %c0_i32_1 = arith.constant 0 : i32
    return %c0_i32, %c0_i32_0 : i32, i32
  }
  func.func @transform_8(%arg0: i32) -> (i32, i32, i32) {
    %c0_i32 = arith.constant 0 : i32
    %c0_i32_0 = arith.constant 0 : i32
    %c0_i32_1 = arith.constant 0 : i32
    %c0_i32_2 = arith.constant 0 : i32
    return %c0_i32, %c0_i32_0, %c0_i32_1 : i32, i32, i32
  }
  func.func @transform_9(%arg0: i32) -> (i32, i32, i32) {
    %c0_i32 = arith.constant 0 : i32
    %c0_i32_0 = arith.constant 0 : i32
    %c0_i32_1 = arith.constant 0 : i32
    %c0_i32_2 = arith.constant 0 : i32
    return %c0_i32, %c0_i32_0, %c0_i32_1 : i32, i32, i32
  }
  func.func @transform_10(%arg0: i32) -> (i32, i32) {
    %c0_i32 = arith.constant 0 : i32
    %c0_i32_0 = arith.constant 0 : i32
    %c0_i32_1 = arith.constant 0 : i32
    return %c0_i32, %c0_i32_0 : i32, i32
  }
  func.func @transform_11(%arg0: i32) -> (i32, i32) {
    %c0_i32 = arith.constant 0 : i32
    %c0_i32_0 = arith.constant 0 : i32
    %c0_i32_1 = arith.constant 0 : i32
    return %c0_i32, %c0_i32_0 : i32, i32
  }
  func.func @transform_12(%arg0: i32) -> (i32, i32) {
    %c0_i32 = arith.constant 0 : i32
    %c0_i32_0 = arith.constant 0 : i32
    %c0_i32_1 = arith.constant 0 : i32
    return %c0_i32, %c0_i32_0 : i32, i32
  }
  func.func @transform_13(%arg0: i32) -> (i32, i32) {
    %c0_i32 = arith.constant 0 : i32
    %c0_i32_0 = arith.constant 0 : i32
    %c0_i32_1 = arith.constant 0 : i32
    return %c0_i32, %c0_i32_0 : i32, i32
  }
  func.func @transform_14(%arg0: i32) -> (i32, i32) {
    %c0_i32 = arith.constant 0 : i32
    %c0_i32_0 = arith.constant 0 : i32
    %c0_i32_1 = arith.constant 0 : i32
    return %c0_i32, %c0_i32_0 : i32, i32
  }
  func.func @transform_15(%arg0: i32) -> (i32, i32, i32) {
    %c0_i32 = arith.constant 0 : i32
    %c0_i32_0 = arith.constant 0 : i32
    %c0_i32_1 = arith.constant 0 : i32
    return %arg0, %c0_i32, %c0_i32_0 : i32, i32, i32
  }
}

</mosaic_0001>

<llo_original>
// kernel: tpu_custom_call.1
$region0: #{tpu_custom_call.1}
  #allocation0 [shape = 'u32[]', space=smem, size = 0x4, offset = 0x4, fixed_abs, tag = 'smem constant byte address 0x4 - core index']
  #allocation1 [shape = 'u32[72,128]{1,0:T(1,128)}', space=vmem, size = 0x9000, scoped, tag = 'internal scratch']
  %s0 = inlined_call_operand.hbm [shape: bf16[2,16,128], index: 0, kind: input, shape index: {}]
  %s1 = inlined_call_operand.hbm [shape: bf16[128,512], index: 1, kind: input, shape index: {}]
  %s2 = inlined_call_operand.hbm [shape: f32[1,512], index: 2, kind: input, shape index: {}]
  %s3 = inlined_call_operand.hbm [shape: bf16[512,512], index: 3, kind: input, shape index: {}]
  %s4 = inlined_call_operand.hbm [shape: f32[1,512], index: 4, kind: input, shape index: {}]
  %s5 = inlined_call_operand.hbm [shape: bf16[4,16,16], index: 5, kind: input, shape index: {}]
  %s6 = inlined_call_operand.hbm [shape: bf16[4,128,128], index: 6, kind: input, shape index: {}]
  %s7 = inlined_call_operand.vmem [shape: f32[1,128], index: 7, kind: input, shape index: {}]
  %s8 = inlined_call_operand.hbm [shape: bf16[4,16,16], index: 8, kind: input, shape index: {}]
  %s9 = inlined_call_operand.hbm [shape: bf16[4,128,128], index: 9, kind: input, shape index: {}]
  %s10 = inlined_call_operand.vmem [shape: f32[1,128], index: 10, kind: input, shape index: {}]
  %s11 = inlined_call_operand.vmem [shape: f32[1,128], index: 11, kind: input, shape index: {}]
  %s12 = inlined_call_operand.vmem [shape: f32[1,128], index: 12, kind: input, shape index: {}]
  %s13 = inlined_call_operand.hbm [shape: bf16[128,512], index: 13, kind: input, shape index: {}]
  %s14 = inlined_call_operand.vmem [shape: f32[1,512], index: 14, kind: input, shape index: {}]
  %s15 = inlined_call_operand.hbm [shape: f32[2,16,512], index: 15, kind: output, shape index: {}]
  %s16 = sld [smem:[#allocation0]]
  $region133: #{tpu_custom_call.1} parent=0
    _
  %s18 = ssub.s32 1, %s16
  %s19 = scalar_select 0, %s18, %s16
  $region1: #{tpu_custom_call.1} parent=0
    #allocation2 [shape = 'u8[8192]{0}', space=vmem, size = 0x2000, scoped, tag = 'input window, operand 0']
    #allocation3 [shape = 's32[2]{0}', space=sflag, size = 0x8, scoped, tag = 'scoped memory for tpu_custom_call.1']
    #allocation4 [shape = 's32[2]{0}', space=sflag, size = 0x8, scoped, tag = 'scoped memory for tpu_custom_call.1']
    #allocation5 [shape = 'u8[131072]{0}', space=vmem, size = 0x20000, scoped, tag = 'input window, operand 1, single buffered']
    #allocation6 [shape = 's32[1]{0}', space=sflag, size = 0x4, scoped, tag = 'scoped memory for tpu_custom_call.1']
    #allocation7 [shape = 'u8[2048]{0}', space=vmem, size = 0x800, scoped, tag = 'input window, operand 2, single buffered']
    #allocation8 [shape = 'u8[524288]{0}', space=vmem, size = 0x80000, scoped, tag = 'input window, operand 3, single buffered']
    #allocation9 [shape = 's32[1]{0}', space=sflag, size = 0x4, scoped, tag = 'scoped memory for tpu_custom_call.1']
    #allocation10 [shape = 'u8[2048]{0}', space=vmem, size = 0x800, scoped, tag = 'input window, operand 4, single buffered']
    #allocation11 [shape = 'u8[16384]{0}', space=vmem, size = 0x4000, scoped, tag = 'input window, operand 5, single buffered']
    #allocation12 [shape = 's32[1]{0}', space=sflag, size = 0x4, scoped, tag = 'scoped memory for tpu_custom_call.1']
    #allocation13 [shape = 'u8[131072]{0}', space=vmem, size = 0x20000, scoped, tag = 'input window, operand 6, single buffered']
    #allocation14 [shape = 'u8[16384]{0}', space=vmem, size = 0x4000, scoped, tag = 'input window, operand 8, single buffered']
    #allocation15 [shape = 's32[1]{0}', space=sflag, size = 0x4, scoped, tag = 'scoped memory for tpu_custom_call.1']
    #allocation16 [shape = 'u8[131072]{0}', space=vmem, size = 0x20000, scoped, tag = 'input window, operand 9, single buffered']
    #allocation17 [shape = 'u8[131072]{0}', space=vmem, size = 0x20000, scoped, tag = 'input window, operand 13, single buffered']
    #allocation18 [shape = 's32[1]{0}', space=sflag, size = 0x4, scoped, tag = 'scoped memory for tpu_custom_call.1']
    #allocation19 [shape = 'u8[65536]{0}', space=vmem, size = 0x10000, scoped, tag = 'output window, operand 0']
    %20 = vsyncpa [#allocation3], 0
    %s21 = scalar_lea.sflag [#allocation3], 1
    %22 = vsyncpa %s21, 0
    %23 = vsyncpa [#allocation6], 0
    %24 = vsyncpa [#allocation9], 0
    %25 = vsyncpa [#allocation12], 0
    %26 = vsyncpa [#allocation15], 0
    %27 = vsyncpa [#allocation18], 0
    %28 = vsyncpa [#allocation4], 0
    %s29 = scalar_lea.sflag [#allocation4], 1
    %30 = vsyncpa %s29, 0
    loop: start=0, step=1, limit=4
    $region2: #{tpu_custom_call.1} parent=1 // loop_pre_header
      _
    $region3: #{tpu_custom_call.1} parent=1 // loop_header
      %s32 = sphi 0, %s36
      %p33 = scmp.ge.s32.totalorder %s32, 4
      %s42 = sphi 0, %s44
      %s45 = sphi 0, %s42
      %s46 = sphi 0, %s45
      %s62 = sphi 0, %s46
      %s66 = sphi 0, %s66
      %s68 = sphi 0, %s66
      %s69 = sphi 0, %s68
      %s83 = sphi 0, %s69
      %s87 = sphi 0, %s87
      %s89 = sphi 0, %s87
      %s90 = sphi 0, %s89
      %s104 = sphi 0, %s90
      %s108 = sphi 0, %s108
      %s110 = sphi 0, %s108
      %s111 = sphi 0, %s110
      %s125 = sphi 0, %s111
      %s129 = sphi 0, %s129
      %s131 = sphi 0, %s129
      %s132 = sphi 0, %s131
      %s146 = sphi 0, %s132
      %s150 = sphi 0, %s150
      %s152 = sphi 0, %s150
      %s153 = sphi 0, %s152
      %s167 = sphi 0, %s153
      %s171 = sphi 0, %s171
      %s173 = sphi 0, %s171
      %s174 = sphi 0, %s173
      %s188 = sphi 0, %s174
      %s192 = sphi 0, %s192
      %s194 = sphi 0, %s192
      %s195 = sphi 0, %s194
      %s209 = sphi 0, %s195
      %s213 = sphi 0, %s213
      %s215 = sphi 0, %s213
      %s216 = sphi 0, %s215
      %s230 = sphi 0, %s216
      %s234 = sphi 0, %s234
      %s236 = sphi 0, %s234
      %s237 = sphi 0, %s236
      %s251 = sphi 0, %s237
      %s255 = sphi 0, %s255
      %s257 = sphi 0, %s255
      %s258 = sphi 0, %s257
      %s272 = sphi 0, %s258
      %s276 = sphi 0, %s276
      %s278 = sphi 0, %s276
      %s279 = sphi 0, %s278
      %s293 = sphi 0, %s279
      %s297 = sphi 0, %s297
      %s299 = sphi 0, %s297
      %s300 = sphi 0, %s299
      %s314 = sphi 0, %s300
      %s318 = sphi 0, %s318
      %s320 = sphi 0, %s318
      %s321 = sphi 0, %s320
      %s335 = sphi 0, %s321
      %s339 = sphi 0, %s339
      %s341 = sphi 0, %s339
      %s342 = sphi 0, %s341
      %s356 = sphi 0, %s342
      %s362 = sphi 0, %s364
      %s365 = sphi 0, %s362
      %s366 = sphi 0, %s365
      %s382 = sphi 0, %s366
    $region4: #{tpu_custom_call.1} parent=1 // loop_header_branch
      %35 = sbr.rel (%p33) target = $region8
    $region5: #{tpu_custom_call.1} parent=1 // loop_body
      %s37 = ssub.s32 %s32, 1
      %s38 = ssub.s32 %s32, 2
      %s39 = sadd.s32 %s32, 1
      %s40 = ssub.s32 %s32, %s39
      %p41 = scmp.eq.s32.totalorder %s40, 0
      %s43 = sadd.s32 %s42, 1
      %s44 = scalar_select %p41, %s42, %s43
      %p47 = pneg %p41
      %p48 = scmp.eq.s32.totalorder %s32, 1
      %p49 = por %p47, %p48
      %p50 = scmp.ne.s32.totalorder %s42, %s45
      %p51 = scmp.eq.s32.totalorder %s32, 0
      %p52 = por %p50, %p51
      %p53 = scmp.ne.s32.totalorder %s42, %s45
      %p54 = scmp.eq.s32.totalorder %s37, 1
      %p55 = por %p53, %p54
      %p56 = scmp.ne.s32.totalorder %s45, %s46
      %p57 = scmp.eq.s32.totalorder %s37, 0
      %p58 = por %p56, %p57
      %p59 = scmp.ne.s32.totalorder %s45, %s46
      %p60 = scmp.eq.s32.totalorder %s38, 1
      %p61 = por %p59, %p60
      %p63 = scmp.ne.s32.totalorder %s46, %s62
      %p64 = scmp.eq.s32.totalorder %s38, 0
      %p65 = por %p63, %p64
      %s67 = sadd.s32 %s66, 1
      %p70 = scmp.eq.s32.totalorder %s32, 1
      %p71 = scmp.ne.s32.totalorder %s66, %s68
      %p72 = scmp.eq.s32.totalorder %s32, 0
      %p73 = por %p71, %p72
      %p74 = scmp.ne.s32.totalorder %s66, %s68
      %p75 = scmp.eq.s32.totalorder %s37, 1
      %p76 = por %p74, %p75
      %p77 = scmp.ne.s32.totalorder %s68, %s69
      %p78 = scmp.eq.s32.totalorder %s37, 0
      %p79 = por %p77, %p78
      %p80 = scmp.ne.s32.totalorder %s68, %s69
      %p81 = scmp.eq.s32.totalorder %s38, 1
      %p82 = por %p80, %p81
      %p84 = scmp.ne.s32.totalorder %s69, %s83
      %p85 = scmp.eq.s32.totalorder %s38, 0
      %p86 = por %p84, %p85
      %s88 = sadd.s32 %s87, 1
      %p91 = scmp.eq.s32.totalorder %s32, 1
      %p92 = scmp.ne.s32.totalorder %s87, %s89
      %p93 = scmp.eq.s32.totalorder %s32, 0
      %p94 = por %p92, %p93
      %p95 = scmp.ne.s32.totalorder %s87, %s89
      %p96 = scmp.eq.s32.totalorder %s37, 1
      %p97 = por %p95, %p96
      %p98 = scmp.ne.s32.totalorder %s89, %s90
      %p99 = scmp.eq.s32.totalorder %s37, 0
      %p100 = por %p98, %p99
      %p101 = scmp.ne.s32.totalorder %s89, %s90
      %p102 = scmp.eq.s32.totalorder %s38, 1
      %p103 = por %p101, %p102
      %p105 = scmp.ne.s32.totalorder %s90, %s104
      %p106 = scmp.eq.s32.totalorder %s38, 0
      %p107 = por %p105, %p106
      %s109 = sadd.s32 %s108, 1
      %p112 = scmp.eq.s32.totalorder %s32, 1
      %p113 = scmp.ne.s32.totalorder %s108, %s110
      %p114 = scmp.eq.s32.totalorder %s32, 0
      %p115 = por %p113, %p114
      %p116 = scmp.ne.s32.totalorder %s108, %s110
      %p117 = scmp.eq.s32.totalorder %s37, 1
      %p118 = por %p116, %p117
      %p119 = scmp.ne.s32.totalorder %s110, %s111
      %p120 = scmp.eq.s32.totalorder %s37, 0
      %p121 = por %p119, %p120
      %p122 = scmp.ne.s32.totalorder %s110, %s111
      %p123 = scmp.eq.s32.totalorder %s38, 1
      %p124 = por %p122, %p123
      %p126 = scmp.ne.s32.totalorder %s111, %s125
      %p127 = scmp.eq.s32.totalorder %s38, 0
      %p128 = por %p126, %p127
      %s130 = sadd.s32 %s129, 1
      %p133 = scmp.eq.s32.totalorder %s32, 1
      %p134 = scmp.ne.s32.totalorder %s129, %s131
      %p135 = scmp.eq.s32.totalorder %s32, 0
      %p136 = por %p134, %p135
      %p137 = scmp.ne.s32.totalorder %s129, %s131
      %p138 = scmp.eq.s32.totalorder %s37, 1
      %p139 = por %p137, %p138
      %p140 = scmp.ne.s32.totalorder %s131, %s132
      %p141 = scmp.eq.s32.totalorder %s37, 0
      %p142 = por %p140, %p141
      %p143 = scmp.ne.s32.totalorder %s131, %s132
      %p144 = scmp.eq.s32.totalorder %s38, 1
      %p145 = por %p143, %p144
      %p147 = scmp.ne.s32.totalorder %s132, %s146
      %p148 = scmp.eq.s32.totalorder %s38, 0
      %p149 = por %p147, %p148
      %s151 = sadd.s32 %s150, 1
      %p154 = scmp.eq.s32.totalorder %s32, 1
      %p155 = scmp.ne.s32.totalorder %s150, %s152
      %p156 = scmp.eq.s32.totalorder %s32, 0
      %p157 = por %p155, %p156
      %p158 = scmp.ne.s32.totalorder %s150, %s152
      %p159 = scmp.eq.s32.totalorder %s37, 1
      %p160 = por %p158, %p159
      %p161 = scmp.ne.s32.totalorder %s152, %s153
      %p162 = scmp.eq.s32.totalorder %s37, 0
      %p163 = por %p161, %p162
      %p164 = scmp.ne.s32.totalorder %s152, %s153
      %p165 = scmp.eq.s32.totalorder %s38, 1
      %p166 = por %p164, %p165
      %p168 = scmp.ne.s32.totalorder %s153, %s167
      %p169 = scmp.eq.s32.totalorder %s38, 0
      %p170 = por %p168, %p169
      %s172 = sadd.s32 %s171, 1
      %p175 = scmp.eq.s32.totalorder %s32, 1
      %p176 = scmp.ne.s32.totalorder %s171, %s173
      %p177 = scmp.eq.s32.totalorder %s32, 0
      %p178 = por %p176, %p177
      %p179 = scmp.ne.s32.totalorder %s171, %s173
      %p180 = scmp.eq.s32.totalorder %s37, 1
      %p181 = por %p179, %p180
      %p182 = scmp.ne.s32.totalorder %s173, %s174
      %p183 = scmp.eq.s32.totalorder %s37, 0
      %p184 = por %p182, %p183
      %p185 = scmp.ne.s32.totalorder %s173, %s174
      %p186 = scmp.eq.s32.totalorder %s38, 1
      %p187 = por %p185, %p186
      %p189 = scmp.ne.s32.totalorder %s174, %s188
      %p190 = scmp.eq.s32.totalorder %s38, 0
      %p191 = por %p189, %p190
      %s193 = sadd.s32 %s192, 1
      %p196 = scmp.eq.s32.totalorder %s32, 1
      %p197 = scmp.ne.s32.totalorder %s192, %s194
      %p198 = scmp.eq.s32.totalorder %s32, 0
      %p199 = por %p197, %p198
      %p200 = scmp.ne.s32.totalorder %s192, %s194
      %p201 = scmp.eq.s32.totalorder %s37, 1
      %p202 = por %p200, %p201
      %p203 = scmp.ne.s32.totalorder %s194, %s195
      %p204 = scmp.eq.s32.totalorder %s37, 0
      %p205 = por %p203, %p204
      %p206 = scmp.ne.s32.totalorder %s194, %s195
      %p207 = scmp.eq.s32.totalorder %s38, 1
      %p208 = por %p206, %p207
      %p210 = scmp.ne.s32.totalorder %s195, %s209
      %p211 = scmp.eq.s32.totalorder %s38, 0
      %p212 = por %p210, %p211
      %s214 = sadd.s32 %s213, 1
      %p217 = scmp.eq.s32.totalorder %s32, 1
      %p218 = scmp.ne.s32.totalorder %s213, %s215
      %p219 = scmp.eq.s32.totalorder %s32, 0
      %p220 = por %p218, %p219
      %p221 = scmp.ne.s32.totalorder %s213, %s215
      %p222 = scmp.eq.s32.totalorder %s37, 1
      %p223 = por %p221, %p222
      %p224 = scmp.ne.s32.totalorder %s215, %s216
      %p225 = scmp.eq.s32.totalorder %s37, 0
      %p226 = por %p224, %p225
      %p227 = scmp.ne.s32.totalorder %s215, %s216
      %p228 = scmp.eq.s32.totalorder %s38, 1
      %p229 = por %p227, %p228
      %p231 = scmp.ne.s32.totalorder %s216, %s230
      %p232 = scmp.eq.s32.totalorder %s38, 0
      %p233 = por %p231, %p232
      %s235 = sadd.s32 %s234, 1
      %p238 = scmp.eq.s32.totalorder %s32, 1
      %p239 = scmp.ne.s32.totalorder %s234, %s236
      %p240 = scmp.eq.s32.totalorder %s32, 0
      %p241 = por %p239, %p240
      %p242 = scmp.ne.s32.totalorder %s234, %s236
      %p243 = scmp.eq.s32.totalorder %s37, 1
      %p244 = por %p242, %p243
      %p245 = scmp.ne.s32.totalorder %s236, %s237
      %p246 = scmp.eq.s32.totalorder %s37, 0
      %p247 = por %p245, %p246
      %p248 = scmp.ne.s32.totalorder %s236, %s237
      %p249 = scmp.eq.s32.totalorder %s38, 1
      %p250 = por %p248, %p249
      %p252 = scmp.ne.s32.totalorder %s237, %s251
      %p253 = scmp.eq.s32.totalorder %s38, 0
      %p254 = por %p252, %p253
      %s256 = sadd.s32 %s255, 1
      %p259 = scmp.eq.s32.totalorder %s32, 1
      %p260 = scmp.ne.s32.totalorder %s255, %s257
      %p261 = scmp.eq.s32.totalorder %s32, 0
      %p262 = por %p260, %p261
      %p263 = scmp.ne.s32.totalorder %s255, %s257
      %p264 = scmp.eq.s32.totalorder %s37, 1
      %p265 = por %p263, %p264
      %p266 = scmp.ne.s32.totalorder %s257, %s258
      %p267 = scmp.eq.s32.totalorder %s37, 0
      %p268 = por %p266, %p267
      %p269 = scmp.ne.s32.totalorder %s257, %s258
      %p270 = scmp.eq.s32.totalorder %s38, 1
      %p271 = por %p269, %p270
      %p273 = scmp.ne.s32.totalorder %s258, %s272
      %p274 = scmp.eq.s32.totalorder %s38, 0
      %p275 = por %p273, %p274
      %s277 = sadd.s32 %s276, 1
      %p280 = scmp.eq.s32.totalorder %s32, 1
      %p281 = scmp.ne.s32.totalorder %s276, %s278
      %p282 = scmp.eq.s32.totalorder %s32, 0
      %p283 = por %p281, %p282
      %p284 = scmp.ne.s32.totalorder %s276, %s278
      %p285 = scmp.eq.s32.totalorder %s37, 1
      %p286 = por %p284, %p285
      %p287 = scmp.ne.s32.totalorder %s278, %s279
      %p288 = scmp.eq.s32.totalorder %s37, 0
      %p289 = por %p287, %p288
      %p290 = scmp.ne.s32.totalorder %s278, %s279
      %p291 = scmp.eq.s32.totalorder %s38, 1
      %p292 = por %p290, %p291
      %p294 = scmp.ne.s32.totalorder %s279, %s293
      %p295 = scmp.eq.s32.totalorder %s38, 0
      %p296 = por %p294, %p295
      %s298 = sadd.s32 %s297, 1
      %p301 = scmp.eq.s32.totalorder %s32, 1
      %p302 = scmp.ne.s32.totalorder %s297, %s299
      %p303 = scmp.eq.s32.totalorder %s32, 0
      %p304 = por %p302, %p303
      %p305 = scmp.ne.s32.totalorder %s297, %s299
      %p306 = scmp.eq.s32.totalorder %s37, 1
      %p307 = por %p305, %p306
      %p308 = scmp.ne.s32.totalorder %s299, %s300
      %p309 = scmp.eq.s32.totalorder %s37, 0
      %p310 = por %p308, %p309
      %p311 = scmp.ne.s32.totalorder %s299, %s300
      %p312 = scmp.eq.s32.totalorder %s38, 1
      %p313 = por %p311, %p312
      %p315 = scmp.ne.s32.totalorder %s300, %s314
      %p316 = scmp.eq.s32.totalorder %s38, 0
      %p317 = por %p315, %p316
      %s319 = sadd.s32 %s318, 1
      %p322 = scmp.eq.s32.totalorder %s32, 1
      %p323 = scmp.ne.s32.totalorder %s318, %s320
      %p324 = scmp.eq.s32.totalorder %s32, 0
      %p325 = por %p323, %p324
      %p326 = scmp.ne.s32.totalorder %s318, %s320
      %p327 = scmp.eq.s32.totalorder %s37, 1
      %p328 = por %p326, %p327
      %p329 = scmp.ne.s32.totalorder %s320, %s321
      %p330 = scmp.eq.s32.totalorder %s37, 0
      %p331 = por %p329, %p330
      %p332 = scmp.ne.s32.totalorder %s320, %s321
      %p333 = scmp.eq.s32.totalorder %s38, 1
      %p334 = por %p332, %p333
      %p336 = scmp.ne.s32.totalorder %s321, %s335
      %p337 = scmp.eq.s32.totalorder %s38, 0
      %p338 = por %p336, %p337
      %s340 = sadd.s32 %s339, 1
      %p343 = scmp.eq.s32.totalorder %s32, 1
      %p344 = scmp.ne.s32.totalorder %s339, %s341
      %p345 = scmp.eq.s32.totalorder %s32, 0
      %p346 = por %p344, %p345
      %p347 = scmp.ne.s32.totalorder %s339, %s341
      %p348 = scmp.eq.s32.totalorder %s37, 1
      %p349 = por %p347, %p348
      %p350 = scmp.ne.s32.totalorder %s341, %s342
      %p351 = scmp.eq.s32.totalorder %s37, 0
      %p352 = por %p350, %p351
      %p353 = scmp.ne.s32.totalorder %s341, %s342
      %p354 = scmp.eq.s32.totalorder %s38, 1
      %p355 = por %p353, %p354
      %p357 = scmp.ne.s32.totalorder %s342, %s356
      %p358 = scmp.eq.s32.totalorder %s38, 0
      %p359 = por %p357, %p358
      %s360 = ssub.s32 %s32, %s39
      %p361 = scmp.eq.s32.totalorder %s360, 0
      %s363 = sadd.s32 %s362, 1
      %s364 = scalar_select %p361, %s362, %s363
      %p367 = pneg %p361
      %p368 = scmp.eq.s32.totalorder %s32, 1
      %p369 = por %p367, %p368
      %p370 = scmp.ne.s32.totalorder %s362, %s365
      %p371 = scmp.eq.s32.totalorder %s32, 0
      %p372 = por %p370, %p371
      %p373 = scmp.ne.s32.totalorder %s362, %s365
      %p374 = scmp.eq.s32.totalorder %s37, 1
      %p375 = por %p373, %p374
      %p376 = scmp.ne.s32.totalorder %s365, %s366
      %p377 = scmp.eq.s32.totalorder %s37, 0
      %p378 = por %p376, %p377
      %p379 = scmp.ne.s32.totalorder %s365, %s366
      %p380 = scmp.eq.s32.totalorder %s38, 1
      %p381 = por %p379, %p380
      %p383 = scmp.ne.s32.totalorder %s366, %s382
      %p384 = scmp.eq.s32.totalorder %s38, 0
      %p385 = por %p383, %p384
      %p386 = scmp.le.s32.totalorder 1, %s32
      %p387 = scmp.lt.s32.totalorder %s32, 3
      %p388 = pnand %p386, %p387
      %p389 = pneg %p388
      // Predicated region
      $region9: #{tpu_custom_call.1} parent=5 // pred_check
        _
      $region10: #{tpu_custom_call.1} parent=5 // pred_check_branch
        %391 = sbr.rel (%p388) target = $region12
      $region11: #{tpu_custom_call.1} parent=5 // pred_region
        %s392 = ssub.s32 %s32, 1
        // Predicated region
        $region13: #{tpu_custom_call.1} parent=11 // pred_check
          %p393 = pneg %p79
        $region14: #{tpu_custom_call.1} parent=11 // pred_check_branch
          %395 = sbr.rel (%p393) target = $region16
        $region15: #{tpu_custom_call.1} parent=11 // pred_region
          %397 = vsyncadd [#allocation6], 0
          %s398 = sshll.u32 %s1, 4
          %s399 = int_to_ptr.hbm [resolvable:$true] %s398
          %s400 = sshll.u32 [#allocation5], 4
          %s401 = int_to_ptr.vmem [resolvable:$true] %s400
          %406 = dma.hbm_to_vmem [thread:$0]  %s399, 4096, %s401, [#allocation6], 256, 256, 16
        $region16: #{tpu_custom_call.1} parent=11 // pred_fallthru
          _
        // Predicated region
        $region17: #{tpu_custom_call.1} parent=11 // pred_check
          %p407 = pneg %p100
        $region18: #{tpu_custom_call.1} parent=11 // pred_check_branch
          %409 = sbr.rel (%p407) target = $region20
        $region19: #{tpu_custom_call.1} parent=11 // pred_region
          %411 = vsyncadd [#allocation6], 0
          %s413 = sshll.u32 %s2, 4
          %s414 = int_to_ptr.hbm [resolvable:$true] %s413
          %s415 = sshll.u32 [#allocation7], 4
          %s416 = int_to_ptr.vmem [resolvable:$true] %s415
          %418 = dma.hbm_to_vmem [thread:$0]  %s414, 64, %s416, [#allocation6]
        $region20: #{tpu_custom_call.1} parent=11 // pred_fallthru
          _
        // Predicated region
        $region21: #{tpu_custom_call.1} parent=11 // pred_check
          %p419 = pneg %p121
        $region22: #{tpu_custom_call.1} parent=11 // pred_check_branch
          %421 = sbr.rel (%p419) target = $region24
        $region23: #{tpu_custom_call.1} parent=11 // pred_region
          %423 = vsyncadd [#allocation9], 0
          %s424 = sshll.u32 %s3, 4
          %s425 = int_to_ptr.hbm [resolvable:$true] %s424
          %s426 = sshll.u32 [#allocation8], 4
          %s427 = int_to_ptr.vmem [resolvable:$true] %s426
          %432 = dma.hbm_to_vmem [thread:$0]  %s425, 16384, %s427, [#allocation9], 256, 256, 16
        $region24: #{tpu_custom_call.1} parent=11 // pred_fallthru
          _
        // Predicated region
        $region25: #{tpu_custom_call.1} parent=11 // pred_check
          %p433 = pneg %p142
        $region26: #{tpu_custom_call.1} parent=11 // pred_check_branch
          %435 = sbr.rel (%p433) target = $region28
        $region27: #{tpu_custom_call.1} parent=11 // pred_region
          %437 = vsyncadd [#allocation9], 0
          %s439 = sshll.u32 %s4, 4
          %s440 = int_to_ptr.hbm [resolvable:$true] %s439
          %s441 = sshll.u32 [#allocation10], 4
          %s442 = int_to_ptr.vmem [resolvable:$true] %s441
          %444 = dma.hbm_to_vmem [thread:$0]  %s440, 64, %s442, [#allocation9]
        $region28: #{tpu_custom_call.1} parent=11 // pred_fallthru
          _
        // Predicated region
        $region29: #{tpu_custom_call.1} parent=11 // pred_check
          %p445 = pneg %p163
        $region30: #{tpu_custom_call.1} parent=11 // pred_check_branch
          %447 = sbr.rel (%p445) target = $region32
        $region31: #{tpu_custom_call.1} parent=11 // pred_region
          %449 = vsyncadd [#allocation12], 0
          %s450 = sshll.u32 %s5, 4
          %s451 = int_to_ptr.hbm [resolvable:$true] %s450
          %s452 = sshll.u32 [#allocation11], 4
          %s453 = int_to_ptr.vmem [resolvable:$true] %s452
          %458 = dma.hbm_to_vmem [thread:$0]  %s451, 512, %s453, [#allocation12], 64, 64, 4
        $region32: #{tpu_custom_call.1} parent=11 // pred_fallthru
          _
        // Predicated region
        $region33: #{tpu_custom_call.1} parent=11 // pred_check
          %p459 = pneg %p184
        $region34: #{tpu_custom_call.1} parent=11 // pred_check_branch
          %461 = sbr.rel (%p459) target = $region36
        $region35: #{tpu_custom_call.1} parent=11 // pred_region
          %463 = vsyncadd [#allocation12], 0
          %s464 = sshll.u32 %s6, 4
          %s465 = int_to_ptr.hbm [resolvable:$true] %s464
          %s466 = sshll.u32 [#allocation13], 4
          %s467 = int_to_ptr.vmem [resolvable:$true] %s466
          %472 = dma.hbm_to_vmem [thread:$0]  %s465, 4096, %s467, [#allocation12], 64, 64, 4
        $region36: #{tpu_custom_call.1} parent=11 // pred_fallthru
          _
        // Predicated region
        $region37: #{tpu_custom_call.1} parent=11 // pred_check
          %p473 = pneg %p205
        $region38: #{tpu_custom_call.1} parent=11 // pred_check_branch
          %475 = sbr.rel (%p473) target = $region40
        $region39: #{tpu_custom_call.1} parent=11 // pred_region
          _
        $region40: #{tpu_custom_call.1} parent=11 // pred_fallthru
          _
        // Predicated region
        $region41: #{tpu_custom_call.1} parent=11 // pred_check
          %p476 = pneg %p226
        $region42: #{tpu_custom_call.1} parent=11 // pred_check_branch
          %478 = sbr.rel (%p476) target = $region44
        $region43: #{tpu_custom_call.1} parent=11 // pred_region
          %480 = vsyncadd [#allocation15], 0
          %s481 = sshll.u32 %s8, 4
          %s482 = int_to_ptr.hbm [resolvable:$true] %s481
          %s483 = sshll.u32 [#allocation14], 4
          %s484 = int_to_ptr.vmem [resolvable:$true] %s483
          %489 = dma.hbm_to_vmem [thread:$0]  %s482, 512, %s484, [#allocation15], 64, 64, 4
        $region44: #{tpu_custom_call.1} parent=11 // pred_fallthru
          _
        // Predicated region
        $region45: #{tpu_custom_call.1} parent=11 // pred_check
          %p490 = pneg %p247
        $region46: #{tpu_custom_call.1} parent=11 // pred_check_branch
          %492 = sbr.rel (%p490) target = $region48
        $region47: #{tpu_custom_call.1} parent=11 // pred_region
          %494 = vsyncadd [#allocation15], 0
          %s495 = sshll.u32 %s9, 4
          %s496 = int_to_ptr.hbm [resolvable:$true] %s495
          %s497 = sshll.u32 [#allocation16], 4
          %s498 = int_to_ptr.vmem [resolvable:$true] %s497
          %503 = dma.hbm_to_vmem [thread:$0]  %s496, 4096, %s498, [#allocation15], 64, 64, 4
        $region48: #{tpu_custom_call.1} parent=11 // pred_fallthru
          _
        // Predicated region
        $region49: #{tpu_custom_call.1} parent=11 // pred_check
          %p504 = pneg %p268
        $region50: #{tpu_custom_call.1} parent=11 // pred_check_branch
          %506 = sbr.rel (%p504) target = $region52
        $region51: #{tpu_custom_call.1} parent=11 // pred_region
          _
        $region52: #{tpu_custom_call.1} parent=11 // pred_fallthru
          _
        // Predicated region
        $region53: #{tpu_custom_call.1} parent=11 // pred_check
          %p507 = pneg %p289
        $region54: #{tpu_custom_call.1} parent=11 // pred_check_branch
          %509 = sbr.rel (%p507) target = $region56
        $region55: #{tpu_custom_call.1} parent=11 // pred_region
          _
        $region56: #{tpu_custom_call.1} parent=11 // pred_fallthru
          _
        // Predicated region
        $region57: #{tpu_custom_call.1} parent=11 // pred_check
          %p510 = pneg %p310
        $region58: #{tpu_custom_call.1} parent=11 // pred_check_branch
          %512 = sbr.rel (%p510) target = $region60
        $region59: #{tpu_custom_call.1} parent=11 // pred_region
          _
        $region60: #{tpu_custom_call.1} parent=11 // pred_fallthru
          _
        // Predicated region
        $region61: #{tpu_custom_call.1} parent=11 // pred_check
          %p513 = pneg %p331
        $region62: #{tpu_custom_call.1} parent=11 // pred_check_branch
          %515 = sbr.rel (%p513) target = $region64
        $region63: #{tpu_custom_call.1} parent=11 // pred_region
          %517 = vsyncadd [#allocation18], 0
          %s518 = sshll.u32 %s13, 4
          %s519 = int_to_ptr.hbm [resolvable:$true] %s518
          %s520 = sshll.u32 [#allocation17], 4
          %s521 = int_to_ptr.vmem [resolvable:$true] %s520
          %526 = dma.hbm_to_vmem [thread:$0]  %s519, 4096, %s521, [#allocation18], 256, 256, 16
        $region64: #{tpu_custom_call.1} parent=11 // pred_fallthru
          _
        // Predicated region
        $region65: #{tpu_custom_call.1} parent=11 // pred_check
          %p527 = pneg %p352
        $region66: #{tpu_custom_call.1} parent=11 // pred_check_branch
          %529 = sbr.rel (%p527) target = $region68
        $region67: #{tpu_custom_call.1} parent=11 // pred_region
          _
        $region68: #{tpu_custom_call.1} parent=11 // pred_fallthru
          _
      $region12: #{tpu_custom_call.1} parent=5 // pred_fallthru
        _
      %p530 = scmp.lt.s32.totalorder %s32, 2
      // Predicated region
      $region69: #{tpu_custom_call.1} parent=5 // pred_check
        %p531 = pneg %p530
      $region70: #{tpu_custom_call.1} parent=5 // pred_check_branch
        %533 = sbr.rel (%p531) target = $region72
      $region71: #{tpu_custom_call.1} parent=5 // pred_region
        // Predicated region
        $region73: #{tpu_custom_call.1} parent=71 // pred_check
          %p534 = pneg %p52
        $region74: #{tpu_custom_call.1} parent=71 // pred_check_branch
          %536 = sbr.rel (%p534) target = $region76
        $region75: #{tpu_custom_call.1} parent=71 // pred_region
          %s537 = sand.u32 %s42, 1
          %s538 = scalar_lea.sflag [#allocation3], %s537
          %s539 = sand.u32 %s42, 1
          %s540 = smul.addr %s539, 8
          %s541 = scalar_lea.vmem [#allocation2], %s540
          %543 = vsyncadd %s538, 0
          %s544 = smul.addr %s32, 2
          %s545 = smul.addr %s544, 4
          %s546 = scalar_lea.hbm %s0, %s545
          %s547 = sshll.u32 %s546, 4
          %s548 = int_to_ptr.hbm [resolvable:$true] %s547
          %s549 = sshll.u32 %s541, 4
          %s550 = int_to_ptr.vmem [resolvable:$true] %s549
          %555 = dma.hbm_to_vmem [thread:$0]  %s548, 128, %s550, %s538, 64, 64, 4
        $region76: #{tpu_custom_call.1} parent=71 // pred_fallthru
          _
      $region72: #{tpu_custom_call.1} parent=5 // pred_fallthru
        _
      %p556 = scmp.le.s32.totalorder 1, %s32
      %p557 = scmp.lt.s32.totalorder %s32, 3
      %p558 = pnand %p556, %p557
      %p559 = pneg %p558
      // Predicated region
      $region77: #{tpu_custom_call.1} parent=5 // pred_check
        _
      $region78: #{tpu_custom_call.1} parent=5 // pred_check_branch
        %561 = sbr.rel (%p558) target = $region80
      $region79: #{tpu_custom_call.1} parent=5 // pred_region
        %s562 = ssub.s32 %s32, 1
        %s563 = sand.u32 %s45, 1
        %s564 = scalar_lea.sflag [#allocation3], %s563
        %s565 = sand.u32 %s45, 1
        %s566 = smul.addr %s565, 8
        %s567 = scalar_lea.vmem [#allocation2], %s566
        // Predicated region
        $region81: #{tpu_custom_call.1} parent=79 // pred_check
          %p568 = pneg %p58
        $region82: #{tpu_custom_call.1} parent=79 // pred_check_branch
          %570 = sbr.rel (%p568) target = $region84
        $region83: #{tpu_custom_call.1} parent=79 // pred_region
          %572 = dma.done %s564, 128
        $region84: #{tpu_custom_call.1} parent=79 // pred_fallthru
          _
        // Predicated region
        $region85: #{tpu_custom_call.1} parent=79 // pred_check
          %p573 = pneg %p79
        $region86: #{tpu_custom_call.1} parent=79 // pred_check_branch
          %575 = sbr.rel (%p573) target = $region88
        $region87: #{tpu_custom_call.1} parent=79 // pred_region
          %577 = dma.done [#allocation6], 4096
        $region88: #{tpu_custom_call.1} parent=79 // pred_fallthru
          _
        // Predicated region
        $region89: #{tpu_custom_call.1} parent=79 // pred_check
          %p578 = pneg %p100
        $region90: #{tpu_custom_call.1} parent=79 // pred_check_branch
          %580 = sbr.rel (%p578) target = $region92
        $region91: #{tpu_custom_call.1} parent=79 // pred_region
          %582 = dma.done [#allocation6], 64
        $region92: #{tpu_custom_call.1} parent=79 // pred_fallthru
          _
        // Predicated region
        $region93: #{tpu_custom_call.1} parent=79 // pred_check
          %p583 = pneg %p121
        $region94: #{tpu_custom_call.1} parent=79 // pred_check_branch
          %585 = sbr.rel (%p583) target = $region96
        $region95: #{tpu_custom_call.1} parent=79 // pred_region
          %587 = dma.done [#allocation9], 16384
        $region96: #{tpu_custom_call.1} parent=79 // pred_fallthru
          _
        // Predicated region
        $region97: #{tpu_custom_call.1} parent=79 // pred_check
          %p588 = pneg %p142
        $region98: #{tpu_custom_call.1} parent=79 // pred_check_branch
          %590 = sbr.rel (%p588) target = $region100
        $region99: #{tpu_custom_call.1} parent=79 // pred_region
          %592 = dma.done [#allocation9], 64
        $region100: #{tpu_custom_call.1} parent=79 // pred_fallthru
          _
        // Predicated region
        $region101: #{tpu_custom_call.1} parent=79 // pred_check
          %p593 = pneg %p163
        $region102: #{tpu_custom_call.1} parent=79 // pred_check_branch
          %595 = sbr.rel (%p593) target = $region104
        $region103: #{tpu_custom_call.1} parent=79 // pred_region
          %597 = dma.done [#allocation12], 512
        $region104: #{tpu_custom_call.1} parent=79 // pred_fallthru
          _
        // Predicated region
        $region105: #{tpu_custom_call.1} parent=79 // pred_check
          %p598 = pneg %p184
        $region106: #{tpu_custom_call.1} parent=79 // pred_check_branch
          %600 = sbr.rel (%p598) target = $region108
        $region107: #{tpu_custom_call.1} parent=79 // pred_region
          %602 = dma.done [#allocation12], 4096
        $region108: #{tpu_custom_call.1} parent=79 // pred_fallthru
          _
        // Predicated region
        $region109: #{tpu_custom_call.1} parent=79 // pred_check
          %p603 = pneg %p226
        $region110: #{tpu_custom_call.1} parent=79 // pred_check_branch
          %605 = sbr.rel (%p603) target = $region112
        $region111: #{tpu_custom_call.1} parent=79 // pred_region
          %607 = dma.done [#allocation15], 512
        $region112: #{tpu_custom_call.1} parent=79 // pred_fallthru
          _
        // Predicated region
        $region113: #{tpu_custom_call.1} parent=79 // pred_check
          %p608 = pneg %p247
        $region114: #{tpu_custom_call.1} parent=79 // pred_check_branch
          %610 = sbr.rel (%p608) target = $region116
        $region115: #{tpu_custom_call.1} parent=79 // pred_region
          %612 = dma.done [#allocation15], 4096
        $region116: #{tpu_custom_call.1} parent=79 // pred_fallthru
          _
        // Predicated region
        $region117: #{tpu_custom_call.1} parent=79 // pred_check
          %p613 = pneg %p331
        $region118: #{tpu_custom_call.1} parent=79 // pred_check_branch
          %615 = sbr.rel (%p613) target = $region120
        $region119: #{tpu_custom_call.1} parent=79 // pred_region
          %617 = dma.done [#allocation18], 4096
        $region120: #{tpu_custom_call.1} parent=79 // pred_fallthru
          _
        %s618 = sand.u32 %s45, 1
        %s619 = scalar_lea.sflag [#allocation3], %s618
        %s620 = sand.u32 %s45, 1
        %s621 = smul.addr %s620, 8
        %s622 = scalar_lea.vmem [#allocation2], %s621
        %p623 = pneg %p58
        %p624 = pneg %p55
        %p625 = pneg %p79
        %p626 = pneg %p76
        %p627 = pneg %p100
        %p628 = pneg %p97
        %p629 = pneg %p121
        %p630 = pneg %p118
        %p631 = pneg %p142
        %p632 = pneg %p139
        %p633 = pneg %p163
        %p634 = pneg %p160
        %p635 = pneg %p184
        %p636 = pneg %p181
        %p637 = pneg %p205
        %p638 = pneg %p202
        %p639 = pneg %p226
        %p640 = pneg %p223
        %p641 = pneg %p247
        %p642 = pneg %p244
        %p643 = pneg %p268
        %p644 = pneg %p265
        %p645 = pneg %p289
        %p646 = pneg %p286
        %p647 = pneg %p310
        %p648 = pneg %p307
        %p649 = pneg %p331
        %p650 = pneg %p328
        %p651 = pneg %p352
        %p652 = pneg %p349
        %p653 = pneg %p378
        %p654 = pneg %p375
        %s655 = sand.u32 %s365, 1
        %s656 = scalar_lea.sflag [#allocation4], %s655
        %s657 = sand.u32 %s365, 1
        %s658 = smul.addr %s657, 64
        %s659 = scalar_lea.vmem [#allocation19], %s658
        %v661 = vld [vmem:[%s567] sm:$0xf]
        %v662 = vld [vmem:[%s567 + $0x4] sm:$0xf]
        %v663 = vld [vmem:[#allocation5] sm:$0xff]
        %v664 = vld [vmem:[#allocation5 + $0x8] sm:$0xff]
        %v665 = vld [vmem:[#allocation5 + $0x10] sm:$0xff]
        %v666 = vld [vmem:[#allocation5 + $0x18] sm:$0xff]
        %v667 = vld [vmem:[#allocation5 + $0x20] sm:$0xff]
        %v668 = vld [vmem:[#allocation5 + $0x28] sm:$0xff]
        %v669 = vld [vmem:[#allocation5 + $0x30] sm:$0xff]
        %v670 = vld [vmem:[#allocation5 + $0x38] sm:$0xff]
        %v671 = vld [vmem:[#allocation5 + $0x40] sm:$0xff]
        %v672 = vld [vmem:[#allocation5 + $0x48] sm:$0xff]
        %v673 = vld [vmem:[#allocation5 + $0x50] sm:$0xff]
        %v674 = vld [vmem:[#allocation5 + $0x58] sm:$0xff]
        %v675 = vld [vmem:[#allocation5 + $0x60] sm:$0xff]
        %v676 = vld [vmem:[#allocation5 + $0x68] sm:$0xff]
        %v677 = vld [vmem:[#allocation5 + $0x70] sm:$0xff]
        %v678 = vld [vmem:[#allocation5 + $0x78] sm:$0xff]
        %v679 = vld [vmem:[#allocation5 + $0x80] sm:$0xff]
        %v680 = vld [vmem:[#allocation5 + $0x88] sm:$0xff]
        %v681 = vld [vmem:[#allocation5 + $0x90] sm:$0xff]
        %v682 = vld [vmem:[#allocation5 + $0x98] sm:$0xff]
        %v683 = vld [vmem:[#allocation5 + $0xa0] sm:$0xff]
        %v684 = vld [vmem:[#allocation5 + $0xa8] sm:$0xff]
        %v685 = vld [vmem:[#allocation5 + $0xb0] sm:$0xff]
        %v686 = vld [vmem:[#allocation5 + $0xb8] sm:$0xff]
        %v687 = vld [vmem:[#allocation5 + $0xc0] sm:$0xff]
        %v688 = vld [vmem:[#allocation5 + $0xc8] sm:$0xff]
        %v689 = vld [vmem:[#allocation5 + $0xd0] sm:$0xff]
        %v690 = vld [vmem:[#allocation5 + $0xd8] sm:$0xff]
        %v691 = vld [vmem:[#allocation5 + $0xe0] sm:$0xff]
        %v692 = vld [vmem:[#allocation5 + $0xe8] sm:$0xff]
        %v693 = vld [vmem:[#allocation5 + $0xf0] sm:$0xff]
        %v694 = vld [vmem:[#allocation5 + $0xf8] sm:$0xff]
        %v695 = vld [vmem:[#allocation7] sm:$0xf]
        %v697 = vperm.slane %v695, 0
        %v698 = vperm.slane %v695, 1
        %v699 = vperm.slane %v695, 2
        %v700 = vperm.slane %v695, 3
        %v707 = vunpack.c.l.b16 %v661
        %v708 = vunpack.c.l.b16 %v662
        %v709 = vpack.c.b16 %v708, %v707
        %v743 = vunpack.c.l.b16 %v663
        %v744 = vunpack.c.h.b16 %v663
        %v745 = vunpack.c.l.b16 %v664
        %v746 = vunpack.c.h.b16 %v664
        %v747 = vunpack.c.l.b16 %v665
        %v748 = vunpack.c.h.b16 %v665
        %v749 = vunpack.c.l.b16 %v666
        %v750 = vunpack.c.h.b16 %v666
        %v751 = vunpack.c.l.b16 %v667
        %v752 = vunpack.c.h.b16 %v667
        %v753 = vunpack.c.l.b16 %v668
        %v754 = vunpack.c.h.b16 %v668
        %v755 = vunpack.c.l.b16 %v669
        %v756 = vunpack.c.h.b16 %v669
        %v757 = vunpack.c.l.b16 %v670
        %v758 = vunpack.c.h.b16 %v670
        %v759 = vunpack.c.l.b16 %v671
        %v760 = vunpack.c.h.b16 %v671
        %v761 = vunpack.c.l.b16 %v672
        %v762 = vunpack.c.h.b16 %v672
        %v763 = vunpack.c.l.b16 %v673
        %v764 = vunpack.c.h.b16 %v673
        %v765 = vunpack.c.l.b16 %v674
        %v766 = vunpack.c.h.b16 %v674
        %v767 = vunpack.c.l.b16 %v675
        %v768 = vunpack.c.h.b16 %v675
        %v769 = vunpack.c.l.b16 %v676
        %v770 = vunpack.c.h.b16 %v676
        %v771 = vunpack.c.l.b16 %v677
        %v772 = vunpack.c.h.b16 %v677
        %v773 = vunpack.c.l.b16 %v678
        %v774 = vunpack.c.h.b16 %v678
        %v775 = vunpack.c.l.b16 %v679
        %v776 = vunpack.c.h.b16 %v679
        %v777 = vunpack.c.l.b16 %v680
        %v778 = vunpack.c.h.b16 %v680
        %v779 = vunpack.c.l.b16 %v681
        %v780 = vunpack.c.h.b16 %v681
        %v781 = vunpack.c.l.b16 %v682
        %v782 = vunpack.c.h.b16 %v682
        %v783 = vunpack.c.l.b16 %v683
        %v784 = vunpack.c.h.b16 %v683
        %v785 = vunpack.c.l.b16 %v684
        %v786 = vunpack.c.h.b16 %v684
        %v787 = vunpack.c.l.b16 %v685
        %v788 = vunpack.c.h.b16 %v685
        %v789 = vunpack.c.l.b16 %v686
        %v790 = vunpack.c.h.b16 %v686
        %v791 = vunpack.c.l.b16 %v687
        %v792 = vunpack.c.h.b16 %v687
        %v793 = vunpack.c.l.b16 %v688
        %v794 = vunpack.c.h.b16 %v688
        %v795 = vunpack.c.l.b16 %v689
        %v796 = vunpack.c.h.b16 %v689
        %v797 = vunpack.c.l.b16 %v690
        %v798 = vunpack.c.h.b16 %v690
        %v799 = vunpack.c.l.b16 %v691
        %v800 = vunpack.c.h.b16 %v691
        %v801 = vunpack.c.l.b16 %v692
        %v802 = vunpack.c.h.b16 %v692
        %v803 = vunpack.c.l.b16 %v693
        %v804 = vunpack.c.h.b16 %v693
        %v805 = vunpack.c.l.b16 %v694
        %v806 = vunpack.c.h.b16 %v694
        %v807 = vpack.c.b16 %v747, %v743
        %v808 = vpack.c.b16 %v748, %v744
        %v809 = vpack.c.b16 %v749, %v745
        %v810 = vpack.c.b16 %v750, %v746
        %v811 = vpack.c.b16 %v755, %v751
        %v812 = vpack.c.b16 %v756, %v752
        %v813 = vpack.c.b16 %v757, %v753
        %v814 = vpack.c.b16 %v758, %v754
        %v815 = vpack.c.b16 %v763, %v759
        %v816 = vpack.c.b16 %v764, %v760
        %v817 = vpack.c.b16 %v765, %v761
        %v818 = vpack.c.b16 %v766, %v762
        %v819 = vpack.c.b16 %v771, %v767
        %v820 = vpack.c.b16 %v772, %v768
        %v821 = vpack.c.b16 %v773, %v769
        %v822 = vpack.c.b16 %v774, %v770
        %v823 = vpack.c.b16 %v779, %v775
        %v824 = vpack.c.b16 %v780, %v776
        %v825 = vpack.c.b16 %v781, %v777
        %v826 = vpack.c.b16 %v782, %v778
        %v827 = vpack.c.b16 %v787, %v783
        %v828 = vpack.c.b16 %v788, %v784
        %v829 = vpack.c.b16 %v789, %v785
        %v830 = vpack.c.b16 %v790, %v786
        %v831 = vpack.c.b16 %v795, %v791
        %v832 = vpack.c.b16 %v796, %v792
        %v833 = vpack.c.b16 %v797, %v793
        %v834 = vpack.c.b16 %v798, %v794
        %v835 = vpack.c.b16 %v803, %v799
        %v836 = vpack.c.b16 %v804, %v800
        %v837 = vpack.c.b16 %v805, %v801
        %v838 = vpack.c.b16 %v806, %v802
        %871 = vmatpush.bf16.msra.mxu0 %v835
        %872 = vmatpush.bf16.msra.mxu0 %v831
        %873 = vmatpush.bf16.msra.mxu0 %v827
        %874 = vmatpush.bf16.msra.mxu0 %v823
        %875 = vmatpush.bf16.msra.mxu0 %v819
        %876 = vmatpush.bf16.msra.mxu0 %v815
        %877 = vmatpush.bf16.msra.mxu0 %v811
        %878 = vmatpush.bf16.msra.mxu0 %v807
        %879 = vmatmul.bf16.gmra.mxu0 %v709
        %v880 = vpop.f32.mrf.mxu0
        %v881 = vadd.f32 %v697, %v880
        %v882 = vpop.f32.mrf.mxu0
        %v883 = vadd.f32 %v697, %v882
        %884 = vdwg.mxu0
        %885 = vmatpush.bf16.msra.mxu0 %v836
        %886 = vmatpush.bf16.msra.mxu0 %v832
        %887 = vmatpush.bf16.msra.mxu0 %v828
        %888 = vmatpush.bf16.msra.mxu0 %v824
        %889 = vmatpush.bf16.msra.mxu0 %v820
        %890 = vmatpush.bf16.msra.mxu0 %v816
        %891 = vmatpush.bf16.msra.mxu0 %v812
        %892 = vmatpush.bf16.msra.mxu0 %v808
        %893 = vmatmul.bf16.gmra.mxu0 %v709
        %v894 = vpop.f32.mrf.mxu0
        %v895 = vadd.f32 %v698, %v894
        %v896 = vpop.f32.mrf.mxu0
        %v897 = vadd.f32 %v698, %v896
        %898 = vdwg.mxu0
        %899 = vmatpush.bf16.msra.mxu0 %v837
        %900 = vmatpush.bf16.msra.mxu0 %v833
        %901 = vmatpush.bf16.msra.mxu0 %v829
        %902 = vmatpush.bf16.msra.mxu0 %v825
        %903 = vmatpush.bf16.msra.mxu0 %v821
        %904 = vmatpush.bf16.msra.mxu0 %v817
        %905 = vmatpush.bf16.msra.mxu0 %v813
        %906 = vmatpush.bf16.msra.mxu0 %v809
        %907 = vmatmul.bf16.gmra.mxu0 %v709
        %v908 = vpop.f32.mrf.mxu0
        %v909 = vadd.f32 %v699, %v908
        %v910 = vpop.f32.mrf.mxu0
        %v911 = vadd.f32 %v699, %v910
        %912 = vdwg.mxu0
        %913 = vmatpush.bf16.msra.mxu0 %v838
        %914 = vmatpush.bf16.msra.mxu0 %v834
        %915 = vmatpush.bf16.msra.mxu0 %v830
        %916 = vmatpush.bf16.msra.mxu0 %v826
        %917 = vmatpush.bf16.msra.mxu0 %v822
        %918 = vmatpush.bf16.msra.mxu0 %v818
        %919 = vmatpush.bf16.msra.mxu0 %v814
        %920 = vmatpush.bf16.msra.mxu0 %v810
        %921 = vmatmul.bf16.gmra.mxu0 %v709
        %v922 = vpop.f32.mrf.mxu0
        %v923 = vadd.f32 %v700, %v922
        %v924 = vpop.f32.mrf.mxu0
        %v925 = vadd.f32 %v700, %v924
        %926 = vdwg.mxu0
        %vm927 = vcmp.ge.f32.partialorder %v881, 0.0
        %vm928 = vcmp.ge.f32.partialorder %v895, 0.0
        %vm929 = vcmp.ge.f32.partialorder %v909, 0.0
        %vm930 = vcmp.ge.f32.partialorder %v923, 0.0
        %vm931 = vcmp.ge.f32.partialorder %v883, 0.0
        %vm932 = vcmp.ge.f32.partialorder %v897, 0.0
        %vm933 = vcmp.ge.f32.partialorder %v911, 0.0
        %vm934 = vcmp.ge.f32.partialorder %v925, 0.0
        %v935 = vmul.f32 %v881, 0.1
        %v936 = vmul.f32 %v895, 0.1
        %v937 = vmul.f32 %v909, 0.1
        %v938 = vmul.f32 %v923, 0.1
        %v939 = vmul.f32 %v883, 0.1
        %v940 = vmul.f32 %v897, 0.1
        %v941 = vmul.f32 %v911, 0.1
        %v942 = vmul.f32 %v925, 0.1
        %v943 = vsel %vm927, %v881, %v935
        %v944 = vsel %vm928, %v895, %v936
        %v945 = vsel %vm929, %v909, %v937
        %v946 = vsel %vm930, %v923, %v938
        %v947 = vsel %vm931, %v883, %v939
        %v948 = vsel %vm932, %v897, %v940
        %v949 = vsel %vm933, %v911, %v941
        %v950 = vsel %vm934, %v925, %v942
        %v951 = vpack.c.bf16 %v947, %v943
        %v952 = vpack.c.bf16 %v948, %v944
        %v953 = vpack.c.bf16 %v949, %v945
        %v954 = vpack.c.bf16 %v950, %v946
        %v955 = vld [vmem:[#allocation8] sm:$0xff]
        %v956 = vld [vmem:[#allocation8 + $0x8] sm:$0xff]
        %v957 = vld [vmem:[#allocation8 + $0x10] sm:$0xff]
        %v958 = vld [vmem:[#allocation8 + $0x18] sm:$0xff]
        %v959 = vld [vmem:[#allocation8 + $0x20] sm:$0xff]
        %v960 = vld [vmem:[#allocation8 + $0x28] sm:$0xff]
        %v961 = vld [vmem:[#allocation8 + $0x30] sm:$0xff]
        %v962 = vld [vmem:[#allocation8 + $0x38] sm:$0xff]
        %v963 = vld [vmem:[#allocation8 + $0x40] sm:$0xff]
        %v964 = vld [vmem:[#allocation8 + $0x48] sm:$0xff]
        %v965 = vld [vmem:[#allocation8 + $0x50] sm:$0xff]
        %v966 = vld [vmem:[#allocation8 + $0x58] sm:$0xff]
        %v967 = vld [vmem:[#allocation8 + $0x60] sm:$0xff]
        %v968 = vld [vmem:[#allocation8 + $0x68] sm:$0xff]
        %v969 = vld [vmem:[#allocation8 + $0x70] sm:$0xff]
        %v970 = vld [vmem:[#allocation8 + $0x78] sm:$0xff]
        %v971 = vld [vmem:[#allocation8 + $0x80] sm:$0xff]
        %v972 = vld [vmem:[#allocation8 + $0x88] sm:$0xff]
        %v973 = vld [vmem:[#allocation8 + $0x90] sm:$0xff]
        %v974 = vld [vmem:[#allocation8 + $0x98] sm:$0xff]
        %v975 = vld [vmem:[#allocation8 + $0xa0] sm:$0xff]
        %v976 = vld [vmem:[#allocation8 + $0xa8] sm:$0xff]
        %v977 = vld [vmem:[#allocation8 + $0xb0] sm:$0xff]
        %v978 = vld [vmem:[#allocation8 + $0xb8] sm:$0xff]
        %v979 = vld [vmem:[#allocation8 + $0xc0] sm:$0xff]
        %v980 = vld [vmem:[#allocation8 + $0xc8] sm:$0xff]
        %v981 = vld [vmem:[#allocation8 + $0xd0] sm:$0xff]
        %v982 = vld [vmem:[#allocation8 + $0xd8] sm:$0xff]
        %v983 = vld [vmem:[#allocation8 + $0xe0] sm:$0xff]
        %v984 = vld [vmem:[#allocation8 + $0xe8] sm:$0xff]
        %v985 = vld [vmem:[#allocation8 + $0xf0] sm:$0xff]
        %v986 = vld [vmem:[#allocation8 + $0xf8] sm:$0xff]
        %v987 = vld [vmem:[#allocation8 + $0x100] sm:$0xff]
        %v988 = vld [vmem:[#allocation8 + $0x108] sm:$0xff]
        %v989 = vld [vmem:[#allocation8 + $0x110] sm:$0xff]
        %v990 = vld [vmem:[#allocation8 + $0x118] sm:$0xff]
        %v991 = vld [vmem:[#allocation8 + $0x120] sm:$0xff]
        %v992 = vld [vmem:[#allocation8 + $0x128] sm:$0xff]
        %v993 = vld [vmem:[#allocation8 + $0x130] sm:$0xff]
        %v994 = vld [vmem:[#allocation8 + $0x138] sm:$0xff]
        %v995 = vld [vmem:[#allocation8 + $0x140] sm:$0xff]
        %v996 = vld [vmem:[#allocation8 + $0x148] sm:$0xff]
        %v997 = vld [vmem:[#allocation8 + $0x150] sm:$0xff]
        %v998 = vld [vmem:[#allocation8 + $0x158] sm:$0xff]
        %v999 = vld [vmem:[#allocation8 + $0x160] sm:$0xff]
        %v1000 = vld [vmem:[#allocation8 + $0x168] sm:$0xff]
        %v1001 = vld [vmem:[#allocation8 + $0x170] sm:$0xff]
        %v1002 = vld [vmem:[#allocation8 + $0x178] sm:$0xff]
        %v1003 = vld [vmem:[#allocation8 + $0x180] sm:$0xff]
        %v1004 = vld [vmem:[#allocation8 + $0x188] sm:$0xff]
        %v1005 = vld [vmem:[#allocation8 + $0x190] sm:$0xff]
        %v1006 = vld [vmem:[#allocation8 + $0x198] sm:$0xff]
        %v1007 = vld [vmem:[#allocation8 + $0x1a0] sm:$0xff]
        %v1008 = vld [vmem:[#allocation8 + $0x1a8] sm:$0xff]
        %v1009 = vld [vmem:[#allocation8 + $0x1b0] sm:$0xff]
        %v1010 = vld [vmem:[#allocation8 + $0x1b8] sm:$0xff]
        %v1011 = vld [vmem:[#allocation8 + $0x1c0] sm:$0xff]
        %v1012 = vld [vmem:[#allocation8 + $0x1c8] sm:$0xff]
        %v1013 = vld [vmem:[#allocation8 + $0x1d0] sm:$0xff]
        %v1014 = vld [vmem:[#allocation8 + $0x1d8] sm:$0xff]
        %v1015 = vld [vmem:[#allocation8 + $0x1e0] sm:$0xff]
        %v1016 = vld [vmem:[#allocation8 + $0x1e8] sm:$0xff]
        %v1017 = vld [vmem:[#allocation8 + $0x1f0] sm:$0xff]
        %v1018 = vld [vmem:[#allocation8 + $0x1f8] sm:$0xff]
        %v1019 = vld [vmem:[#allocation8 + $0x200] sm:$0xff]
        %v1020 = vld [vmem:[#allocation8 + $0x208] sm:$0xff]
        %v1021 = vld [vmem:[#allocation8 + $0x210] sm:$0xff]
        %v1022 = vld [vmem:[#allocation8 + $0x218] sm:$0xff]
        %v1023 = vld [vmem:[#allocation8 + $0x220] sm:$0xff]
        %v1024 = vld [vmem:[#allocation8 + $0x228] sm:$0xff]
        %v1025 = vld [vmem:[#allocation8 + $0x230] sm:$0xff]
        %v1026 = vld [vmem:[#allocation8 + $0x238] sm:$0xff]
        %v1027 = vld [vmem:[#allocation8 + $0x240] sm:$0xff]
        %v1028 = vld [vmem:[#allocation8 + $0x248] sm:$0xff]
        %v1029 = vld [vmem:[#allocation8 + $0x250] sm:$0xff]
        %v1030 = vld [vmem:[#allocation8 + $0x258] sm:$0xff]
        %v1031 = vld [vmem:[#allocation8 + $0x260] sm:$0xff]
        %v1032 = vld [vmem:[#allocation8 + $0x268] sm:$0xff]
        %v1033 = vld [vmem:[#allocation8 + $0x270] sm:$0xff]
        %v1034 = vld [vmem:[#allocation8 + $0x278] sm:$0xff]
        %v1035 = vld [vmem:[#allocation8 + $0x280] sm:$0xff]
        %v1036 = vld [vmem:[#allocation8 + $0x288] sm:$0xff]
        %v1037 = vld [vmem:[#allocation8 + $0x290] sm:$0xff]
        %v1038 = vld [vmem:[#allocation8 + $0x298] sm:$0xff]
        %v1039 = vld [vmem:[#allocation8 + $0x2a0] sm:$0xff]
        %v1040 = vld [vmem:[#allocation8 + $0x2a8] sm:$0xff]
        %v1041 = vld [vmem:[#allocation8 + $0x2b0] sm:$0xff]
        %v1042 = vld [vmem:[#allocation8 + $0x2b8] sm:$0xff]
        %v1043 = vld [vmem:[#allocation8 + $0x2c0] sm:$0xff]
        %v1044 = vld [vmem:[#allocation8 + $0x2c8] sm:$0xff]
        %v1045 = vld [vmem:[#allocation8 + $0x2d0] sm:$0xff]
        %v1046 = vld [vmem:[#allocation8 + $0x2d8] sm:$0xff]
        %v1047 = vld [vmem:[#allocation8 + $0x2e0] sm:$0xff]
        %v1048 = vld [vmem:[#allocation8 + $0x2e8] sm:$0xff]
        %v1049 = vld [vmem:[#allocation8 + $0x2f0] sm:$0xff]
        %v1050 = vld [vmem:[#allocation8 + $0x2f8] sm:$0xff]
        %v1051 = vld [vmem:[#allocation8 + $0x300] sm:$0xff]
        %v1052 = vld [vmem:[#allocation8 + $0x308] sm:$0xff]
        %v1053 = vld [vmem:[#allocation8 + $0x310] sm:$0xff]
        %v1054 = vld [vmem:[#allocation8 + $0x318] sm:$0xff]
        %v1055 = vld [vmem:[#allocation8 + $0x320] sm:$0xff]
        %v1056 = vld [vmem:[#allocation8 + $0x328] sm:$0xff]
        %v1057 = vld [vmem:[#allocation8 + $0x330] sm:$0xff]
        %v1058 = vld [vmem:[#allocation8 + $0x338] sm:$0xff]
        %v1059 = vld [vmem:[#allocation8 + $0x340] sm:$0xff]
        %v1060 = vld [vmem:[#allocation8 + $0x348] sm:$0xff]
        %v1061 = vld [vmem:[#allocation8 + $0x350] sm:$0xff]
        %v1062 = vld [vmem:[#allocation8 + $0x358] sm:$0xff]
        %v1063 = vld [vmem:[#allocation8 + $0x360] sm:$0xff]
        %v1064 = vld [vmem:[#allocation8 + $0x368] sm:$0xff]
        %v1065 = vld [vmem:[#allocation8 + $0x370] sm:$0xff]
        %v1066 = vld [vmem:[#allocation8 + $0x378] sm:$0xff]
        %v1067 = vld [vmem:[#allocation8 + $0x380] sm:$0xff]
        %v1068 = vld [vmem:[#allocation8 + $0x388] sm:$0xff]
        %v1069 = vld [vmem:[#allocation8 + $0x390] sm:$0xff]
        %v1070 = vld [vmem:[#allocation8 + $0x398] sm:$0xff]
        %v1071 = vld [vmem:[#allocation8 + $0x3a0] sm:$0xff]
        %v1072 = vld [vmem:[#allocation8 + $0x3a8] sm:$0xff]
        %v1073 = vld [vmem:[#allocation8 + $0x3b0] sm:$0xff]
        %v1074 = vld [vmem:[#allocation8 + $0x3b8] sm:$0xff]
        %v1075 = vld [vmem:[#allocation8 + $0x3c0] sm:$0xff]
        %v1076 = vld [vmem:[#allocation8 + $0x3c8] sm:$0xff]
        %v1077 = vld [vmem:[#allocation8 + $0x3d0] sm:$0xff]
        %v1078 = vld [vmem:[#allocation8 + $0x3d8] sm:$0xff]
        %v1079 = vld [vmem:[#allocation8 + $0x3e0] sm:$0xff]
        %v1080 = vld [vmem:[#allocation8 + $0x3e8] sm:$0xff]
        %v1081 = vld [vmem:[#allocation8 + $0x3f0] sm:$0xff]
        %v1082 = vld [vmem:[#allocation8 + $0x3f8] sm:$0xff]
        %v1083 = vld [vmem:[#allocation10] sm:$0xf]
        %v1085 = vperm.slane %v1083, 0
        %v1086 = vperm.slane %v1083, 1
        %v1087 = vperm.slane %v1083, 2
        %v1088 = vperm.slane %v1083, 3
        %v1221 = vunpack.c.l.b16 %v955
        %v1222 = vunpack.c.h.b16 %v955
        %v1223 = vunpack.c.l.b16 %v956
        %v1224 = vunpack.c.h.b16 %v956
        %v1225 = vunpack.c.l.b16 %v957
        %v1226 = vunpack.c.h.b16 %v957
        %v1227 = vunpack.c.l.b16 %v958
        %v1228 = vunpack.c.h.b16 %v958
        %v1229 = vunpack.c.l.b16 %v959
        %v1230 = vunpack.c.h.b16 %v959
        %v1231 = vunpack.c.l.b16 %v960
        %v1232 = vunpack.c.h.b16 %v960
        %v1233 = vunpack.c.l.b16 %v961
        %v1234 = vunpack.c.h.b16 %v961
        %v1235 = vunpack.c.l.b16 %v962
        %v1236 = vunpack.c.h.b16 %v962
        %v1237 = vunpack.c.l.b16 %v963
        %v1238 = vunpack.c.h.b16 %v963
        %v1239 = vunpack.c.l.b16 %v964
        %v1240 = vunpack.c.h.b16 %v964
        %v1241 = vunpack.c.l.b16 %v965
        %v1242 = vunpack.c.h.b16 %v965
        %v1243 = vunpack.c.l.b16 %v966
        %v1244 = vunpack.c.h.b16 %v966
        %v1245 = vunpack.c.l.b16 %v967
        %v1246 = vunpack.c.h.b16 %v967
        %v1247 = vunpack.c.l.b16 %v968
        %v1248 = vunpack.c.h.b16 %v968
        %v1249 = vunpack.c.l.b16 %v969
        %v1250 = vunpack.c.h.b16 %v969
        %v1251 = vunpack.c.l.b16 %v970
        %v1252 = vunpack.c.h.b16 %v970
        %v1253 = vunpack.c.l.b16 %v971
        %v1254 = vunpack.c.h.b16 %v971
        %v1255 = vunpack.c.l.b16 %v972
        %v1256 = vunpack.c.h.b16 %v972
        %v1257 = vunpack.c.l.b16 %v973
        %v1258 = vunpack.c.h.b16 %v973
        %v1259 = vunpack.c.l.b16 %v974
        %v1260 = vunpack.c.h.b16 %v974
        %v1261 = vunpack.c.l.b16 %v975
        %v1262 = vunpack.c.h.b16 %v975
        %v1263 = vunpack.c.l.b16 %v976
        %v1264 = vunpack.c.h.b16 %v976
        %v1265 = vunpack.c.l.b16 %v977
        %v1266 = vunpack.c.h.b16 %v977
        %v1267 = vunpack.c.l.b16 %v978
        %v1268 = vunpack.c.h.b16 %v978
        %v1269 = vunpack.c.l.b16 %v979
        %v1270 = vunpack.c.h.b16 %v979
        %v1271 = vunpack.c.l.b16 %v980
        %v1272 = vunpack.c.h.b16 %v980
        %v1273 = vunpack.c.l.b16 %v981
        %v1274 = vunpack.c.h.b16 %v981
        %v1275 = vunpack.c.l.b16 %v982
        %v1276 = vunpack.c.h.b16 %v982
        %v1277 = vunpack.c.l.b16 %v983
        %v1278 = vunpack.c.h.b16 %v983
        %v1279 = vunpack.c.l.b16 %v984
        %v1280 = vunpack.c.h.b16 %v984
        %v1281 = vunpack.c.l.b16 %v985
        %v1282 = vunpack.c.h.b16 %v985
        %v1283 = vunpack.c.l.b16 %v986
        %v1284 = vunpack.c.h.b16 %v986
        %v1285 = vunpack.c.l.b16 %v987
        %v1286 = vunpack.c.h.b16 %v987
        %v1287 = vunpack.c.l.b16 %v988
        %v1288 = vunpack.c.h.b16 %v988
        %v1289 = vunpack.c.l.b16 %v989
        %v1290 = vunpack.c.h.b16 %v989
        %v1291 = vunpack.c.l.b16 %v990
        %v1292 = vunpack.c.h.b16 %v990
        %v1293 = vunpack.c.l.b16 %v991
        %v1294 = vunpack.c.h.b16 %v991
        %v1295 = vunpack.c.l.b16 %v992
        %v1296 = vunpack.c.h.b16 %v992
        %v1297 = vunpack.c.l.b16 %v993
        %v1298 = vunpack.c.h.b16 %v993
        %v1299 = vunpack.c.l.b16 %v994
        %v1300 = vunpack.c.h.b16 %v994
        %v1301 = vunpack.c.l.b16 %v995
        %v1302 = vunpack.c.h.b16 %v995
        %v1303 = vunpack.c.l.b16 %v996
        %v1304 = vunpack.c.h.b16 %v996
        %v1305 = vunpack.c.l.b16 %v997
        %v1306 = vunpack.c.h.b16 %v997
        %v1307 = vunpack.c.l.b16 %v998
        %v1308 = vunpack.c.h.b16 %v998
        %v1309 = vunpack.c.l.b16 %v999
        %v1310 = vunpack.c.h.b16 %v999
        %v1311 = vunpack.c.l.b16 %v1000
        %v1312 = vunpack.c.h.b16 %v1000
        %v1313 = vunpack.c.l.b16 %v1001
        %v1314 = vunpack.c.h.b16 %v1001
        %v1315 = vunpack.c.l.b16 %v1002
        %v1316 = vunpack.c.h.b16 %v1002
        %v1317 = vunpack.c.l.b16 %v1003
        %v1318 = vunpack.c.h.b16 %v1003
        %v1319 = vunpack.c.l.b16 %v1004
        %v1320 = vunpack.c.h.b16 %v1004
        %v1321 = vunpack.c.l.b16 %v1005
        %v1322 = vunpack.c.h.b16 %v1005
        %v1323 = vunpack.c.l.b16 %v1006
        %v1324 = vunpack.c.h.b16 %v1006
        %v1325 = vunpack.c.l.b16 %v1007
        %v1326 = vunpack.c.h.b16 %v1007
        %v1327 = vunpack.c.l.b16 %v1008
        %v1328 = vunpack.c.h.b16 %v1008
        %v1329 = vunpack.c.l.b16 %v1009
        %v1330 = vunpack.c.h.b16 %v1009
        %v1331 = vunpack.c.l.b16 %v1010
        %v1332 = vunpack.c.h.b16 %v1010
        %v1333 = vunpack.c.l.b16 %v1011
        %v1334 = vunpack.c.h.b16 %v1011
        %v1335 = vunpack.c.l.b16 %v1012
        %v1336 = vunpack.c.h.b16 %v1012
        %v1337 = vunpack.c.l.b16 %v1013
        %v1338 = vunpack.c.h.b16 %v1013
        %v1339 = vunpack.c.l.b16 %v1014
        %v1340 = vunpack.c.h.b16 %v1014
        %v1341 = vunpack.c.l.b16 %v1015
        %v1342 = vunpack.c.h.b16 %v1015
        %v1343 = vunpack.c.l.b16 %v1016
        %v1344 = vunpack.c.h.b16 %v1016
        %v1345 = vunpack.c.l.b16 %v1017
        %v1346 = vunpack.c.h.b16 %v1017
        %v1347 = vunpack.c.l.b16 %v1018
        %v1348 = vunpack.c.h.b16 %v1018
        %v1349 = vunpack.c.l.b16 %v1019
        %v1350 = vunpack.c.h.b16 %v1019
        %v1351 = vunpack.c.l.b16 %v1020
        %v1352 = vunpack.c.h.b16 %v1020
        %v1353 = vunpack.c.l.b16 %v1021
        %v1354 = vunpack.c.h.b16 %v1021
        %v1355 = vunpack.c.l.b16 %v1022
        %v1356 = vunpack.c.h.b16 %v1022
        %v1357 = vunpack.c.l.b16 %v1023
        %v1358 = vunpack.c.h.b16 %v1023
        %v1359 = vunpack.c.l.b16 %v1024
        %v1360 = vunpack.c.h.b16 %v1024
        %v1361 = vunpack.c.l.b16 %v1025
        %v1362 = vunpack.c.h.b16 %v1025
        %v1363 = vunpack.c.l.b16 %v1026
        %v1364 = vunpack.c.h.b16 %v1026
        %v1365 = vunpack.c.l.b16 %v1027
        %v1366 = vunpack.c.h.b16 %v1027
        %v1367 = vunpack.c.l.b16 %v1028
        %v1368 = vunpack.c.h.b16 %v1028
        %v1369 = vunpack.c.l.b16 %v1029
        %v1370 = vunpack.c.h.b16 %v1029
        %v1371 = vunpack.c.l.b16 %v1030
        %v1372 = vunpack.c.h.b16 %v1030
        %v1373 = vunpack.c.l.b16 %v1031
        %v1374 = vunpack.c.h.b16 %v1031
        %v1375 = vunpack.c.l.b16 %v1032
        %v1376 = vunpack.c.h.b16 %v1032
        %v1377 = vunpack.c.l.b16 %v1033
        %v1378 = vunpack.c.h.b16 %v1033
        %v1379 = vunpack.c.l.b16 %v1034
        %v1380 = vunpack.c.h.b16 %v1034
        %v1381 = vunpack.c.l.b16 %v1035
        %v1382 = vunpack.c.h.b16 %v1035
        %v1383 = vunpack.c.l.b16 %v1036
        %v1384 = vunpack.c.h.b16 %v1036
        %v1385 = vunpack.c.l.b16 %v1037
        %v1386 = vunpack.c.h.b16 %v1037
        %v1387 = vunpack.c.l.b16 %v1038
        %v1388 = vunpack.c.h.b16 %v1038
        %v1389 = vunpack.c.l.b16 %v1039
        %v1390 = vunpack.c.h.b16 %v1039
        %v1391 = vunpack.c.l.b16 %v1040
        %v1392 = vunpack.c.h.b16 %v1040
        %v1393 = vunpack.c.l.b16 %v1041
        %v1394 = vunpack.c.h.b16 %v1041
        %v1395 = vunpack.c.l.b16 %v1042
        %v1396 = vunpack.c.h.b16 %v1042
        %v1397 = vunpack.c.l.b16 %v1043
        %v1398 = vunpack.c.h.b16 %v1043
        %v1399 = vunpack.c.l.b16 %v1044
        %v1400 = vunpack.c.h.b16 %v1044
        %v1401 = vunpack.c.l.b16 %v1045
        %v1402 = vunpack.c.h.b16 %v1045
        %v1403 = vunpack.c.l.b16 %v1046
        %v1404 = vunpack.c.h.b16 %v1046
        %v1405 = vunpack.c.l.b16 %v1047
        %v1406 = vunpack.c.h.b16 %v1047
        %v1407 = vunpack.c.l.b16 %v1048
        %v1408 = vunpack.c.h.b16 %v1048
        %v1409 = vunpack.c.l.b16 %v1049
        %v1410 = vunpack.c.h.b16 %v1049
        %v1411 = vunpack.c.l.b16 %v1050
        %v1412 = vunpack.c.h.b16 %v1050
        %v1413 = vunpack.c.l.b16 %v1051
        %v1414 = vunpack.c.h.b16 %v1051
        %v1415 = vunpack.c.l.b16 %v1052
        %v1416 = vunpack.c.h.b16 %v1052
        %v1417 = vunpack.c.l.b16 %v1053
        %v1418 = vunpack.c.h.b16 %v1053
        %v1419 = vunpack.c.l.b16 %v1054
        %v1420 = vunpack.c.h.b16 %v1054
        %v1421 = vunpack.c.l.b16 %v1055
        %v1422 = vunpack.c.h.b16 %v1055
        %v1423 = vunpack.c.l.b16 %v1056
        %v1424 = vunpack.c.h.b16 %v1056
        %v1425 = vunpack.c.l.b16 %v1057
        %v1426 = vunpack.c.h.b16 %v1057
        %v1427 = vunpack.c.l.b16 %v1058
        %v1428 = vunpack.c.h.b16 %v1058
        %v1429 = vunpack.c.l.b16 %v1059
        %v1430 = vunpack.c.h.b16 %v1059
        %v1431 = vunpack.c.l.b16 %v1060
        %v1432 = vunpack.c.h.b16 %v1060
        %v1433 = vunpack.c.l.b16 %v1061
        %v1434 = vunpack.c.h.b16 %v1061
        %v1435 = vunpack.c.l.b16 %v1062
        %v1436 = vunpack.c.h.b16 %v1062
        %v1437 = vunpack.c.l.b16 %v1063
        %v1438 = vunpack.c.h.b16 %v1063
        %v1439 = vunpack.c.l.b16 %v1064
        %v1440 = vunpack.c.h.b16 %v1064
        %v1441 = vunpack.c.l.b16 %v1065
        %v1442 = vunpack.c.h.b16 %v1065
        %v1443 = vunpack.c.l.b16 %v1066
        %v1444 = vunpack.c.h.b16 %v1066
        %v1445 = vunpack.c.l.b16 %v1067
        %v1446 = vunpack.c.h.b16 %v1067
        %v1447 = vunpack.c.l.b16 %v1068
        %v1448 = vunpack.c.h.b16 %v1068
        %v1449 = vunpack.c.l.b16 %v1069
        %v1450 = vunpack.c.h.b16 %v1069
        %v1451 = vunpack.c.l.b16 %v1070
        %v1452 = vunpack.c.h.b16 %v1070
        %v1453 = vunpack.c.l.b16 %v1071
        %v1454 = vunpack.c.h.b16 %v1071
        %v1455 = vunpack.c.l.b16 %v1072
        %v1456 = vunpack.c.h.b16 %v1072
        %v1457 = vunpack.c.l.b16 %v1073
        %v1458 = vunpack.c.h.b16 %v1073
        %v1459 = vunpack.c.l.b16 %v1074
        %v1460 = vunpack.c.h.b16 %v1074
        %v1461 = vunpack.c.l.b16 %v1075
        %v1462 = vunpack.c.h.b16 %v1075
        %v1463 = vunpack.c.l.b16 %v1076
        %v1464 = vunpack.c.h.b16 %v1076
        %v1465 = vunpack.c.l.b16 %v1077
        %v1466 = vunpack.c.h.b16 %v1077
        %v1467 = vunpack.c.l.b16 %v1078
        %v1468 = vunpack.c.h.b16 %v1078
        %v1469 = vunpack.c.l.b16 %v1079
        %v1470 = vunpack.c.h.b16 %v1079
        %v1471 = vunpack.c.l.b16 %v1080
        %v1472 = vunpack.c.h.b16 %v1080
        %v1473 = vunpack.c.l.b16 %v1081
        %v1474 = vunpack.c.h.b16 %v1081
        %v1475 = vunpack.c.l.b16 %v1082
        %v1476 = vunpack.c.h.b16 %v1082
        %v1477 = vpack.c.b16 %v1225, %v1221
        %v1478 = vpack.c.b16 %v1226, %v1222
        %v1479 = vpack.c.b16 %v1227, %v1223
        %v1480 = vpack.c.b16 %v1228, %v1224
        %v1481 = vpack.c.b16 %v1233, %v1229
        %v1482 = vpack.c.b16 %v1234, %v1230
        %v1483 = vpack.c.b16 %v1235, %v1231
        %v1484 = vpack.c.b16 %v1236, %v1232
        %v1485 = vpack.c.b16 %v1241, %v1237
        %v1486 = vpack.c.b16 %v1242, %v1238
        %v1487 = vpack.c.b16 %v1243, %v1239
        %v1488 = vpack.c.b16 %v1244, %v1240
        %v1489 = vpack.c.b16 %v1249, %v1245
        %v1490 = vpack.c.b16 %v1250, %v1246
        %v1491 = vpack.c.b16 %v1251, %v1247
        %v1492 = vpack.c.b16 %v1252, %v1248
        %v1493 = vpack.c.b16 %v1257, %v1253
        %v1494 = vpack.c.b16 %v1258, %v1254
        %v1495 = vpack.c.b16 %v1259, %v1255
        %v1496 = vpack.c.b16 %v1260, %v1256
        %v1497 = vpack.c.b16 %v1265, %v1261
        %v1498 = vpack.c.b16 %v1266, %v1262
        %v1499 = vpack.c.b16 %v1267, %v1263
        %v1500 = vpack.c.b16 %v1268, %v1264
        %v1501 = vpack.c.b16 %v1273, %v1269
        %v1502 = vpack.c.b16 %v1274, %v1270
        %v1503 = vpack.c.b16 %v1275, %v1271
        %v1504 = vpack.c.b16 %v1276, %v1272
        %v1505 = vpack.c.b16 %v1281, %v1277
        %v1506 = vpack.c.b16 %v1282, %v1278
        %v1507 = vpack.c.b16 %v1283, %v1279
        %v1508 = vpack.c.b16 %v1284, %v1280
        %v1509 = vpack.c.b16 %v1289, %v1285
        %v1510 = vpack.c.b16 %v1290, %v1286
        %v1511 = vpack.c.b16 %v1291, %v1287
        %v1512 = vpack.c.b16 %v1292, %v1288
        %v1513 = vpack.c.b16 %v1297, %v1293
        %v1514 = vpack.c.b16 %v1298, %v1294
        %v1515 = vpack.c.b16 %v1299, %v1295
        %v1516 = vpack.c.b16 %v1300, %v1296
        %v1517 = vpack.c.b16 %v1305, %v1301
        %v1518 = vpack.c.b16 %v1306, %v1302
        %v1519 = vpack.c.b16 %v1307, %v1303
        %v1520 = vpack.c.b16 %v1308, %v1304
        %v1521 = vpack.c.b16 %v1313, %v1309
        %v1522 = vpack.c.b16 %v1314, %v1310
        %v1523 = vpack.c.b16 %v1315, %v1311
        %v1524 = vpack.c.b16 %v1316, %v1312
        %v1525 = vpack.c.b16 %v1321, %v1317
        %v1526 = vpack.c.b16 %v1322, %v1318
        %v1527 = vpack.c.b16 %v1323, %v1319
        %v1528 = vpack.c.b16 %v1324, %v1320
        %v1529 = vpack.c.b16 %v1329, %v1325
        %v1530 = vpack.c.b16 %v1330, %v1326
        %v1531 = vpack.c.b16 %v1331, %v1327
        %v1532 = vpack.c.b16 %v1332, %v1328
        %v1533 = vpack.c.b16 %v1337, %v1333
        %v1534 = vpack.c.b16 %v1338, %v1334
        %v1535 = vpack.c.b16 %v1339, %v1335
        %v1536 = vpack.c.b16 %v1340, %v1336
        %v1537 = vpack.c.b16 %v1345, %v1341
        %v1538 = vpack.c.b16 %v1346, %v1342
        %v1539 = vpack.c.b16 %v1347, %v1343
        %v1540 = vpack.c.b16 %v1348, %v1344
        %v1541 = vpack.c.b16 %v1353, %v1349
        %v1542 = vpack.c.b16 %v1354, %v1350
        %v1543 = vpack.c.b16 %v1355, %v1351
        %v1544 = vpack.c.b16 %v1356, %v1352
        %v1545 = vpack.c.b16 %v1361, %v1357
        %v1546 = vpack.c.b16 %v1362, %v1358
        %v1547 = vpack.c.b16 %v1363, %v1359
        %v1548 = vpack.c.b16 %v1364, %v1360
        %v1549 = vpack.c.b16 %v1369, %v1365
        %v1550 = vpack.c.b16 %v1370, %v1366
        %v1551 = vpack.c.b16 %v1371, %v1367
        %v1552 = vpack.c.b16 %v1372, %v1368
        %v1553 = vpack.c.b16 %v1377, %v1373
        %v1554 = vpack.c.b16 %v1378, %v1374
        %v1555 = vpack.c.b16 %v1379, %v1375
        %v1556 = vpack.c.b16 %v1380, %v1376
        %v1557 = vpack.c.b16 %v1385, %v1381
        %v1558 = vpack.c.b16 %v1386, %v1382
        %v1559 = vpack.c.b16 %v1387, %v1383
        %v1560 = vpack.c.b16 %v1388, %v1384
        %v1561 = vpack.c.b16 %v1393, %v1389
        %v1562 = vpack.c.b16 %v1394, %v1390
        %v1563 = vpack.c.b16 %v1395, %v1391
        %v1564 = vpack.c.b16 %v1396, %v1392
        %v1565 = vpack.c.b16 %v1401, %v1397
        %v1566 = vpack.c.b16 %v1402, %v1398
        %v1567 = vpack.c.b16 %v1403, %v1399
        %v1568 = vpack.c.b16 %v1404, %v1400
        %v1569 = vpack.c.b16 %v1409, %v1405
        %v1570 = vpack.c.b16 %v1410, %v1406
        %v1571 = vpack.c.b16 %v1411, %v1407
        %v1572 = vpack.c.b16 %v1412, %v1408
        %v1573 = vpack.c.b16 %v1417, %v1413
        %v1574 = vpack.c.b16 %v1418, %v1414
        %v1575 = vpack.c.b16 %v1419, %v1415
        %v1576 = vpack.c.b16 %v1420, %v1416
        %v1577 = vpack.c.b16 %v1425, %v1421
        %v1578 = vpack.c.b16 %v1426, %v1422
        %v1579 = vpack.c.b16 %v1427, %v1423
        %v1580 = vpack.c.b16 %v1428, %v1424
        %v1581 = vpack.c.b16 %v1433, %v1429
        %v1582 = vpack.c.b16 %v1434, %v1430
        %v1583 = vpack.c.b16 %v1435, %v1431
        %v1584 = vpack.c.b16 %v1436, %v1432
        %v1585 = vpack.c.b16 %v1441, %v1437
        %v1586 = vpack.c.b16 %v1442, %v1438
        %v1587 = vpack.c.b16 %v1443, %v1439
        %v1588 = vpack.c.b16 %v1444, %v1440
        %v1589 = vpack.c.b16 %v1449, %v1445
        %v1590 = vpack.c.b16 %v1450, %v1446
        %v1591 = vpack.c.b16 %v1451, %v1447
        %v1592 = vpack.c.b16 %v1452, %v1448
        %v1593 = vpack.c.b16 %v1457, %v1453
        %v1594 = vpack.c.b16 %v1458, %v1454
        %v1595 = vpack.c.b16 %v1459, %v1455
        %v1596 = vpack.c.b16 %v1460, %v1456
        %v1597 = vpack.c.b16 %v1465, %v1461
        %v1598 = vpack.c.b16 %v1466, %v1462
        %v1599 = vpack.c.b16 %v1467, %v1463
        %v1600 = vpack.c.b16 %v1468, %v1464
        %v1601 = vpack.c.b16 %v1473, %v1469
        %v1602 = vpack.c.b16 %v1474, %v1470
        %v1603 = vpack.c.b16 %v1475, %v1471
        %v1604 = vpack.c.b16 %v1476, %v1472
        %1733 = vmatpush.bf16.msra.mxu0 %v1505
        %1734 = vmatpush.bf16.msra.mxu0 %v1501
        %1735 = vmatpush.bf16.msra.mxu0 %v1497
        %1736 = vmatpush.bf16.msra.mxu0 %v1493
        %1737 = vmatpush.bf16.msra.mxu0 %v1489
        %1738 = vmatpush.bf16.msra.mxu0 %v1485
        %1739 = vmatpush.bf16.msra.mxu0 %v1481
        %1740 = vmatpush.bf16.msra.mxu0 %v1477
        %1741 = vmatmul.bf16.gmra.mxu0 %v951
        %v1742 = vpop.f32.mrf.mxu0
        %v1743 = vadd.f32 %v1085, %v1742
        %v1744 = vpop.f32.mrf.mxu0
        %v1745 = vadd.f32 %v1085, %v1744
        %1746 = vdwg.mxu0
        %1747 = vmatpush.bf16.msra.mxu0 %v1537
        %1748 = vmatpush.bf16.msra.mxu0 %v1533
        %1749 = vmatpush.bf16.msra.mxu0 %v1529
        %1750 = vmatpush.bf16.msra.mxu0 %v1525
        %1751 = vmatpush.bf16.msra.mxu0 %v1521
        %1752 = vmatpush.bf16.msra.mxu0 %v1517
        %1753 = vmatpush.bf16.msra.mxu0 %v1513
        %1754 = vmatpush.bf16.msra.mxu0 %v1509
        %1755 = vmatmul.bf16.gmra.mxu0 %v952
        %v1756 = vpop.f32.mrf.mxu0
        %v1757 = vadd.f32 %v1743, %v1756
        %v1758 = vpop.f32.mrf.mxu0
        %v1759 = vadd.f32 %v1745, %v1758
        %1760 = vdwg.mxu0
        %1761 = vmatpush.bf16.msra.mxu0 %v1569
        %1762 = vmatpush.bf16.msra.mxu0 %v1565
        %1763 = vmatpush.bf16.msra.mxu0 %v1561
        %1764 = vmatpush.bf16.msra.mxu0 %v1557
        %1765 = vmatpush.bf16.msra.mxu0 %v1553
        %1766 = vmatpush.bf16.msra.mxu0 %v1549
        %1767 = vmatpush.bf16.msra.mxu0 %v1545
        %1768 = vmatpush.bf16.msra.mxu0 %v1541
        %1769 = vmatmul.bf16.gmra.mxu0 %v953
        %v1770 = vpop.f32.mrf.mxu0
        %v1771 = vadd.f32 %v1757, %v1770
        %v1772 = vpop.f32.mrf.mxu0
        %v1773 = vadd.f32 %v1759, %v1772
        %1774 = vdwg.mxu0
        %1775 = vmatpush.bf16.msra.mxu0 %v1601
        %1776 = vmatpush.bf16.msra.mxu0 %v1597
        %1777 = vmatpush.bf16.msra.mxu0 %v1593
        %1778 = vmatpush.bf16.msra.mxu0 %v1589
        %1779 = vmatpush.bf16.msra.mxu0 %v1585
        %1780 = vmatpush.bf16.msra.mxu0 %v1581
        %1781 = vmatpush.bf16.msra.mxu0 %v1577
        %1782 = vmatpush.bf16.msra.mxu0 %v1573
        %1783 = vmatmul.bf16.gmra.mxu0 %v954
        %v1784 = vpop.f32.mrf.mxu0
        %v1785 = vadd.f32 %v1771, %v1784
        %v1786 = vpop.f32.mrf.mxu0
        %v1787 = vadd.f32 %v1773, %v1786
        %1788 = vdwg.mxu0
        %1789 = vmatpush.bf16.msra.mxu0 %v1506
        %1790 = vmatpush.bf16.msra.mxu0 %v1502
        %1791 = vmatpush.bf16.msra.mxu0 %v1498
        %1792 = vmatpush.bf16.msra.mxu0 %v1494
        %1793 = vmatpush.bf16.msra.mxu0 %v1490
        %1794 = vmatpush.bf16.msra.mxu0 %v1486
        %1795 = vmatpush.bf16.msra.mxu0 %v1482
        %1796 = vmatpush.bf16.msra.mxu0 %v1478
        %1797 = vmatmul.bf16.gmra.mxu0 %v951
        %v1798 = vpop.f32.mrf.mxu0
        %v1799 = vadd.f32 %v1086, %v1798
        %v1800 = vpop.f32.mrf.mxu0
        %v1801 = vadd.f32 %v1086, %v1800
        %1802 = vdwg.mxu0
        %1803 = vmatpush.bf16.msra.mxu0 %v1538
        %1804 = vmatpush.bf16.msra.mxu0 %v1534
        %1805 = vmatpush.bf16.msra.mxu0 %v1530
        %1806 = vmatpush.bf16.msra.mxu0 %v1526
        %1807 = vmatpush.bf16.msra.mxu0 %v1522
        %1808 = vmatpush.bf16.msra.mxu0 %v1518
        %1809 = vmatpush.bf16.msra.mxu0 %v1514
        %1810 = vmatpush.bf16.msra.mxu0 %v1510
        %1811 = vmatmul.bf16.gmra.mxu0 %v952
        %v1812 = vpop.f32.mrf.mxu0
        %v1813 = vadd.f32 %v1799, %v1812
        %v1814 = vpop.f32.mrf.mxu0
        %v1815 = vadd.f32 %v1801, %v1814
        %1816 = vdwg.mxu0
        %1817 = vmatpush.bf16.msra.mxu0 %v1570
        %1818 = vmatpush.bf16.msra.mxu0 %v1566
        %1819 = vmatpush.bf16.msra.mxu0 %v1562
        %1820 = vmatpush.bf16.msra.mxu0 %v1558
        %1821 = vmatpush.bf16.msra.mxu0 %v1554
        %1822 = vmatpush.bf16.msra.mxu0 %v1550
        %1823 = vmatpush.bf16.msra.mxu0 %v1546
        %1824 = vmatpush.bf16.msra.mxu0 %v1542
        %1825 = vmatmul.bf16.gmra.mxu0 %v953
        %v1826 = vpop.f32.mrf.mxu0
        %v1827 = vadd.f32 %v1813, %v1826
        %v1828 = vpop.f32.mrf.mxu0
        %v1829 = vadd.f32 %v1815, %v1828
        %1830 = vdwg.mxu0
        %1831 = vmatpush.bf16.msra.mxu0 %v1602
        %1832 = vmatpush.bf16.msra.mxu0 %v1598
        %1833 = vmatpush.bf16.msra.mxu0 %v1594
        %1834 = vmatpush.bf16.msra.mxu0 %v1590
        %1835 = vmatpush.bf16.msra.mxu0 %v1586
        %1836 = vmatpush.bf16.msra.mxu0 %v1582
        %1837 = vmatpush.bf16.msra.mxu0 %v1578
        %1838 = vmatpush.bf16.msra.mxu0 %v1574
        %1839 = vmatmul.bf16.gmra.mxu0 %v954
        %v1840 = vpop.f32.mrf.mxu0
        %v1841 = vadd.f32 %v1827, %v1840
        %v1842 = vpop.f32.mrf.mxu0
        %v1843 = vadd.f32 %v1829, %v1842
        %1844 = vdwg.mxu0
        %1845 = vmatpush.bf16.msra.mxu0 %v1507
        %1846 = vmatpush.bf16.msra.mxu0 %v1503
        %1847 = vmatpush.bf16.msra.mxu0 %v1499
        %1848 = vmatpush.bf16.msra.mxu0 %v1495
        %1849 = vmatpush.bf16.msra.mxu0 %v1491
        %1850 = vmatpush.bf16.msra.mxu0 %v1487
        %1851 = vmatpush.bf16.msra.mxu0 %v1483
        %1852 = vmatpush.bf16.msra.mxu0 %v1479
        %1853 = vmatmul.bf16.gmra.mxu0 %v951
        %v1854 = vpop.f32.mrf.mxu0
        %v1855 = vadd.f32 %v1087, %v1854
        %v1856 = vpop.f32.mrf.mxu0
        %v1857 = vadd.f32 %v1087, %v1856
        %1858 = vdwg.mxu0
        %1859 = vmatpush.bf16.msra.mxu0 %v1539
        %1860 = vmatpush.bf16.msra.mxu0 %v1535
        %1861 = vmatpush.bf16.msra.mxu0 %v1531
        %1862 = vmatpush.bf16.msra.mxu0 %v1527
        %1863 = vmatpush.bf16.msra.mxu0 %v1523
        %1864 = vmatpush.bf16.msra.mxu0 %v1519
        %1865 = vmatpush.bf16.msra.mxu0 %v1515
        %1866 = vmatpush.bf16.msra.mxu0 %v1511
        %1867 = vmatmul.bf16.gmra.mxu0 %v952
        %v1868 = vpop.f32.mrf.mxu0
        %v1869 = vadd.f32 %v1855, %v1868
        %v1870 = vpop.f32.mrf.mxu0
        %v1871 = vadd.f32 %v1857, %v1870
        %1872 = vdwg.mxu0
        %1873 = vmatpush.bf16.msra.mxu0 %v1571
        %1874 = vmatpush.bf16.msra.mxu0 %v1567
        %1875 = vmatpush.bf16.msra.mxu0 %v1563
        %1876 = vmatpush.bf16.msra.mxu0 %v1559
        %1877 = vmatpush.bf16.msra.mxu0 %v1555
        %1878 = vmatpush.bf16.msra.mxu0 %v1551
        %1879 = vmatpush.bf16.msra.mxu0 %v1547
        %1880 = vmatpush.bf16.msra.mxu0 %v1543
        %1881 = vmatmul.bf16.gmra.mxu0 %v953
        %v1882 = vpop.f32.mrf.mxu0
        %v1883 = vadd.f32 %v1869, %v1882
        %v1884 = vpop.f32.mrf.mxu0
        %v1885 = vadd.f32 %v1871, %v1884
        %1886 = vdwg.mxu0
        %1887 = vmatpush.bf16.msra.mxu0 %v1603
        %1888 = vmatpush.bf16.msra.mxu0 %v1599
        %1889 = vmatpush.bf16.msra.mxu0 %v1595
        %1890 = vmatpush.bf16.msra.mxu0 %v1591
        %1891 = vmatpush.bf16.msra.mxu0 %v1587
        %1892 = vmatpush.bf16.msra.mxu0 %v1583
        %1893 = vmatpush.bf16.msra.mxu0 %v1579
        %1894 = vmatpush.bf16.msra.mxu0 %v1575
        %1895 = vmatmul.bf16.gmra.mxu0 %v954
        %v1896 = vpop.f32.mrf.mxu0
        %v1897 = vadd.f32 %v1883, %v1896
        %v1898 = vpop.f32.mrf.mxu0
        %v1899 = vadd.f32 %v1885, %v1898
        %1900 = vdwg.mxu0
        %1901 = vmatpush.bf16.msra.mxu0 %v1508
        %1902 = vmatpush.bf16.msra.mxu0 %v1504
        %1903 = vmatpush.bf16.msra.mxu0 %v1500
        %1904 = vmatpush.bf16.msra.mxu0 %v1496
        %1905 = vmatpush.bf16.msra.mxu0 %v1492
        %1906 = vmatpush.bf16.msra.mxu0 %v1488
        %1907 = vmatpush.bf16.msra.mxu0 %v1484
        %1908 = vmatpush.bf16.msra.mxu0 %v1480
        %1909 = vmatmul.bf16.gmra.mxu0 %v951
        %v1910 = vpop.f32.mrf.mxu0
        %v1911 = vadd.f32 %v1088, %v1910
        %v1912 = vpop.f32.mrf.mxu0
        %v1913 = vadd.f32 %v1088, %v1912
        %1914 = vdwg.mxu0
        %1915 = vmatpush.bf16.msra.mxu0 %v1540
        %1916 = vmatpush.bf16.msra.mxu0 %v1536
        %1917 = vmatpush.bf16.msra.mxu0 %v1532
        %1918 = vmatpush.bf16.msra.mxu0 %v1528
        %1919 = vmatpush.bf16.msra.mxu0 %v1524
        %1920 = vmatpush.bf16.msra.mxu0 %v1520
        %1921 = vmatpush.bf16.msra.mxu0 %v1516
        %1922 = vmatpush.bf16.msra.mxu0 %v1512
        %1923 = vmatmul.bf16.gmra.mxu0 %v952
        %v1924 = vpop.f32.mrf.mxu0
        %v1925 = vadd.f32 %v1911, %v1924
        %v1926 = vpop.f32.mrf.mxu0
        %v1927 = vadd.f32 %v1913, %v1926
        %1928 = vdwg.mxu0
        %1929 = vmatpush.bf16.msra.mxu0 %v1572
        %1930 = vmatpush.bf16.msra.mxu0 %v1568
        %1931 = vmatpush.bf16.msra.mxu0 %v1564
        %1932 = vmatpush.bf16.msra.mxu0 %v1560
        %1933 = vmatpush.bf16.msra.mxu0 %v1556
        %1934 = vmatpush.bf16.msra.mxu0 %v1552
        %1935 = vmatpush.bf16.msra.mxu0 %v1548
        %1936 = vmatpush.bf16.msra.mxu0 %v1544
        %1937 = vmatmul.bf16.gmra.mxu0 %v953
        %v1938 = vpop.f32.mrf.mxu0
        %v1939 = vadd.f32 %v1925, %v1938
        %v1940 = vpop.f32.mrf.mxu0
        %v1941 = vadd.f32 %v1927, %v1940
        %1942 = vdwg.mxu0
        %1943 = vmatpush.bf16.msra.mxu0 %v1604
        %1944 = vmatpush.bf16.msra.mxu0 %v1600
        %1945 = vmatpush.bf16.msra.mxu0 %v1596
        %1946 = vmatpush.bf16.msra.mxu0 %v1592
        %1947 = vmatpush.bf16.msra.mxu0 %v1588
        %1948 = vmatpush.bf16.msra.mxu0 %v1584
        %1949 = vmatpush.bf16.msra.mxu0 %v1580
        %1950 = vmatpush.bf16.msra.mxu0 %v1576
        %1951 = vmatmul.bf16.gmra.mxu0 %v954
        %v1952 = vpop.f32.mrf.mxu0
        %v1953 = vadd.f32 %v1939, %v1952
        %v1954 = vpop.f32.mrf.mxu0
        %v1955 = vadd.f32 %v1941, %v1954
        %1956 = vdwg.mxu0
        %vm1957 = vcmp.ge.f32.partialorder %v1785, 0.0
        %vm1958 = vcmp.ge.f32.partialorder %v1841, 0.0
        %vm1959 = vcmp.ge.f32.partialorder %v1897, 0.0
        %vm1960 = vcmp.ge.f32.partialorder %v1787, 0.0
        %vm1961 = vcmp.ge.f32.partialorder %v1843, 0.0
        %vm1962 = vcmp.ge.f32.partialorder %v1899, 0.0
        %v1963 = vmul.f32 %v1785, 0.1
        %v1964 = vmul.f32 %v1841, 0.1
        %v1965 = vmul.f32 %v1897, 0.1
        %v1966 = vmul.f32 %v1787, 0.1
        %v1967 = vmul.f32 %v1843, 0.1
        %v1968 = vmul.f32 %v1899, 0.1
        %v1969 = vsel %vm1957, %v1785, %v1963
        %v1970 = vsel %vm1958, %v1841, %v1964
        %v1971 = vsel %vm1959, %v1897, %v1965
        %v1972 = vsel %vm1960, %v1787, %v1966
        %v1973 = vsel %vm1961, %v1843, %v1967
        %v1974 = vsel %vm1962, %v1899, %v1968
        %v1975 = vld [vmem:[#allocation17] sm:$0xff]
        %v1976 = vld [vmem:[#allocation17 + $0x8] sm:$0xff]
        %v1977 = vld [vmem:[#allocation17 + $0x10] sm:$0xff]
        %v1978 = vld [vmem:[#allocation17 + $0x18] sm:$0xff]
        %v1979 = vld [vmem:[#allocation17 + $0x20] sm:$0xff]
        %v1980 = vld [vmem:[#allocation17 + $0x28] sm:$0xff]
        %v1981 = vld [vmem:[#allocation17 + $0x30] sm:$0xff]
        %v1982 = vld [vmem:[#allocation17 + $0x38] sm:$0xff]
        %v1983 = vld [vmem:[#allocation17 + $0x40] sm:$0xff]
        %v1984 = vld [vmem:[#allocation17 + $0x48] sm:$0xff]
        %v1985 = vld [vmem:[#allocation17 + $0x50] sm:$0xff]
        %v1986 = vld [vmem:[#allocation17 + $0x58] sm:$0xff]
        %v1987 = vld [vmem:[#allocation17 + $0x60] sm:$0xff]
        %v1988 = vld [vmem:[#allocation17 + $0x68] sm:$0xff]
        %v1989 = vld [vmem:[#allocation17 + $0x70] sm:$0xff]
        %v1990 = vld [vmem:[#allocation17 + $0x78] sm:$0xff]
        %v1991 = vld [vmem:[#allocation17 + $0x80] sm:$0xff]
        %v1992 = vld [vmem:[#allocation17 + $0x88] sm:$0xff]
        %v1993 = vld [vmem:[#allocation17 + $0x90] sm:$0xff]
        %v1994 = vld [vmem:[#allocation17 + $0x98] sm:$0xff]
        %v1995 = vld [vmem:[#allocation17 + $0xa0] sm:$0xff]
        %v1996 = vld [vmem:[#allocation17 + $0xa8] sm:$0xff]
        %v1997 = vld [vmem:[#allocation17 + $0xb0] sm:$0xff]
        %v1998 = vld [vmem:[#allocation17 + $0xb8] sm:$0xff]
        %v1999 = vld [vmem:[#allocation17 + $0xc0] sm:$0xff]
        %v2000 = vld [vmem:[#allocation17 + $0xc8] sm:$0xff]
        %v2001 = vld [vmem:[#allocation17 + $0xd0] sm:$0xff]
        %v2002 = vld [vmem:[#allocation17 + $0xd8] sm:$0xff]
        %v2003 = vld [vmem:[#allocation17 + $0xe0] sm:$0xff]
        %v2004 = vld [vmem:[#allocation17 + $0xe8] sm:$0xff]
        %v2005 = vld [vmem:[#allocation17 + $0xf0] sm:$0xff]
        %v2006 = vld [vmem:[#allocation17 + $0xf8] sm:$0xff]
        %v2007 = vld [vmem:[%s14] sm:$0xf]
        %v2009 = vperm.slane %v2007, 0
        %v2010 = vperm.slane %v2007, 1
        %v2011 = vperm.slane %v2007, 2
        %v2012 = vperm.slane %v2007, 3
        %v2049 = vunpack.c.l.b16 %v1975
        %v2050 = vunpack.c.h.b16 %v1975
        %v2051 = vunpack.c.l.b16 %v1976
        %v2052 = vunpack.c.h.b16 %v1976
        %v2053 = vunpack.c.l.b16 %v1977
        %v2054 = vunpack.c.h.b16 %v1977
        %v2055 = vunpack.c.l.b16 %v1978
        %v2056 = vunpack.c.h.b16 %v1978
        %v2057 = vunpack.c.l.b16 %v1979
        %v2058 = vunpack.c.h.b16 %v1979
        %v2059 = vunpack.c.l.b16 %v1980
        %v2060 = vunpack.c.h.b16 %v1980
        %v2061 = vunpack.c.l.b16 %v1981
        %v2062 = vunpack.c.h.b16 %v1981
        %v2063 = vunpack.c.l.b16 %v1982
        %v2064 = vunpack.c.h.b16 %v1982
        %v2065 = vunpack.c.l.b16 %v1983
        %v2066 = vunpack.c.h.b16 %v1983
        %v2067 = vunpack.c.l.b16 %v1984
        %v2068 = vunpack.c.h.b16 %v1984
        %v2069 = vunpack.c.l.b16 %v1985
        %v2070 = vunpack.c.h.b16 %v1985
        %v2071 = vunpack.c.l.b16 %v1986
        %v2072 = vunpack.c.h.b16 %v1986
        %v2073 = vunpack.c.l.b16 %v1987
        %v2074 = vunpack.c.h.b16 %v1987
        %v2075 = vunpack.c.l.b16 %v1988
        %v2076 = vunpack.c.h.b16 %v1988
        %v2077 = vunpack.c.l.b16 %v1989
        %v2078 = vunpack.c.h.b16 %v1989
        %v2079 = vunpack.c.l.b16 %v1990
        %v2080 = vunpack.c.h.b16 %v1990
        %v2081 = vunpack.c.l.b16 %v1991
        %v2082 = vunpack.c.h.b16 %v1991
        %v2083 = vunpack.c.l.b16 %v1992
        %v2084 = vunpack.c.h.b16 %v1992
        %v2085 = vunpack.c.l.b16 %v1993
        %v2086 = vunpack.c.h.b16 %v1993
        %v2087 = vunpack.c.l.b16 %v1994
        %v2088 = vunpack.c.h.b16 %v1994
        %v2089 = vunpack.c.l.b16 %v1995
        %v2090 = vunpack.c.h.b16 %v1995
        %v2091 = vunpack.c.l.b16 %v1996
        %v2092 = vunpack.c.h.b16 %v1996
        %v2093 = vunpack.c.l.b16 %v1997
        %v2094 = vunpack.c.h.b16 %v1997
        %v2095 = vunpack.c.l.b16 %v1998
        %v2096 = vunpack.c.h.b16 %v1998
        %v2097 = vunpack.c.l.b16 %v1999
        %v2098 = vunpack.c.h.b16 %v1999
        %v2099 = vunpack.c.l.b16 %v2000
        %v2100 = vunpack.c.h.b16 %v2000
        %v2101 = vunpack.c.l.b16 %v2001
        %v2102 = vunpack.c.h.b16 %v2001
        %v2103 = vunpack.c.l.b16 %v2002
        %v2104 = vunpack.c.h.b16 %v2002
        %v2105 = vunpack.c.l.b16 %v2003
        %v2106 = vunpack.c.h.b16 %v2003
        %v2107 = vunpack.c.l.b16 %v2004
        %v2108 = vunpack.c.h.b16 %v2004
        %v2109 = vunpack.c.l.b16 %v2005
        %v2110 = vunpack.c.h.b16 %v2005
        %v2111 = vunpack.c.l.b16 %v2006
        %v2112 = vunpack.c.h.b16 %v2006
        %v2113 = vpack.c.b16 %v2053, %v2049
        %v2114 = vpack.c.b16 %v2054, %v2050
        %v2115 = vpack.c.b16 %v2055, %v2051
        %v2116 = vpack.c.b16 %v2056, %v2052
        %v2117 = vpack.c.b16 %v2061, %v2057
        %v2118 = vpack.c.b16 %v2062, %v2058
        %v2119 = vpack.c.b16 %v2063, %v2059
        %v2120 = vpack.c.b16 %v2064, %v2060
        %v2121 = vpack.c.b16 %v2069, %v2065
        %v2122 = vpack.c.b16 %v2070, %v2066
        %v2123 = vpack.c.b16 %v2071, %v2067
        %v2124 = vpack.c.b16 %v2072, %v2068
        %v2125 = vpack.c.b16 %v2077, %v2073
        %v2126 = vpack.c.b16 %v2078, %v2074
        %v2127 = vpack.c.b16 %v2079, %v2075
        %v2128 = vpack.c.b16 %v2080, %v2076
        %v2129 = vpack.c.b16 %v2085, %v2081
        %v2130 = vpack.c.b16 %v2086, %v2082
        %v2131 = vpack.c.b16 %v2087, %v2083
        %v2132 = vpack.c.b16 %v2088, %v2084
        %v2133 = vpack.c.b16 %v2093, %v2089
        %v2134 = vpack.c.b16 %v2094, %v2090
        %v2135 = vpack.c.b16 %v2095, %v2091
        %v2136 = vpack.c.b16 %v2096, %v2092
        %v2137 = vpack.c.b16 %v2101, %v2097
        %v2138 = vpack.c.b16 %v2102, %v2098
        %v2139 = vpack.c.b16 %v2103, %v2099
        %v2140 = vpack.c.b16 %v2104, %v2100
        %v2141 = vpack.c.b16 %v2109, %v2105
        %v2142 = vpack.c.b16 %v2110, %v2106
        %v2143 = vpack.c.b16 %v2111, %v2107
        %v2144 = vpack.c.b16 %v2112, %v2108
        %2177 = vmatpush.bf16.msra.mxu0 %v2141
        %2178 = vmatpush.bf16.msra.mxu0 %v2137
        %2179 = vmatpush.bf16.msra.mxu0 %v2133
        %2180 = vmatpush.bf16.msra.mxu0 %v2129
        %2181 = vmatpush.bf16.msra.mxu0 %v2125
        %2182 = vmatpush.bf16.msra.mxu0 %v2121
        %2183 = vmatpush.bf16.msra.mxu0 %v2117
        %2184 = vmatpush.bf16.msra.mxu0 %v2113
        %2185 = vmatmul.bf16.gmra.mxu0 %v709
        %v2186 = vpop.f32.mrf.mxu0
        %v2187 = vadd.f32 %v2009, %v2186
        %v2188 = vpop.f32.mrf.mxu0
        %v2189 = vadd.f32 %v2009, %v2188
        %2190 = vdwg.mxu0
        %2191 = vmatpush.bf16.msra.mxu0 %v2142
        %2192 = vmatpush.bf16.msra.mxu0 %v2138
        %2193 = vmatpush.bf16.msra.mxu0 %v2134
        %2194 = vmatpush.bf16.msra.mxu0 %v2130
        %2195 = vmatpush.bf16.msra.mxu0 %v2126
        %2196 = vmatpush.bf16.msra.mxu0 %v2122
        %2197 = vmatpush.bf16.msra.mxu0 %v2118
        %2198 = vmatpush.bf16.msra.mxu0 %v2114
        %2199 = vmatmul.bf16.gmra.mxu0 %v709
        %v2200 = vpop.f32.mrf.mxu0
        %v2201 = vadd.f32 %v2010, %v2200
        %v2202 = vpop.f32.mrf.mxu0
        %v2203 = vadd.f32 %v2010, %v2202
        %2204 = vdwg.mxu0
        %2205 = vmatpush.bf16.msra.mxu0 %v2143
        %2206 = vmatpush.bf16.msra.mxu0 %v2139
        %2207 = vmatpush.bf16.msra.mxu0 %v2135
        %2208 = vmatpush.bf16.msra.mxu0 %v2131
        %2209 = vmatpush.bf16.msra.mxu0 %v2127
        %2210 = vmatpush.bf16.msra.mxu0 %v2123
        %2211 = vmatpush.bf16.msra.mxu0 %v2119
        %2212 = vmatpush.bf16.msra.mxu0 %v2115
        %2213 = vmatmul.bf16.gmra.mxu0 %v709
        %v2214 = vpop.f32.mrf.mxu0
        %v2215 = vadd.f32 %v2011, %v2214
        %v2216 = vpop.f32.mrf.mxu0
        %v2217 = vadd.f32 %v2011, %v2216
        %2218 = vdwg.mxu0
        %2219 = vmatpush.bf16.msra.mxu0 %v2144
        %2220 = vmatpush.bf16.msra.mxu0 %v2140
        %2221 = vmatpush.bf16.msra.mxu0 %v2136
        %2222 = vmatpush.bf16.msra.mxu0 %v2132
        %2223 = vmatpush.bf16.msra.mxu0 %v2128
        %2224 = vmatpush.bf16.msra.mxu0 %v2124
        %2225 = vmatpush.bf16.msra.mxu0 %v2120
        %2226 = vmatpush.bf16.msra.mxu0 %v2116
        %2227 = vmatmul.bf16.gmra.mxu0 %v709
        %v2228 = vpop.f32.mrf.mxu0
        %v2229 = vadd.f32 %v2012, %v2228
        %v2230 = vpop.f32.mrf.mxu0
        %v2231 = vadd.f32 %v2012, %v2230
        %2232 = vdwg.mxu0
        %v2233 = vpack.c.bf16 %v1972, %v1969
        %v2234 = vld [vmem:[#allocation11] sm:$0xf]
        %v2235 = vld [vmem:[#allocation11 + $0x4] sm:$0xf]
        %v2238 = vunpack.c.l.b16 %v2234
        %v2239 = vunpack.c.l.b16 %v2235
        %v2240 = vpack.c.b16 %v2239, %v2238
        %vm2241 = vcmask 130048
        %v2243 = vsel %vm2241, %v2240, 0
        %2245 = vmatpush.bf16.msra.mxu0 0
        %2246 = vmatpush.bf16.msra.mxu0 0
        %2247 = vmatpush.bf16.msra.mxu0 0
        %2248 = vmatpush.bf16.msra.mxu0 0
        %2249 = vmatpush.bf16.msra.mxu0 0
        %2250 = vmatpush.bf16.msra.mxu0 0
        %2251 = vmatpush.bf16.msra.mxu0 0
        %2252 = vmatpush.bf16.msra.mxu0 %v2233
        %2253 = vmatmul.bf16.gmra.mxu0 %v2243
        %v2254 = vpop.f32.mrf.mxu0
        %v2255 = vadd.f32 0.0, %v2254
        %v2256 = vpop.f32.mrf.mxu0
        %v2257 = vadd.f32 0.0, %v2256
        %2258 = vdwg.mxu0
        %v2259 = vpack.c.bf16 %v2257, %v2255
        %v2260 = vld [vmem:[#allocation13] sm:$0xf]
        %v2261 = vld [vmem:[#allocation13 + $0x4] sm:$0xf]
        %v2262 = vld [vmem:[#allocation13 + $0x8] sm:$0xf]
        %v2263 = vld [vmem:[#allocation13 + $0xc] sm:$0xf]
        %v2264 = vld [vmem:[#allocation13 + $0x10] sm:$0xf]
        %v2265 = vld [vmem:[#allocation13 + $0x14] sm:$0xf]
        %v2266 = vld [vmem:[#allocation13 + $0x18] sm:$0xf]
        %v2267 = vld [vmem:[#allocation13 + $0x1c] sm:$0xf]
        %v2268 = vld [vmem:[#allocation13 + $0x20] sm:$0xf]
        %v2269 = vld [vmem:[#allocation13 + $0x24] sm:$0xf]
        %v2270 = vld [vmem:[#allocation13 + $0x28] sm:$0xf]
        %v2271 = vld [vmem:[#allocation13 + $0x2c] sm:$0xf]
        %v2272 = vld [vmem:[#allocation13 + $0x30] sm:$0xf]
        %v2273 = vld [vmem:[#allocation13 + $0x34] sm:$0xf]
        %v2274 = vld [vmem:[#allocation13 + $0x38] sm:$0xf]
        %v2275 = vld [vmem:[#allocation13 + $0x3c] sm:$0xf]
        %s2276 = scalar_lea.vmem [#allocation11], 8
        %v2277 = vld [vmem:[%s2276] sm:$0xf]
        %v2278 = vld [vmem:[%s2276 + $0x4] sm:$0xf]
        %v2281 = vunpack.c.l.b16 %v2277
        %v2282 = vunpack.c.l.b16 %v2278
        %v2283 = vpack.c.b16 %v2282, %v2281
        %v2285 = vsel %vm2241, %v2283, 0
        %2287 = vmatpush.bf16.msra.mxu0 0
        %2288 = vmatpush.bf16.msra.mxu0 0
        %2289 = vmatpush.bf16.msra.mxu0 0
        %2290 = vmatpush.bf16.msra.mxu0 0
        %2291 = vmatpush.bf16.msra.mxu0 0
        %2292 = vmatpush.bf16.msra.mxu0 0
        %2293 = vmatpush.bf16.msra.mxu0 0
        %2294 = vmatpush.bf16.msra.mxu0 %v2233
        %2295 = vmatmul.bf16.gmra.mxu0 %v2285
        %v2296 = vpop.f32.mrf.mxu0
        %v2297 = vadd.f32 0.0, %v2296
        %v2298 = vpop.f32.mrf.mxu0
        %v2299 = vadd.f32 0.0, %v2298
        %2300 = vdwg.mxu0
        %v2301 = vpack.c.bf16 %v2299, %v2297
        %s2302 = scalar_lea.vmem [#allocation13], 64
        %v2303 = vld [vmem:[%s2302] sm:$0xf]
        %v2304 = vld [vmem:[%s2302 + $0x4] sm:$0xf]
        %v2305 = vld [vmem:[%s2302 + $0x8] sm:$0xf]
        %v2306 = vld [vmem:[%s2302 + $0xc] sm:$0xf]
        %v2307 = vld [vmem:[%s2302 + $0x10] sm:$0xf]
        %v2308 = vld [vmem:[%s2302 + $0x14] sm:$0xf]
        %v2309 = vld [vmem:[%s2302 + $0x18] sm:$0xf]
        %v2310 = vld [vmem:[%s2302 + $0x1c] sm:$0xf]
        %v2311 = vld [vmem:[%s2302 + $0x20] sm:$0xf]
        %v2312 = vld [vmem:[%s2302 + $0x24] sm:$0xf]
        %v2313 = vld [vmem:[%s2302 + $0x28] sm:$0xf]
        %v2314 = vld [vmem:[%s2302 + $0x2c] sm:$0xf]
        %v2315 = vld [vmem:[%s2302 + $0x30] sm:$0xf]
        %v2316 = vld [vmem:[%s2302 + $0x34] sm:$0xf]
        %v2317 = vld [vmem:[%s2302 + $0x38] sm:$0xf]
        %v2318 = vld [vmem:[%s2302 + $0x3c] sm:$0xf]
        %v2335 = vunpack.c.l.b16 %v2303
        %v2336 = vunpack.c.l.b16 %v2304
        %v2337 = vunpack.c.l.b16 %v2305
        %v2338 = vunpack.c.l.b16 %v2306
        %v2339 = vunpack.c.l.b16 %v2307
        %v2340 = vunpack.c.l.b16 %v2308
        %v2341 = vunpack.c.l.b16 %v2309
        %v2342 = vunpack.c.l.b16 %v2310
        %v2343 = vunpack.c.l.b16 %v2311
        %v2344 = vunpack.c.l.b16 %v2312
        %v2345 = vunpack.c.l.b16 %v2313
        %v2346 = vunpack.c.l.b16 %v2314
        %v2347 = vunpack.c.l.b16 %v2315
        %v2348 = vunpack.c.l.b16 %v2316
        %v2349 = vunpack.c.l.b16 %v2317
        %v2350 = vunpack.c.l.b16 %v2318
        %v2351 = vpack.c.b16 %v2336, %v2335
        %v2352 = vpack.c.b16 %v2338, %v2337
        %v2353 = vpack.c.b16 %v2340, %v2339
        %v2354 = vpack.c.b16 %v2342, %v2341
        %v2355 = vpack.c.b16 %v2344, %v2343
        %v2356 = vpack.c.b16 %v2346, %v2345
        %v2357 = vpack.c.b16 %v2348, %v2347
        %v2358 = vpack.c.b16 %v2350, %v2349
        %2367 = vmatpush.bf16.msra.mxu0 %v2358
        %2368 = vmatpush.bf16.msra.mxu0 %v2357
        %2369 = vmatpush.bf16.msra.mxu0 %v2356
        %2370 = vmatpush.bf16.msra.mxu0 %v2355
        %2371 = vmatpush.bf16.msra.mxu0 %v2354
        %2372 = vmatpush.bf16.msra.mxu0 %v2353
        %2373 = vmatpush.bf16.msra.mxu0 %v2352
        %2374 = vmatpush.bf16.msra.mxu0 %v2351
        %2375 = vmatmul.bf16.gmra.mxu0 %v2301
        %v2376 = vpop.f32.mrf.mxu0
        %v2377 = vadd.f32 0.0, %v2376
        %v2378 = vpop.f32.mrf.mxu0
        %v2379 = vadd.f32 0.0, %v2378
        %2380 = vdwg.mxu0
        %v2397 = vunpack.c.l.b16 %v2260
        %v2398 = vunpack.c.l.b16 %v2261
        %v2399 = vunpack.c.l.b16 %v2262
        %v2400 = vunpack.c.l.b16 %v2263
        %v2401 = vunpack.c.l.b16 %v2264
        %v2402 = vunpack.c.l.b16 %v2265
        %v2403 = vunpack.c.l.b16 %v2266
        %v2404 = vunpack.c.l.b16 %v2267
        %v2405 = vunpack.c.l.b16 %v2268
        %v2406 = vunpack.c.l.b16 %v2269
        %v2407 = vunpack.c.l.b16 %v2270
        %v2408 = vunpack.c.l.b16 %v2271
        %v2409 = vunpack.c.l.b16 %v2272
        %v2410 = vunpack.c.l.b16 %v2273
        %v2411 = vunpack.c.l.b16 %v2274
        %v2412 = vunpack.c.l.b16 %v2275
        %v2413 = vpack.c.b16 %v2398, %v2397
        %v2414 = vpack.c.b16 %v2400, %v2399
        %v2415 = vpack.c.b16 %v2402, %v2401
        %v2416 = vpack.c.b16 %v2404, %v2403
        %v2417 = vpack.c.b16 %v2406, %v2405
        %v2418 = vpack.c.b16 %v2408, %v2407
        %v2419 = vpack.c.b16 %v2410, %v2409
        %v2420 = vpack.c.b16 %v2412, %v2411
        %2429 = vmatpush.bf16.msra.mxu0 %v2420
        %2430 = vmatpush.bf16.msra.mxu0 %v2419
        %2431 = vmatpush.bf16.msra.mxu0 %v2418
        %2432 = vmatpush.bf16.msra.mxu0 %v2417
        %2433 = vmatpush.bf16.msra.mxu0 %v2416
        %2434 = vmatpush.bf16.msra.mxu0 %v2415
        %2435 = vmatpush.bf16.msra.mxu0 %v2414
        %2436 = vmatpush.bf16.msra.mxu0 %v2413
        %2437 = vmatmul.bf16.gmra.mxu0 %v2259
        %v2438 = vpop.f32.mrf.mxu0
        %v2439 = vadd.f32 %v2377, %v2438
        %v2440 = vpop.f32.mrf.mxu0
        %v2441 = vadd.f32 %v2379, %v2440
        %2442 = vdwg.mxu0
        %s2443 = scalar_lea.vmem [#allocation11], 16
        %v2444 = vld [vmem:[%s2443] sm:$0xf]
        %v2445 = vld [vmem:[%s2443 + $0x4] sm:$0xf]
        %v2448 = vunpack.c.l.b16 %v2444
        %v2449 = vunpack.c.l.b16 %v2445
        %v2450 = vpack.c.b16 %v2449, %v2448
        %v2452 = vsel %vm2241, %v2450, 0
        %2454 = vmatpush.bf16.msra.mxu0 0
        %2455 = vmatpush.bf16.msra.mxu0 0
        %2456 = vmatpush.bf16.msra.mxu0 0
        %2457 = vmatpush.bf16.msra.mxu0 0
        %2458 = vmatpush.bf16.msra.mxu0 0
        %2459 = vmatpush.bf16.msra.mxu0 0
        %2460 = vmatpush.bf16.msra.mxu0 0
        %2461 = vmatpush.bf16.msra.mxu0 %v2233
        %2462 = vmatmul.bf16.gmra.mxu0 %v2452
        %v2463 = vpop.f32.mrf.mxu0
        %v2464 = vadd.f32 0.0, %v2463
        %v2465 = vpop.f32.mrf.mxu0
        %v2466 = vadd.f32 0.0, %v2465
        %2467 = vdwg.mxu0
        %v2468 = vpack.c.bf16 %v2466, %v2464
        %s2469 = scalar_lea.vmem [#allocation13], 128
        %v2470 = vld [vmem:[%s2469] sm:$0xf]
        %v2471 = vld [vmem:[%s2469 + $0x4] sm:$0xf]
        %v2472 = vld [vmem:[%s2469 + $0x8] sm:$0xf]
        %v2473 = vld [vmem:[%s2469 + $0xc] sm:$0xf]
        %v2474 = vld [vmem:[%s2469 + $0x10] sm:$0xf]
        %v2475 = vld [vmem:[%s2469 + $0x14] sm:$0xf]
        %v2476 = vld [vmem:[%s2469 + $0x18] sm:$0xf]
        %v2477 = vld [vmem:[%s2469 + $0x1c] sm:$0xf]
        %v2478 = vld [vmem:[%s2469 + $0x20] sm:$0xf]
        %v2479 = vld [vmem:[%s2469 + $0x24] sm:$0xf]
        %v2480 = vld [vmem:[%s2469 + $0x28] sm:$0xf]
        %v2481 = vld [vmem:[%s2469 + $0x2c] sm:$0xf]
        %v2482 = vld [vmem:[%s2469 + $0x30] sm:$0xf]
        %v2483 = vld [vmem:[%s2469 + $0x34] sm:$0xf]
        %v2484 = vld [vmem:[%s2469 + $0x38] sm:$0xf]
        %v2485 = vld [vmem:[%s2469 + $0x3c] sm:$0xf]
        %v2502 = vunpack.c.l.b16 %v2470
        %v2503 = vunpack.c.l.b16 %v2471
        %v2504 = vunpack.c.l.b16 %v2472
        %v2505 = vunpack.c.l.b16 %v2473
        %v2506 = vunpack.c.l.b16 %v2474
        %v2507 = vunpack.c.l.b16 %v2475
        %v2508 = vunpack.c.l.b16 %v2476
        %v2509 = vunpack.c.l.b16 %v2477
        %v2510 = vunpack.c.l.b16 %v2478
        %v2511 = vunpack.c.l.b16 %v2479
        %v2512 = vunpack.c.l.b16 %v2480
        %v2513 = vunpack.c.l.b16 %v2481
        %v2514 = vunpack.c.l.b16 %v2482
        %v2515 = vunpack.c.l.b16 %v2483
        %v2516 = vunpack.c.l.b16 %v2484
        %v2517 = vunpack.c.l.b16 %v2485
        %v2518 = vpack.c.b16 %v2503, %v2502
        %v2519 = vpack.c.b16 %v2505, %v2504
        %v2520 = vpack.c.b16 %v2507, %v2506
        %v2521 = vpack.c.b16 %v2509, %v2508
        %v2522 = vpack.c.b16 %v2511, %v2510
        %v2523 = vpack.c.b16 %v2513, %v2512
        %v2524 = vpack.c.b16 %v2515, %v2514
        %v2525 = vpack.c.b16 %v2517, %v2516
        %2534 = vmatpush.bf16.msra.mxu0 %v2525
        %2535 = vmatpush.bf16.msra.mxu0 %v2524
        %2536 = vmatpush.bf16.msra.mxu0 %v2523
        %2537 = vmatpush.bf16.msra.mxu0 %v2522
        %2538 = vmatpush.bf16.msra.mxu0 %v2521
        %2539 = vmatpush.bf16.msra.mxu0 %v2520
        %2540 = vmatpush.bf16.msra.mxu0 %v2519
        %2541 = vmatpush.bf16.msra.mxu0 %v2518
        %2542 = vmatmul.bf16.gmra.mxu0 %v2468
        %v2543 = vpop.f32.mrf.mxu0
        %v2544 = vadd.f32 0.0, %v2543
        %v2545 = vpop.f32.mrf.mxu0
        %v2546 = vadd.f32 0.0, %v2545
        %2547 = vdwg.mxu0
        %v2548 = vadd.f32 %v2439, %v2544
        %v2549 = vadd.f32 %v2441, %v2546
        %s2550 = scalar_lea.vmem [#allocation11], 24
        %v2551 = vld [vmem:[%s2550] sm:$0xf]
        %v2552 = vld [vmem:[%s2550 + $0x4] sm:$0xf]
        %v2555 = vunpack.c.l.b16 %v2551
        %v2556 = vunpack.c.l.b16 %v2552
        %v2557 = vpack.c.b16 %v2556, %v2555
        %v2559 = vsel %vm2241, %v2557, 0
        %2561 = vmatpush.bf16.msra.mxu0 0
        %2562 = vmatpush.bf16.msra.mxu0 0
        %2563 = vmatpush.bf16.msra.mxu0 0
        %2564 = vmatpush.bf16.msra.mxu0 0
        %2565 = vmatpush.bf16.msra.mxu0 0
        %2566 = vmatpush.bf16.msra.mxu0 0
        %2567 = vmatpush.bf16.msra.mxu0 0
        %2568 = vmatpush.bf16.msra.mxu0 %v2233
        %2569 = vmatmul.bf16.gmra.mxu0 %v2559
        %v2570 = vpop.f32.mrf.mxu0
        %v2571 = vadd.f32 0.0, %v2570
        %v2572 = vpop.f32.mrf.mxu0
        %v2573 = vadd.f32 0.0, %v2572
        %2574 = vdwg.mxu0
        %v2575 = vpack.c.bf16 %v2573, %v2571
        %s2576 = scalar_lea.vmem [#allocation13], 192
        %v2577 = vld [vmem:[%s2576] sm:$0xf]
        %v2578 = vld [vmem:[%s2576 + $0x4] sm:$0xf]
        %v2579 = vld [vmem:[%s2576 + $0x8] sm:$0xf]
        %v2580 = vld [vmem:[%s2576 + $0xc] sm:$0xf]
        %v2581 = vld [vmem:[%s2576 + $0x10] sm:$0xf]
        %v2582 = vld [vmem:[%s2576 + $0x14] sm:$0xf]
        %v2583 = vld [vmem:[%s2576 + $0x18] sm:$0xf]
        %v2584 = vld [vmem:[%s2576 + $0x1c] sm:$0xf]
        %v2585 = vld [vmem:[%s2576 + $0x20] sm:$0xf]
        %v2586 = vld [vmem:[%s2576 + $0x24] sm:$0xf]
        %v2587 = vld [vmem:[%s2576 + $0x28] sm:$0xf]
        %v2588 = vld [vmem:[%s2576 + $0x2c] sm:$0xf]
        %v2589 = vld [vmem:[%s2576 + $0x30] sm:$0xf]
        %v2590 = vld [vmem:[%s2576 + $0x34] sm:$0xf]
        %v2591 = vld [vmem:[%s2576 + $0x38] sm:$0xf]
        %v2592 = vld [vmem:[%s2576 + $0x3c] sm:$0xf]
        %v2609 = vunpack.c.l.b16 %v2577
        %v2610 = vunpack.c.l.b16 %v2578
        %v2611 = vunpack.c.l.b16 %v2579
        %v2612 = vunpack.c.l.b16 %v2580
        %v2613 = vunpack.c.l.b16 %v2581
        %v2614 = vunpack.c.l.b16 %v2582
        %v2615 = vunpack.c.l.b16 %v2583
        %v2616 = vunpack.c.l.b16 %v2584
        %v2617 = vunpack.c.l.b16 %v2585
        %v2618 = vunpack.c.l.b16 %v2586
        %v2619 = vunpack.c.l.b16 %v2587
        %v2620 = vunpack.c.l.b16 %v2588
        %v2621 = vunpack.c.l.b16 %v2589
        %v2622 = vunpack.c.l.b16 %v2590
        %v2623 = vunpack.c.l.b16 %v2591
        %v2624 = vunpack.c.l.b16 %v2592
        %v2625 = vpack.c.b16 %v2610, %v2609
        %v2626 = vpack.c.b16 %v2612, %v2611
        %v2627 = vpack.c.b16 %v2614, %v2613
        %v2628 = vpack.c.b16 %v2616, %v2615
        %v2629 = vpack.c.b16 %v2618, %v2617
        %v2630 = vpack.c.b16 %v2620, %v2619
        %v2631 = vpack.c.b16 %v2622, %v2621
        %v2632 = vpack.c.b16 %v2624, %v2623
        %2641 = vmatpush.bf16.msra.mxu0 %v2632
        %2642 = vmatpush.bf16.msra.mxu0 %v2631
        %2643 = vmatpush.bf16.msra.mxu0 %v2630
        %2644 = vmatpush.bf16.msra.mxu0 %v2629
        %2645 = vmatpush.bf16.msra.mxu0 %v2628
        %2646 = vmatpush.bf16.msra.mxu0 %v2627
        %2647 = vmatpush.bf16.msra.mxu0 %v2626
        %2648 = vmatpush.bf16.msra.mxu0 %v2625
        %2649 = vmatmul.bf16.gmra.mxu0 %v2575
        %v2650 = vpop.f32.mrf.mxu0
        %v2651 = vadd.f32 0.0, %v2650
        %v2652 = vpop.f32.mrf.mxu0
        %v2653 = vadd.f32 0.0, %v2652
        %2654 = vdwg.mxu0
        %v2655 = vadd.f32 %v2548, %v2651
        %v2656 = vadd.f32 %v2549, %v2653
        %v2657 = vld [vmem:[%s7] sm:$0x1]
        %v2659 = vperm.slane %v2657, 0
        %v2661 = vadd.f32 %v2655, %v2659
        %v2662 = vadd.f32 %v2656, %v2659
        %v2663 = vpack.c.bf16 %v1973, %v1970
        %v2664 = vld [vmem:[#allocation14] sm:$0xf]
        %v2665 = vld [vmem:[#allocation14 + $0x4] sm:$0xf]
        %v2668 = vunpack.c.l.b16 %v2664
        %v2669 = vunpack.c.l.b16 %v2665
        %v2670 = vpack.c.b16 %v2669, %v2668
        %v2672 = vsel %vm2241, %v2670, 0
        %2674 = vmatpush.bf16.msra.mxu0 0
        %2675 = vmatpush.bf16.msra.mxu0 0
        %2676 = vmatpush.bf16.msra.mxu0 0
        %2677 = vmatpush.bf16.msra.mxu0 0
        %2678 = vmatpush.bf16.msra.mxu0 0
        %2679 = vmatpush.bf16.msra.mxu0 0
        %2680 = vmatpush.bf16.msra.mxu0 0
        %2681 = vmatpush.bf16.msra.mxu0 %v2663
        %2682 = vmatmul.bf16.gmra.mxu0 %v2672
        %v2683 = vpop.f32.mrf.mxu0
        %v2684 = vadd.f32 0.0, %v2683
        %v2685 = vpop.f32.mrf.mxu0
        %v2686 = vadd.f32 0.0, %v2685
        %2687 = vdwg.mxu0
        %v2688 = vpack.c.bf16 %v2686, %v2684
        %v2689 = vld [vmem:[#allocation16] sm:$0xf]
        %v2690 = vld [vmem:[#allocation16 + $0x4] sm:$0xf]
        %v2691 = vld [vmem:[#allocation16 + $0x8] sm:$0xf]
        %v2692 = vld [vmem:[#allocation16 + $0xc] sm:$0xf]
        %v2693 = vld [vmem:[#allocation16 + $0x10] sm:$0xf]
        %v2694 = vld [vmem:[#allocation16 + $0x14] sm:$0xf]
        %v2695 = vld [vmem:[#allocation16 + $0x18] sm:$0xf]
        %v2696 = vld [vmem:[#allocation16 + $0x1c] sm:$0xf]
        %v2697 = vld [vmem:[#allocation16 + $0x20] sm:$0xf]
        %v2698 = vld [vmem:[#allocation16 + $0x24] sm:$0xf]
        %v2699 = vld [vmem:[#allocation16 + $0x28] sm:$0xf]
        %v2700 = vld [vmem:[#allocation16 + $0x2c] sm:$0xf]
        %v2701 = vld [vmem:[#allocation16 + $0x30] sm:$0xf]
        %v2702 = vld [vmem:[#allocation16 + $0x34] sm:$0xf]
        %v2703 = vld [vmem:[#allocation16 + $0x38] sm:$0xf]
        %v2704 = vld [vmem:[#allocation16 + $0x3c] sm:$0xf]
        %s2705 = scalar_lea.vmem [#allocation14], 8
        %v2706 = vld [vmem:[%s2705] sm:$0xf]
        %v2707 = vld [vmem:[%s2705 + $0x4] sm:$0xf]
        %v2710 = vunpack.c.l.b16 %v2706
        %v2711 = vunpack.c.l.b16 %v2707
        %v2712 = vpack.c.b16 %v2711, %v2710
        %v2714 = vsel %vm2241, %v2712, 0
        %2716 = vmatpush.bf16.msra.mxu0 0
        %2717 = vmatpush.bf16.msra.mxu0 0
        %2718 = vmatpush.bf16.msra.mxu0 0
        %2719 = vmatpush.bf16.msra.mxu0 0
        %2720 = vmatpush.bf16.msra.mxu0 0
        %2721 = vmatpush.bf16.msra.mxu0 0
        %2722 = vmatpush.bf16.msra.mxu0 0
        %2723 = vmatpush.bf16.msra.mxu0 %v2663
        %2724 = vmatmul.bf16.gmra.mxu0 %v2714
        %v2725 = vpop.f32.mrf.mxu0
        %v2726 = vadd.f32 0.0, %v2725
        %v2727 = vpop.f32.mrf.mxu0
        %v2728 = vadd.f32 0.0, %v2727
        %2729 = vdwg.mxu0
        %v2730 = vpack.c.bf16 %v2728, %v2726
        %s2731 = scalar_lea.vmem [#allocation16], 64
        %v2732 = vld [vmem:[%s2731] sm:$0xf]
        %v2733 = vld [vmem:[%s2731 + $0x4] sm:$0xf]
        %v2734 = vld [vmem:[%s2731 + $0x8] sm:$0xf]
        %v2735 = vld [vmem:[%s2731 + $0xc] sm:$0xf]
        %v2736 = vld [vmem:[%s2731 + $0x10] sm:$0xf]
        %v2737 = vld [vmem:[%s2731 + $0x14] sm:$0xf]
        %v2738 = vld [vmem:[%s2731 + $0x18] sm:$0xf]
        %v2739 = vld [vmem:[%s2731 + $0x1c] sm:$0xf]
        %v2740 = vld [vmem:[%s2731 + $0x20] sm:$0xf]
        %v2741 = vld [vmem:[%s2731 + $0x24] sm:$0xf]
        %v2742 = vld [vmem:[%s2731 + $0x28] sm:$0xf]
        %v2743 = vld [vmem:[%s2731 + $0x2c] sm:$0xf]
        %v2744 = vld [vmem:[%s2731 + $0x30] sm:$0xf]
        %v2745 = vld [vmem:[%s2731 + $0x34] sm:$0xf]
        %v2746 = vld [vmem:[%s2731 + $0x38] sm:$0xf]
        %v2747 = vld [vmem:[%s2731 + $0x3c] sm:$0xf]
        %v2764 = vunpack.c.l.b16 %v2732
        %v2765 = vunpack.c.l.b16 %v2733
        %v2766 = vunpack.c.l.b16 %v2734
        %v2767 = vunpack.c.l.b16 %v2735
        %v2768 = vunpack.c.l.b16 %v2736
        %v2769 = vunpack.c.l.b16 %v2737
        %v2770 = vunpack.c.l.b16 %v2738
        %v2771 = vunpack.c.l.b16 %v2739
        %v2772 = vunpack.c.l.b16 %v2740
        %v2773 = vunpack.c.l.b16 %v2741
        %v2774 = vunpack.c.l.b16 %v2742
        %v2775 = vunpack.c.l.b16 %v2743
        %v2776 = vunpack.c.l.b16 %v2744
        %v2777 = vunpack.c.l.b16 %v2745
        %v2778 = vunpack.c.l.b16 %v2746
        %v2779 = vunpack.c.l.b16 %v2747
        %v2780 = vpack.c.b16 %v2765, %v2764
        %v2781 = vpack.c.b16 %v2767, %v2766
        %v2782 = vpack.c.b16 %v2769, %v2768
        %v2783 = vpack.c.b16 %v2771, %v2770
        %v2784 = vpack.c.b16 %v2773, %v2772
        %v2785 = vpack.c.b16 %v2775, %v2774
        %v2786 = vpack.c.b16 %v2777, %v2776
        %v2787 = vpack.c.b16 %v2779, %v2778
        %2796 = vmatpush.bf16.msra.mxu0 %v2787
        %2797 = vmatpush.bf16.msra.mxu0 %v2786
        %2798 = vmatpush.bf16.msra.mxu0 %v2785
        %2799 = vmatpush.bf16.msra.mxu0 %v2784
        %2800 = vmatpush.bf16.msra.mxu0 %v2783
        %2801 = vmatpush.bf16.msra.mxu0 %v2782
        %2802 = vmatpush.bf16.msra.mxu0 %v2781
        %2803 = vmatpush.bf16.msra.mxu0 %v2780
        %2804 = vmatmul.bf16.gmra.mxu0 %v2730
        %v2805 = vpop.f32.mrf.mxu0
        %v2806 = vadd.f32 0.0, %v2805
        %v2807 = vpop.f32.mrf.mxu0
        %v2808 = vadd.f32 0.0, %v2807
        %2809 = vdwg.mxu0
        %v2826 = vunpack.c.l.b16 %v2689
        %v2827 = vunpack.c.l.b16 %v2690
        %v2828 = vunpack.c.l.b16 %v2691
        %v2829 = vunpack.c.l.b16 %v2692
        %v2830 = vunpack.c.l.b16 %v2693
        %v2831 = vunpack.c.l.b16 %v2694
        %v2832 = vunpack.c.l.b16 %v2695
        %v2833 = vunpack.c.l.b16 %v2696
        %v2834 = vunpack.c.l.b16 %v2697
        %v2835 = vunpack.c.l.b16 %v2698
        %v2836 = vunpack.c.l.b16 %v2699
        %v2837 = vunpack.c.l.b16 %v2700
        %v2838 = vunpack.c.l.b16 %v2701
        %v2839 = vunpack.c.l.b16 %v2702
        %v2840 = vunpack.c.l.b16 %v2703
        %v2841 = vunpack.c.l.b16 %v2704
        %v2842 = vpack.c.b16 %v2827, %v2826
        %v2843 = vpack.c.b16 %v2829, %v2828
        %v2844 = vpack.c.b16 %v2831, %v2830
        %v2845 = vpack.c.b16 %v2833, %v2832
        %v2846 = vpack.c.b16 %v2835, %v2834
        %v2847 = vpack.c.b16 %v2837, %v2836
        %v2848 = vpack.c.b16 %v2839, %v2838
        %v2849 = vpack.c.b16 %v2841, %v2840
        %2858 = vmatpush.bf16.msra.mxu0 %v2849
        %2859 = vmatpush.bf16.msra.mxu0 %v2848
        %2860 = vmatpush.bf16.msra.mxu0 %v2847
        %2861 = vmatpush.bf16.msra.mxu0 %v2846
        %2862 = vmatpush.bf16.msra.mxu0 %v2845
        %2863 = vmatpush.bf16.msra.mxu0 %v2844
        %2864 = vmatpush.bf16.msra.mxu0 %v2843
        %2865 = vmatpush.bf16.msra.mxu0 %v2842
        %2866 = vmatmul.bf16.gmra.mxu0 %v2688
        %v2867 = vpop.f32.mrf.mxu0
        %v2868 = vadd.f32 %v2806, %v2867
        %v2869 = vpop.f32.mrf.mxu0
        %v2870 = vadd.f32 %v2808, %v2869
        %2871 = vdwg.mxu0
        %s2872 = scalar_lea.vmem [#allocation14], 16
        %v2873 = vld [vmem:[%s2872] sm:$0xf]
        %v2874 = vld [vmem:[%s2872 + $0x4] sm:$0xf]
        %v2877 = vunpack.c.l.b16 %v2873
        %v2878 = vunpack.c.l.b16 %v2874
        %v2879 = vpack.c.b16 %v2878, %v2877
        %v2881 = vsel %vm2241, %v2879, 0
        %2883 = vmatpush.bf16.msra.mxu0 0
        %2884 = vmatpush.bf16.msra.mxu0 0
        %2885 = vmatpush.bf16.msra.mxu0 0
        %2886 = vmatpush.bf16.msra.mxu0 0
        %2887 = vmatpush.bf16.msra.mxu0 0
        %2888 = vmatpush.bf16.msra.mxu0 0
        %2889 = vmatpush.bf16.msra.mxu0 0
        %2890 = vmatpush.bf16.msra.mxu0 %v2663
        %2891 = vmatmul.bf16.gmra.mxu0 %v2881
        %v2892 = vpop.f32.mrf.mxu0
        %v2893 = vadd.f32 0.0, %v2892
        %v2894 = vpop.f32.mrf.mxu0
        %v2895 = vadd.f32 0.0, %v2894
        %2896 = vdwg.mxu0
        %v2897 = vpack.c.bf16 %v2895, %v2893
        %s2898 = scalar_lea.vmem [#allocation16], 128
        %v2899 = vld [vmem:[%s2898] sm:$0xf]
        %v2900 = vld [vmem:[%s2898 + $0x4] sm:$0xf]
        %v2901 = vld [vmem:[%s2898 + $0x8] sm:$0xf]
        %v2902 = vld [vmem:[%s2898 + $0xc] sm:$0xf]
        %v2903 = vld [vmem:[%s2898 + $0x10] sm:$0xf]
        %v2904 = vld [vmem:[%s2898 + $0x14] sm:$0xf]
        %v2905 = vld [vmem:[%s2898 + $0x18] sm:$0xf]
        %v2906 = vld [vmem:[%s2898 + $0x1c] sm:$0xf]
        %v2907 = vld [vmem:[%s2898 + $0x20] sm:$0xf]
        %v2908 = vld [vmem:[%s2898 + $0x24] sm:$0xf]
        %v2909 = vld [vmem:[%s2898 + $0x28] sm:$0xf]
        %v2910 = vld [vmem:[%s2898 + $0x2c] sm:$0xf]
        %v2911 = vld [vmem:[%s2898 + $0x30] sm:$0xf]
        %v2912 = vld [vmem:[%s2898 + $0x34] sm:$0xf]
        %v2913 = vld [vmem:[%s2898 + $0x38] sm:$0xf]
        %v2914 = vld [vmem:[%s2898 + $0x3c] sm:$0xf]
        %v2931 = vunpack.c.l.b16 %v2899
        %v2932 = vunpack.c.l.b16 %v2900
        %v2933 = vunpack.c.l.b16 %v2901
        %v2934 = vunpack.c.l.b16 %v2902
        %v2935 = vunpack.c.l.b16 %v2903
        %v2936 = vunpack.c.l.b16 %v2904
        %v2937 = vunpack.c.l.b16 %v2905
        %v2938 = vunpack.c.l.b16 %v2906
        %v2939 = vunpack.c.l.b16 %v2907
        %v2940 = vunpack.c.l.b16 %v2908
        %v2941 = vunpack.c.l.b16 %v2909
        %v2942 = vunpack.c.l.b16 %v2910
        %v2943 = vunpack.c.l.b16 %v2911
        %v2944 = vunpack.c.l.b16 %v2912
        %v2945 = vunpack.c.l.b16 %v2913
        %v2946 = vunpack.c.l.b16 %v2914
        %v2947 = vpack.c.b16 %v2932, %v2931
        %v2948 = vpack.c.b16 %v2934, %v2933
        %v2949 = vpack.c.b16 %v2936, %v2935
        %v2950 = vpack.c.b16 %v2938, %v2937
        %v2951 = vpack.c.b16 %v2940, %v2939
        %v2952 = vpack.c.b16 %v2942, %v2941
        %v2953 = vpack.c.b16 %v2944, %v2943
        %v2954 = vpack.c.b16 %v2946, %v2945
        %2963 = vmatpush.bf16.msra.mxu0 %v2954
        %2964 = vmatpush.bf16.msra.mxu0 %v2953
        %2965 = vmatpush.bf16.msra.mxu0 %v2952
        %2966 = vmatpush.bf16.msra.mxu0 %v2951
        %2967 = vmatpush.bf16.msra.mxu0 %v2950
        %2968 = vmatpush.bf16.msra.mxu0 %v2949
        %2969 = vmatpush.bf16.msra.mxu0 %v2948
        %2970 = vmatpush.bf16.msra.mxu0 %v2947
        %2971 = vmatmul.bf16.gmra.mxu0 %v2897
        %v2972 = vpop.f32.mrf.mxu0
        %v2973 = vadd.f32 0.0, %v2972
        %v2974 = vpop.f32.mrf.mxu0
        %v2975 = vadd.f32 0.0, %v2974
        %2976 = vdwg.mxu0
        %v2977 = vadd.f32 %v2868, %v2973
        %v2978 = vadd.f32 %v2870, %v2975
        %s2979 = scalar_lea.vmem [#allocation14], 24
        %v2980 = vld [vmem:[%s2979] sm:$0xf]
        %v2981 = vld [vmem:[%s2979 + $0x4] sm:$0xf]
        %v2984 = vunpack.c.l.b16 %v2980
        %v2985 = vunpack.c.l.b16 %v2981
        %v2986 = vpack.c.b16 %v2985, %v2984
        %v2988 = vsel %vm2241, %v2986, 0
        %2990 = vmatpush.bf16.msra.mxu0 0
        %2991 = vmatpush.bf16.msra.mxu0 0
        %2992 = vmatpush.bf16.msra.mxu0 0
        %2993 = vmatpush.bf16.msra.mxu0 0
        %2994 = vmatpush.bf16.msra.mxu0 0
        %2995 = vmatpush.bf16.msra.mxu0 0
        %2996 = vmatpush.bf16.msra.mxu0 0
        %2997 = vmatpush.bf16.msra.mxu0 %v2663
        %2998 = vmatmul.bf16.gmra.mxu0 %v2988
        %v2999 = vpop.f32.mrf.mxu0
        %v3000 = vadd.f32 0.0, %v2999
        %v3001 = vpop.f32.mrf.mxu0
        %v3002 = vadd.f32 0.0, %v3001
        %3003 = vdwg.mxu0
        %v3004 = vpack.c.bf16 %v3002, %v3000
        %s3005 = scalar_lea.vmem [#allocation16], 192
        %v3006 = vld [vmem:[%s3005] sm:$0xf]
        %v3007 = vld [vmem:[%s3005 + $0x4] sm:$0xf]
        %v3008 = vld [vmem:[%s3005 + $0x8] sm:$0xf]
        %v3009 = vld [vmem:[%s3005 + $0xc] sm:$0xf]
        %v3010 = vld [vmem:[%s3005 + $0x10] sm:$0xf]
        %v3011 = vld [vmem:[%s3005 + $0x14] sm:$0xf]
        %v3012 = vld [vmem:[%s3005 + $0x18] sm:$0xf]
        %v3013 = vld [vmem:[%s3005 + $0x1c] sm:$0xf]
        %v3014 = vld [vmem:[%s3005 + $0x20] sm:$0xf]
        %v3015 = vld [vmem:[%s3005 + $0x24] sm:$0xf]
        %v3016 = vld [vmem:[%s3005 + $0x28] sm:$0xf]
        %v3017 = vld [vmem:[%s3005 + $0x2c] sm:$0xf]
        %v3018 = vld [vmem:[%s3005 + $0x30] sm:$0xf]
        %v3019 = vld [vmem:[%s3005 + $0x34] sm:$0xf]
        %v3020 = vld [vmem:[%s3005 + $0x38] sm:$0xf]
        %v3021 = vld [vmem:[%s3005 + $0x3c] sm:$0xf]
        %v3038 = vunpack.c.l.b16 %v3006
        %v3039 = vunpack.c.l.b16 %v3007
        %v3040 = vunpack.c.l.b16 %v3008
        %v3041 = vunpack.c.l.b16 %v3009
        %v3042 = vunpack.c.l.b16 %v3010
        %v3043 = vunpack.c.l.b16 %v3011
        %v3044 = vunpack.c.l.b16 %v3012
        %v3045 = vunpack.c.l.b16 %v3013
        %v3046 = vunpack.c.l.b16 %v3014
        %v3047 = vunpack.c.l.b16 %v3015
        %v3048 = vunpack.c.l.b16 %v3016
        %v3049 = vunpack.c.l.b16 %v3017
        %v3050 = vunpack.c.l.b16 %v3018
        %v3051 = vunpack.c.l.b16 %v3019
        %v3052 = vunpack.c.l.b16 %v3020
        %v3053 = vunpack.c.l.b16 %v3021
        %v3054 = vpack.c.b16 %v3039, %v3038
        %v3055 = vpack.c.b16 %v3041, %v3040
        %v3056 = vpack.c.b16 %v3043, %v3042
        %v3057 = vpack.c.b16 %v3045, %v3044
        %v3058 = vpack.c.b16 %v3047, %v3046
        %v3059 = vpack.c.b16 %v3049, %v3048
        %v3060 = vpack.c.b16 %v3051, %v3050
        %v3061 = vpack.c.b16 %v3053, %v3052
        %3070 = vmatpush.bf16.msra.mxu0 %v3061
        %3071 = vmatpush.bf16.msra.mxu0 %v3060
        %3072 = vmatpush.bf16.msra.mxu0 %v3059
        %3073 = vmatpush.bf16.msra.mxu0 %v3058
        %3074 = vmatpush.bf16.msra.mxu0 %v3057
        %3075 = vmatpush.bf16.msra.mxu0 %v3056
        %3076 = vmatpush.bf16.msra.mxu0 %v3055
        %3077 = vmatpush.bf16.msra.mxu0 %v3054
        %3078 = vmatmul.bf16.gmra.mxu0 %v3004
        %v3079 = vpop.f32.mrf.mxu0
        %v3080 = vadd.f32 0.0, %v3079
        %v3081 = vpop.f32.mrf.mxu0
        %v3082 = vadd.f32 0.0, %v3081
        %3083 = vdwg.mxu0
        %v3084 = vadd.f32 %v2977, %v3080
        %v3085 = vadd.f32 %v2978, %v3082
        %v3086 = vld [vmem:[%s10] sm:$0x1]
        %v3088 = vperm.slane %v3086, 0
        %v3090 = vadd.f32 %v3084, %v3088
        %v3091 = vadd.f32 %v3085, %v3088
        %vm3094 = vcmask 1040384
        %v3095 = vrot.slane %v1971, 7
        %v3096 = vrot.slane %v1974, 7
        %v3097 = vsel %vm3094, %v3095, %v3096
        %v3100 = vsel %vm3094, %v1971, %v3095
        %vm3101 = vcmask 1046528
        %v3102 = vrot.slane %v1971, 1
        %v3103 = vrot.slane %v1974, 1
        %v3104 = vsel %vm3101, %v3102, %v3103
        %v3107 = vsel %vm3101, %v3103, %v1974
        %v3108 = vmax.f32 %v3100, %v3104
        %v3109 = vmax.f32 %v3097, %v3107
        %v3110 = vmax.f32 %v1971, %v3108
        %v3111 = vmax.f32 %v1974, %v3109
        %v3112 = vld [vmem:[%s11] sm:$0x1]
        %v3114 = vperm.slane %v3112, 0
        %v3116 = vmul.f32 %v3110, %v3114
        %v3117 = vmul.f32 %v3111, %v3114
        %v3118 = vld [vmem:[%s12] sm:$0x1]
        %v3120 = vperm.slane %v3118, 0
        %v3122 = vadd.f32 %v3116, %v3120
        %v3123 = vadd.f32 %v3117, %v3120
        %v3124 = vadd.f32 %v2661, %v2187
        %v3125 = vadd.f32 %v3090, %v2201
        %v3126 = vadd.f32 %v3122, %v2215
        %v3127 = vadd.f32 %v1953, %v2229
        %v3128 = vadd.f32 %v2662, %v2189
        %v3129 = vadd.f32 %v3091, %v2203
        %v3130 = vadd.f32 %v3123, %v2217
        %v3131 = vadd.f32 %v1955, %v2231
        %vm3132 = vcmp.ge.f32.partialorder %v3124, 0.0
        %vm3133 = vcmp.ge.f32.partialorder %v3125, 0.0
        %vm3134 = vcmp.ge.f32.partialorder %v3126, 0.0
        %vm3135 = vcmp.ge.f32.partialorder %v3127, 0.0
        %vm3136 = vcmp.ge.f32.partialorder %v3128, 0.0
        %vm3137 = vcmp.ge.f32.partialorder %v3129, 0.0
        %vm3138 = vcmp.ge.f32.partialorder %v3130, 0.0
        %vm3139 = vcmp.ge.f32.partialorder %v3131, 0.0
        %v3140 = vmul.f32 %v3124, 0.1
        %v3141 = vmul.f32 %v3125, 0.1
        %v3142 = vmul.f32 %v3126, 0.1
        %v3143 = vmul.f32 %v3127, 0.1
        %v3144 = vmul.f32 %v3128, 0.1
        %v3145 = vmul.f32 %v3129, 0.1
        %v3146 = vmul.f32 %v3130, 0.1
        %v3147 = vmul.f32 %v3131, 0.1
        %v3148 = vsel %vm3132, %v3124, %v3140
        %v3149 = vsel %vm3133, %v3125, %v3141
        %v3150 = vsel %vm3134, %v3126, %v3142
        %v3151 = vsel %vm3135, %v3127, %v3143
        %v3152 = vsel %vm3136, %v3128, %v3144
        %v3153 = vsel %vm3137, %v3129, %v3145
        %v3154 = vsel %vm3138, %v3130, %v3146
        %v3155 = vsel %vm3139, %v3131, %v3147
        %3156 = vst [vmem:[%s659] sm:$0xff] %v3148
        %3157 = vst [vmem:[%s659 + $0x8] sm:$0xff] %v3149
        %3158 = vst [vmem:[%s659 + $0x10] sm:$0xff] %v3150
        %3159 = vst [vmem:[%s659 + $0x18] sm:$0xff] %v3151
        %3160 = vst [vmem:[%s659 + $0x20] sm:$0xff] %v3152
        %3161 = vst [vmem:[%s659 + $0x28] sm:$0xff] %v3153
        %3162 = vst [vmem:[%s659 + $0x30] sm:$0xff] %v3154
        %3163 = vst [vmem:[%s659 + $0x38] sm:$0xff] %v3155
        %s3164 = sand.u32 %s365, 1
        %s3165 = scalar_lea.sflag [#allocation4], %s3164
        %s3166 = sand.u32 %s365, 1
        %s3167 = smul.addr %s3166, 64
        %s3168 = scalar_lea.vmem [#allocation19], %s3167
        // Predicated region
        $region121: #{tpu_custom_call.1} parent=79 // pred_check
          %p3169 = pneg %p375
        $region122: #{tpu_custom_call.1} parent=79 // pred_check_branch
          %3171 = sbr.rel (%p3169) target = $region124
        $region123: #{tpu_custom_call.1} parent=79 // pred_region
          %3173 = vsyncadd %s3165, 0
          %s3174 = smul.addr %s37, 8
          %s3175 = smul.addr %s3174, 8
          %s3176 = scalar_lea.hbm %s15, %s3175
          %s3177 = sshll.u32 %s3168, 4
          %s3178 = int_to_ptr.vmem [resolvable:$true] %s3177
          %s3179 = sshll.u32 %s3176, 4
          %s3180 = int_to_ptr.hbm [resolvable:$true] %s3179
          %3185 = dma.vmem_to_hbm [thread:$0]  %s3178, 1024, %s3180, %s3165, 512, 512, 32
        $region124: #{tpu_custom_call.1} parent=79 // pred_fallthru
          _
      $region80: #{tpu_custom_call.1} parent=5 // pred_fallthru
        _
      %p3186 = scmp.le.s32.totalorder 2, %s32
      // Predicated region
      $region125: #{tpu_custom_call.1} parent=5 // pred_check
        %p3187 = pneg %p3186
      $region126: #{tpu_custom_call.1} parent=5 // pred_check_branch
        %3189 = sbr.rel (%p3187) target = $region128
      $region127: #{tpu_custom_call.1} parent=5 // pred_region
        %s3190 = ssub.s32 %s32, 2
        // Predicated region
        $region129: #{tpu_custom_call.1} parent=127 // pred_check
          %p3191 = pneg %p381
        $region130: #{tpu_custom_call.1} parent=127 // pred_check_branch
          %3193 = sbr.rel (%p3191) target = $region132
        $region131: #{tpu_custom_call.1} parent=127 // pred_region
          %s3194 = sand.u32 %s366, 1
          %s3195 = scalar_lea.sflag [#allocation4], %s3194
          %s3196 = sand.u32 %s366, 1
          %s3197 = smul.addr %s3196, 64
          %s3198 = scalar_lea.vmem [#allocation19], %s3197
          %3200 = dma.done %s3195, 1024
        $region132: #{tpu_custom_call.1} parent=127 // pred_fallthru
          _
      $region128: #{tpu_custom_call.1} parent=5 // pred_fallthru
        _
    $region6: #{tpu_custom_call.1} parent=1 // loop_footer
      %s36 = sadd.s32 1, %s32
    $region7: #{tpu_custom_call.1} parent=1 // loop_footer_branch
      %31 = sbr.rel target = $region3
    $region8: #{tpu_custom_call.1} parent=1 // loop_exit
      _
    %3201 = vsyncpa [#allocation3], 1
    %s3202 = scalar_lea.sflag [#allocation3], 1
    %3203 = vsyncpa %s3202, 1
    %3204 = vsyncpa [#allocation6], 1
    %3205 = vsyncpa [#allocation9], 1
    %3206 = vsyncpa [#allocation12], 1
    %3207 = vsyncpa [#allocation15], 1
    %3208 = vsyncpa [#allocation18], 1
    %3209 = vsyncpa [#allocation4], 1
    %s3210 = scalar_lea.sflag [#allocation4], 1
    %3211 = vsyncpa %s3210, 1

</llo_original>
